<compile_context>
chip_gen: v7x
topology: tpu7x:2x2x1
jax: 0.10.0
libtpu: 0.0.40
codegen_flags: <defaults>
</compile_context>

<pallas_src>
import functools

import jax
import jax.numpy as jnp
from jax import lax
from jax.experimental import pallas as pl
from jax.experimental.pallas import tpu as pltpu

KSIZE = 7
PAD = KSIZE // 2  # 3


def _round_up(v, m):
    return ((v + m - 1) // m) * m


def _vmem_capacity_bytes():
    try:
        return int(pltpu.get_tpu_info().vmem_capacity_bytes)
    except Exception:  # conservative fallback: v7x per-core VMEM (64 MiB)
        return 64 * 1024 * 1024


def _pick_channel_tile(C, q, max_tile):
    """Full C if it fits the budget; otherwise the largest budget-sized multiple
    of the sublane quantum q (preferring an exact divisor of C so the masked
    ragged tail is avoided)."""
    if C <= max_tile:
        return C
    t = (max_tile // q) * q
    if t < q:
        return min(C, q)
    for cand in range(t, q - 1, -q):
        if C % cand == 0:
            return cand
    return t


def _spatial_attention_kernel(w_ref, b_ref, x_ref, o_ref,
                              sum_ref, max_ref, slab_ref,
                              *, C, H, W, c_tile, num_c, rows_per_strip):
    """Grid = (batch, channel-tile).

    w_ref   : SMEM (98,) f32   flat conv weight; avg-channel taps pre-scaled by 1/C
    b_ref   : SMEM (1,)  f32   conv bias
    x_ref   : VMEM (1, c_tile, H*W)     one channel tile, lane-dense spatial
    o_ref   : VMEM (1, 1, H*W)          output block (written on the last step)
    sum_ref : VMEM (1, H*W) f32         running channel sum
    max_ref : VMEM (1, H*W) f32         running channel max
    slab_ref: VMEM (2, 1, H*W + 2K) f32 [sum; max] staged with K-element margins
    """
    HW = H * W
    K = PAD * W + PAD  # max |flat shift| of a 7x7 tap
    c_idx = pl.program_id(1)

    # ---- running channel sum / max across the "arbitrary" channel axis ----
    @pl.when(c_idx == 0)
    def _():
        sum_ref[...] = jnp.zeros_like(sum_ref)
        max_ref[...] = jnp.full(max_ref.shape, -jnp.inf, dtype=max_ref.dtype)

    blk = x_ref[0].astype(jnp.float32)  # (c_tile, HW); x stays narrow in HBM/DMA
    if C % c_tile != 0:
        # Ragged last block: channels past C hold unspecified boundary padding;
        # mask them (0 for the sum, -inf for the max).
        rem = C - (num_c - 1) * c_tile
        limit = jnp.where(c_idx == num_c - 1, rem, c_tile)
        ch_ids = lax.broadcasted_iota(jnp.int32, (c_tile, HW), 0)
        valid = ch_ids < limit
        blk_sum = jnp.where(valid, blk, 0.0)
        blk_max = jnp.where(valid, blk, -jnp.inf)
    else:
        blk_sum = blk
        blk_max = blk
    sum_ref[...] = sum_ref[...] + jnp.sum(blk_sum, axis=0, keepdims=True)
    max_ref[...] = jnp.maximum(max_ref[...], jnp.max(blk_max, axis=0, keepdims=True))

    # ---- last channel step: 7x7 conv (2 -> 1) + bias + ReLU, in the flat domain ----
    @pl.when(c_idx == num_c - 1)
    def _():
        # Stage sum/max into a slab with K-element margins so every shifted tap
        # read below is a static, in-bounds slice.  The margins are never read
        # unmasked (the row/col masks reproduce the conv's zero padding), so no
        # border zero-fill is needed at all.
        slab_ref[0, :, K:K + HW] = sum_ref[...]
        slab_ref[1, :, K:K + HW] = max_ref[...]
        bias = b_ref[0]
        w_is_pow2 = (W & (W - 1)) == 0

        for s0 in range(0, H, rows_per_strip):          # static strip loop
            ls = min(rows_per_strip, H - s0)
            n = ls * W
            base = s0 * W
            pos = base + lax.broadcasted_iota(jnp.int32, (1, n), 1)
            col = (pos & (W - 1)) if w_is_pow2 else (pos % W)
            acc = jnp.zeros((1, n), jnp.float32) + bias  # vreg-resident strip acc

            for dx in range(-PAD, PAD + 1):
                if dx > 0:
                    col_ok = col < (W - dx)
                elif dx < 0:
                    col_ok = col >= (-dx)
                else:
                    col_ok = None
                for dy in range(-PAD, PAD + 1):
                    # Row validity via flat-index compares (no division):
                    #   row + dy >= 0 <=> pos >= -dy*W ; row + dy < H <=> pos < (H-dy)*W
                    if dy < 0 and s0 + dy < 0:
                        row_ok = pos >= (-dy) * W
                    elif dy > 0 and s0 + ls - 1 + dy > H - 1:
                        row_ok = pos < (H - dy) * W
                    else:
                        row_ok = None  # statically always valid for this strip
                    if col_ok is None:
                        mask = row_ok
                    elif row_ok is None:
                        mask = col_ok
                    else:
                        mask = jnp.logical_and(col_ok, row_ok)

                    k = dy * W + dx
                    for c in range(2):
                        wt = w_ref[c * KSIZE * KSIZE + (dy + PAD) * KSIZE + (dx + PAD)]
                        slab = slab_ref[c, :, K + base + k:K + base + k + n]
                        tap = slab if mask is None else jnp.where(mask, slab, 0.0)
                        acc = acc + wt * tap
            o_ref[0, :, base:base + n] = jnp.maximum(acc, 0.0).astype(o_ref.dtype)
        # TODO(synk): if the conv ever dominates (small C and W >= 256), switch
        # the tap accumulation to banded-Toeplitz MXU matmuls.


def spatial_attention(x, weight, bias, *, c_tile=None):
    """x: (N, C, H, W); weight: (1, 2, 7, 7); bias: (1,). Returns (N, 1, H, W).

    Note: the source module applies ReLU (not the CBAM-style sigmoid) to the
    conv output; this kernel matches the module as given.
    """
    N, C, H, W = x.shape
    HW = H * W
    K = PAD * W + PAD
    itemsize = jnp.dtype(x.dtype).itemsize
    q = max(8, 32 // itemsize)                 # sublane quantum for this dtype
    hw_lanes = _round_up(HW, 128)

    vmem_cap = _vmem_capacity_bytes()
    if c_tile is None:
        # Double-buffered x blocks get ~45% of VMEM; rest is scratch/output/slack.
        budget = int(0.45 * vmem_cap)
        max_tile = max(1, budget // (2 * hw_lanes * itemsize))
        c_tile = _pick_channel_tile(C, q, max_tile)
    assert c_tile <= C
    assert c_tile == C or c_tile % q == 0, (
        "c_tile must equal C or be a multiple of the sublane quantum")
    num_c = pl.cdiv(C, c_tile)

    # Fold the channel-mean's 1/C into the avg-channel conv taps (the conv is
    # linear, so the result is identical); the kernel then only needs a sum.
    w = weight.astype(jnp.float32)
    w = w.at[:, 0, :, :].multiply(1.0 / C)
    w_flat = w.reshape(-1)                     # (98,)
    b = bias.astype(jnp.float32)               # (1,)

    x_flat = x.reshape(N, C, HW)               # free reshape; lane-dense spatial

    rows_per_strip = max(1, min(H, 1024 // max(W, 1)))

    # Accurate VMEM ask (v7x: 64 MiB, v5e/v6e: 128 MiB) instead of a blanket 48 MiB.
    x_block = _round_up(c_tile, q) * hw_lanes * itemsize
    out_block = 8 * hw_lanes * itemsize
    scratch = 2 * 8 * hw_lanes * 4 + 2 * 8 * _round_up(HW + 2 * K, 128) * 4
    need = 2 * x_block + 2 * out_block + scratch
    vmem_limit = int(min(max(need + (12 << 20), 16 << 20), int(0.85 * vmem_cap)))

    kernel = functools.partial(
        _spatial_attention_kernel,
        C=C, H=H, W=W, c_tile=c_tile, num_c=num_c, rows_per_strip=rows_per_strip)

    out = pl.pallas_call(
        kernel,
        out_shape=jax.ShapeDtypeStruct((N, 1, HW), x.dtype),
        grid_spec=pltpu.PrefetchScalarGridSpec(
            num_scalar_prefetch=0,
            grid=(N, num_c),
            in_specs=[
                pl.BlockSpec(memory_space=pltpu.MemorySpace.SMEM),      # conv weight
                pl.BlockSpec(memory_space=pltpu.MemorySpace.SMEM),      # conv bias
                pl.BlockSpec((1, c_tile, HW), lambda n, c: (n, c, 0)),  # x channel tile
            ],
            out_specs=pl.BlockSpec((1, 1, HW), lambda n, c: (n, 0, 0)),
            scratch_shapes=[
                pltpu.VMEM((1, HW), jnp.float32),                 # running channel sum
                pltpu.VMEM((1, HW), jnp.float32),                 # running channel max
                pltpu.VMEM((2, 1, HW + 2 * K), jnp.float32),      # conv slab (+margins)
            ],
        ),
        # TODO(synk): on v7x (2 TensorCores) with N == 1, add a second "parallel"
        # grid axis over row strips (3-row halo) so both cores get work, and use
        # pipeline_mode=pl.Buffered(3) on the x spec if the DMA is still exposed.
        compiler_params=pltpu.CompilerParams(
            dimension_semantics=("parallel", "arbitrary"),
            vmem_limit_bytes=vmem_limit,
        ),
    )(w_flat, b, x_flat)
    return out.reshape(N, 1, H, W)


def reference(x, weight, bias):
    """Pure-JAX reference matching the PyTorch forward (mean/max -> conv -> ReLU)."""
    xf = x.astype(jnp.float32)
    avg = jnp.mean(xf, axis=1, keepdims=True)
    mx = jnp.max(xf, axis=1, keepdims=True)
    s = jnp.concatenate([avg, mx], axis=1)
    y = lax.conv_general_dilated(
        s, weight.astype(jnp.float32), window_strides=(1, 1),
        padding=((PAD, PAD), (PAD, PAD)),
        dimension_numbers=("NCHW", "OIHW", "NCHW"))
    y = y + bias.reshape(1, -1, 1, 1)
    return jnp.maximum(y, 0.0).astype(x.dtype)


if __name__ == "__main__":
    key = jax.random.PRNGKey(0)
    kx1, kx2, kx3, kw, kb = jax.random.split(key, 5)

    # nn.Conv2d(2, 1, 7, padding=3)-shaped parameters (deterministic).
    fan_in = 2 * KSIZE * KSIZE
    bound = 1.0 / (fan_in ** 0.5)
    weight = jax.random.uniform(kw, (1, 2, KSIZE, KSIZE), jnp.float32, -bound, bound)
    bias = jax.random.uniform(kb, (1,), jnp.float32, -bound, bound)

    def check(x, **kwargs):
        ref = reference(x, weight, bias)
        out = jax.block_until_ready(spatial_attention(x, weight, bias, **kwargs))
        assert out.shape == ref.shape, (out.shape, ref.shape)
        err = float(jnp.max(jnp.abs(out.astype(jnp.float32) - ref.astype(jnp.float32))))
        assert jnp.allclose(out, ref, rtol=1e-4, atol=1e-4), f"max abs err {err}"

    # 1) Single channel step (c_tile == C): the module's typical small shape.
    check(jax.random.normal(kx1, (2, 4, 16, 16), jnp.float32))

    # 2) Multi-step channel reduction (exercises the running sum/max scratch).
    check(jax.random.normal(kx2, (2, 32, 16, 16), jnp.float32), c_tile=8)

    # 3) Ragged channel count (boundary block + in-kernel channel masking).
    check(jax.random.normal(kx3, (1, 20, 16, 16), jnp.float32), c_tile=8)

    print("KERNEL_OK")
</pallas_src>

<mosaic_0001>
module attributes {stable_mosaic.version = 11 : i64} {
  func.func @_spatial_attention_kernel(%arg0: i32, %arg1: i32, %arg2: memref<98xf32, #tpu.memory_space<smem>>, %arg3: memref<1xf32, #tpu.memory_space<smem>>, %arg4: memref<1x4x256xf32, #tpu.memory_space<vmem>>, %arg5: memref<1x1x256xf32, #tpu.memory_space<vmem>>, %arg6: memref<1x256xf32, #tpu.memory_space<vmem>>, %arg7: memref<1x256xf32, #tpu.memory_space<vmem>>, %arg8: memref<2x1x358xf32, #tpu.memory_space<vmem>>) attributes {dimension_semantics = [#tpu.dimension_semantics<parallel>, #tpu.dimension_semantics<arbitrary>], iteration_bounds = array<i64: 2, 1>, scalar_prefetch = 0 : i64, scratch_operands = 3 : i64, tpu.core_type = #tpu.core_type<tc>, window_params = [{transform_indices = @transform_0, window_bounds = array<i64: 98>}, {transform_indices = @transform_1, window_bounds = array<i64: 1>}, {transform_indices = @transform_2, window_bounds = array<i64: 1, 4, 256>}, {transform_indices = @transform_3, window_bounds = array<i64: 1, 1, 256>}]} {
    %c0_i32 = arith.constant 0 : i32
    %0 = arith.cmpi eq, %arg1, %c0_i32 : i32
    %1 = arith.extui %0 : i1 to i32
    %c0_i32_0 = arith.constant 0 : i32
    %2 = arith.cmpi ne, %1, %c0_i32_0 : i32
    scf.if %2 {
      %cst_14 = arith.constant 0.000000e+00 : f32
      %18 = vector.broadcast %cst_14 : f32 to vector<1x256xf32>
      %c0_15 = arith.constant 0 : index
      %c0_16 = arith.constant 0 : index
      %19 = vector.load %arg6[%c0_15, %c0_16] : memref<1x256xf32, #tpu.memory_space<vmem>>, vector<1x256xf32>
      tpu.vector_store %arg6[%c0_15, %c0_16], %18 {strides = array<i32>} : memref<1x256xf32, #tpu.memory_space<vmem>>, vector<1x256xf32>,
      %cst_17 = arith.constant 0xFF800000 : f32
      %20 = vector.broadcast %cst_17 : f32 to vector<1x256xf32>
      %c0_18 = arith.constant 0 : index
      %c0_19 = arith.constant 0 : index
      %21 = vector.load %arg7[%c0_18, %c0_19] : memref<1x256xf32, #tpu.memory_space<vmem>>, vector<1x256xf32>
      tpu.vector_store %arg7[%c0_18, %c0_19], %20 {strides = array<i32>} : memref<1x256xf32, #tpu.memory_space<vmem>>, vector<1x256xf32>,
    } else {
    }
    %c0 = arith.constant 0 : index
    %c0_1 = arith.constant 0 : index
    %c0_2 = arith.constant 0 : index
    %3 = vector.load %arg4[%c0, %c0_1, %c0_2] : memref<1x4x256xf32, #tpu.memory_space<vmem>>, vector<1x4x256xf32>
    %4 = vector.shape_cast %3 : vector<1x4x256xf32> to vector<4x256xf32>
    %c0_3 = arith.constant 0 : index
    %c0_4 = arith.constant 0 : index
    %5 = vector.load %arg6[%c0_3, %c0_4] : memref<1x256xf32, #tpu.memory_space<vmem>>, vector<1x256xf32>
    %cst = arith.constant dense<0.000000e+00> : vector<256xf32>
    %6 = vector.multi_reduction <add>, %4, %cst [0] : vector<4x256xf32> to vector<256xf32>
    %7 = vector.shape_cast %6 : vector<256xf32> to vector<1x256xf32>
    %8 = arith.addf %5, %7 : vector<1x256xf32>
    %c0_5 = arith.constant 0 : index
    %c0_6 = arith.constant 0 : index
    %9 = vector.load %arg6[%c0_5, %c0_6] : memref<1x256xf32, #tpu.memory_space<vmem>>, vector<1x256xf32>
    tpu.vector_store %arg6[%c0_5, %c0_6], %8 {strides = array<i32>} : memref<1x256xf32, #tpu.memory_space<vmem>>, vector<1x256xf32>,
    %c0_7 = arith.constant 0 : index
    %c0_8 = arith.constant 0 : index
    %10 = vector.load %arg7[%c0_7, %c0_8] : memref<1x256xf32, #tpu.memory_space<vmem>>, vector<1x256xf32>
    %cst_9 = arith.constant dense<0xFF800000> : vector<256xf32>
    %11 = vector.multi_reduction <maximumf>, %4, %cst_9 [0] : vector<4x256xf32> to vector<256xf32>
    %12 = vector.shape_cast %11 : vector<256xf32> to vector<1x256xf32>
    %13 = arith.maximumf %10, %12 : vector<1x256xf32>
    %c0_10 = arith.constant 0 : index
    %c0_11 = arith.constant 0 : index
    %14 = vector.load %arg7[%c0_10, %c0_11] : memref<1x256xf32, #tpu.memory_space<vmem>>, vector<1x256xf32>
    tpu.vector_store %arg7[%c0_10, %c0_11], %13 {strides = array<i32>} : memref<1x256xf32, #tpu.memory_space<vmem>>, vector<1x256xf32>,
    %c0_i32_12 = arith.constant 0 : i32
    %15 = arith.cmpi eq, %arg1, %c0_i32_12 : i32
    %16 = arith.extui %15 : i1 to i32
    %c0_i32_13 = arith.constant 0 : i32
    %17 = arith.cmpi ne, %16, %c0_i32_13 : i32
    scf.if %17 {
      %c0_14 = arith.constant 0 : index
      %c0_15 = arith.constant 0 : index
      %18 = vector.load %arg6[%c0_14, %c0_15] : memref<1x256xf32, #tpu.memory_space<vmem>>, vector<1x256xf32>
      %c0_16 = arith.constant 0 : index
      %c0_17 = arith.constant 0 : index
      %c51 = arith.constant 51 : index
      %19 = vector.load %arg8[%c0_16, %c0_17, %c51] : memref<2x1x358xf32, #tpu.memory_space<vmem>>, vector<1x1x256xf32>
      %20 = vector.shape_cast %19 : vector<1x1x256xf32> to vector<1x256xf32>
      %21 = vector.shape_cast %18 : vector<1x256xf32> to vector<1x1x256xf32>
      tpu.vector_store %arg8[%c0_16, %c0_17, %c51], %21 {strides = array<i32>} : memref<2x1x358xf32, #tpu.memory_space<vmem>>, vector<1x1x256xf32>,
      %c0_18 = arith.constant 0 : index
      %c0_19 = arith.constant 0 : index
      %22 = vector.load %arg7[%c0_18, %c0_19] : memref<1x256xf32, #tpu.memory_space<vmem>>, vector<1x256xf32>
      %c1 = arith.constant 1 : index
      %c0_20 = arith.constant 0 : index
      %c51_21 = arith.constant 51 : index
      %23 = vector.load %arg8[%c1, %c0_20, %c51_21] : memref<2x1x358xf32, #tpu.memory_space<vmem>>, vector<1x1x256xf32>
      %24 = vector.shape_cast %23 : vector<1x1x256xf32> to vector<1x256xf32>
      %25 = vector.shape_cast %22 : vector<1x256xf32> to vector<1x1x256xf32>
      tpu.vector_store %arg8[%c1, %c0_20, %c51_21], %25 {strides = array<i32>} : memref<2x1x358xf32, #tpu.memory_space<vmem>>, vector<1x1x256xf32>,
      %c0_22 = arith.constant 0 : index
      %26 = memref.load %arg3[%c0_22] : memref<1xf32, #tpu.memory_space<smem>>
      %27 = tpu.iota {dimensions = array<i32: 1>} : vector<1x256xi32>
      %c0_i32_23 = arith.constant 0 : i32
      %28 = vector.broadcast %c0_i32_23 : i32 to vector<1x256xi32>
      %29 = arith.addi %28, %27 : vector<1x256xi32>
      %c15_i32 = arith.constant 15 : i32
      %30 = vector.broadcast %c15_i32 : i32 to vector<1x256xi32>
      %31 = arith.andi %29, %30 : vector<1x256xi32>
      %cst_24 = arith.constant 0.000000e+00 : f32
      %32 = vector.broadcast %cst_24 : f32 to vector<1x256xf32>
      %33 = vector.broadcast %26 : f32 to vector<1x256xf32>
      %34 = arith.addf %32, %33 : vector<1x256xf32>
      %c3_i32 = arith.constant 3 : i32
      %35 = vector.broadcast %c3_i32 : i32 to vector<1x256xi32>
      %36 = arith.cmpi sge, %31, %35 : vector<1x256xi32>
      %c48_i32 = arith.constant 48 : i32
      %37 = vector.broadcast %c48_i32 : i32 to vector<1x256xi32>
      %38 = arith.cmpi sge, %29, %37 : vector<1x256xi32>
      %39 = arith.andi %36, %38 : vector<1x256xi1>
      %c0_25 = arith.constant 0 : index
      %40 = memref.load %arg2[%c0_25] : memref<98xf32, #tpu.memory_space<smem>>
      %c0_26 = arith.constant 0 : index
      %c0_27 = arith.constant 0 : index
      %c0_28 = arith.constant 0 : index
      %41 = vector.load %arg8[%c0_26, %c0_27, %c0_28] : memref<2x1x358xf32, #tpu.memory_space<vmem>>, vector<1x1x256xf32>
      %42 = vector.shape_cast %41 : vector<1x1x256xf32> to vector<1x256xf32>
      %cst_29 = arith.constant 0.000000e+00 : f32
      %43 = vector.broadcast %cst_29 : f32 to vector<1x256xf32>
      %44 = arith.select %39, %42, %43 : vector<1x256xi1>, vector<1x256xf32>
      %45 = vector.broadcast %40 : f32 to vector<1x256xf32>
      %46 = arith.mulf %45, %44 : vector<1x256xf32>
      %47 = arith.addf %34, %46 : vector<1x256xf32>
      %c49 = arith.constant 49 : index
      %48 = memref.load %arg2[%c49] : memref<98xf32, #tpu.memory_space<smem>>
      %c1_30 = arith.constant 1 : index
      %c0_31 = arith.constant 0 : index
      %c0_32 = arith.constant 0 : index
      %49 = vector.load %arg8[%c1_30, %c0_31, %c0_32] : memref<2x1x358xf32, #tpu.memory_space<vmem>>, vector<1x1x256xf32>
      %50 = vector.shape_cast %49 : vector<1x1x256xf32> to vector<1x256xf32>
      %cst_33 = arith.constant 0.000000e+00 : f32
      %51 = vector.broadcast %cst_33 : f32 to vector<1x256xf32>
      %52 = arith.select %39, %50, %51 : vector<1x256xi1>, vector<1x256xf32>
      %53 = vector.broadcast %48 : f32 to vector<1x256xf32>
      %54 = arith.mulf %53, %52 : vector<1x256xf32>
      %55 = arith.addf %47, %54 : vector<1x256xf32>
      %c32_i32 = arith.constant 32 : i32
      %56 = vector.broadcast %c32_i32 : i32 to vector<1x256xi32>
      %57 = arith.cmpi sge, %29, %56 : vector<1x256xi32>
      %58 = arith.andi %36, %57 : vector<1x256xi1>
      %c7 = arith.constant 7 : index
      %59 = memref.load %arg2[%c7] : memref<98xf32, #tpu.memory_space<smem>>
      %c0_34 = arith.constant 0 : index
      %c0_35 = arith.constant 0 : index
      %c16 = arith.constant 16 : index
      %60 = vector.load %arg8[%c0_34, %c0_35, %c16] : memref<2x1x358xf32, #tpu.memory_space<vmem>>, vector<1x1x256xf32>
      %61 = vector.shape_cast %60 : vector<1x1x256xf32> to vector<1x256xf32>
      %cst_36 = arith.constant 0.000000e+00 : f32
      %62 = vector.broadcast %cst_36 : f32 to vector<1x256xf32>
      %63 = arith.select %58, %61, %62 : vector<1x256xi1>, vector<1x256xf32>
      %64 = vector.broadcast %59 : f32 to vector<1x256xf32>
      %65 = arith.mulf %64, %63 : vector<1x256xf32>
      %66 = arith.addf %55, %65 : vector<1x256xf32>
      %c56 = arith.constant 56 : index
      %67 = memref.load %arg2[%c56] : memref<98xf32, #tpu.memory_space<smem>>
      %c1_37 = arith.constant 1 : index
      %c0_38 = arith.constant 0 : index
      %c16_39 = arith.constant 16 : index
      %68 = vector.load %arg8[%c1_37, %c0_38, %c16_39] : memref<2x1x358xf32, #tpu.memory_space<vmem>>, vector<1x1x256xf32>
      %69 = vector.shape_cast %68 : vector<1x1x256xf32> to vector<1x256xf32>
      %cst_40 = arith.constant 0.000000e+00 : f32
      %70 = vector.broadcast %cst_40 : f32 to vector<1x256xf32>
      %71 = arith.select %58, %69, %70 : vector<1x256xi1>, vector<1x256xf32>
      %72 = vector.broadcast %67 : f32 to vector<1x256xf32>
      %73 = arith.mulf %72, %71 : vector<1x256xf32>
      %74 = arith.addf %66, %73 : vector<1x256xf32>
      %c16_i32 = arith.constant 16 : i32
      %75 = vector.broadcast %c16_i32 : i32 to vector<1x256xi32>
      %76 = arith.cmpi sge, %29, %75 : vector<1x256xi32>
      %77 = arith.andi %36, %76 : vector<1x256xi1>
      %c14 = arith.constant 14 : index
      %78 = memref.load %arg2[%c14] : memref<98xf32, #tpu.memory_space<smem>>
      %c0_41 = arith.constant 0 : index
      %c0_42 = arith.constant 0 : index
      %c32 = arith.constant 32 : index
      %79 = vector.load %arg8[%c0_41, %c0_42, %c32] : memref<2x1x358xf32, #tpu.memory_space<vmem>>, vector<1x1x256xf32>
      %80 = vector.shape_cast %79 : vector<1x1x256xf32> to vector<1x256xf32>
      %cst_43 = arith.constant 0.000000e+00 : f32
      %81 = vector.broadcast %cst_43 : f32 to vector<1x256xf32>
      %82 = arith.select %77, %80, %81 : vector<1x256xi1>, vector<1x256xf32>
      %83 = vector.broadcast %78 : f32 to vector<1x256xf32>
      %84 = arith.mulf %83, %82 : vector<1x256xf32>
      %85 = arith.addf %74, %84 : vector<1x256xf32>
      %c63 = arith.constant 63 : index
      %86 = memref.load %arg2[%c63] : memref<98xf32, #tpu.memory_space<smem>>
      %c1_44 = arith.constant 1 : index
      %c0_45 = arith.constant 0 : index
      %c32_46 = arith.constant 32 : index
      %87 = vector.load %arg8[%c1_44, %c0_45, %c32_46] : memref<2x1x358xf32, #tpu.memory_space<vmem>>, vector<1x1x256xf32>
      %88 = vector.shape_cast %87 : vector<1x1x256xf32> to vector<1x256xf32>
      %cst_47 = arith.constant 0.000000e+00 : f32
      %89 = vector.broadcast %cst_47 : f32 to vector<1x256xf32>
      %90 = arith.select %77, %88, %89 : vector<1x256xi1>, vector<1x256xf32>
      %91 = vector.broadcast %86 : f32 to vector<1x256xf32>
      %92 = arith.mulf %91, %90 : vector<1x256xf32>
      %93 = arith.addf %85, %92 : vector<1x256xf32>
      %c21 = arith.constant 21 : index
      %94 = memref.load %arg2[%c21] : memref<98xf32, #tpu.memory_space<smem>>
      %c0_48 = arith.constant 0 : index
      %c0_49 = arith.constant 0 : index
      %c48 = arith.constant 48 : index
      %95 = vector.load %arg8[%c0_48, %c0_49, %c48] : memref<2x1x358xf32, #tpu.memory_space<vmem>>, vector<1x1x256xf32>
      %96 = vector.shape_cast %95 : vector<1x1x256xf32> to vector<1x256xf32>
      %cst_50 = arith.constant 0.000000e+00 : f32
      %97 = vector.broadcast %cst_50 : f32 to vector<1x256xf32>
      %98 = arith.select %36, %96, %97 : vector<1x256xi1>, vector<1x256xf32>
      %99 = vector.broadcast %94 : f32 to vector<1x256xf32>
      %100 = arith.mulf %99, %98 : vector<1x256xf32>
      %101 = arith.addf %93, %100 : vector<1x256xf32>
      %c70 = arith.constant 70 : index
      %102 = memref.load %arg2[%c70] : memref<98xf32, #tpu.memory_space<smem>>
      %c1_51 = arith.constant 1 : index
      %c0_52 = arith.constant 0 : index
      %c48_53 = arith.constant 48 : index
      %103 = vector.load %arg8[%c1_51, %c0_52, %c48_53] : memref<2x1x358xf32, #tpu.memory_space<vmem>>, vector<1x1x256xf32>
      %104 = vector.shape_cast %103 : vector<1x1x256xf32> to vector<1x256xf32>
      %cst_54 = arith.constant 0.000000e+00 : f32
      %105 = vector.broadcast %cst_54 : f32 to vector<1x256xf32>
      %106 = arith.select %36, %104, %105 : vector<1x256xi1>, vector<1x256xf32>
      %107 = vector.broadcast %102 : f32 to vector<1x256xf32>
      %108 = arith.mulf %107, %106 : vector<1x256xf32>
      %109 = arith.addf %101, %108 : vector<1x256xf32>
      %c240_i32 = arith.constant 240 : i32
      %110 = vector.broadcast %c240_i32 : i32 to vector<1x256xi32>
      %111 = arith.cmpi slt, %29, %110 : vector<1x256xi32>
      %112 = arith.andi %36, %111 : vector<1x256xi1>
      %c28 = arith.constant 28 : index
      %113 = memref.load %arg2[%c28] : memref<98xf32, #tpu.memory_space<smem>>
      %c0_55 = arith.constant 0 : index
      %c0_56 = arith.constant 0 : index
      %c64 = arith.constant 64 : index
      %114 = vector.load %arg8[%c0_55, %c0_56, %c64] : memref<2x1x358xf32, #tpu.memory_space<vmem>>, vector<1x1x256xf32>
      %115 = vector.shape_cast %114 : vector<1x1x256xf32> to vector<1x256xf32>
      %cst_57 = arith.constant 0.000000e+00 : f32
      %116 = vector.broadcast %cst_57 : f32 to vector<1x256xf32>
      %117 = arith.select %112, %115, %116 : vector<1x256xi1>, vector<1x256xf32>
      %118 = vector.broadcast %113 : f32 to vector<1x256xf32>
      %119 = arith.mulf %118, %117 : vector<1x256xf32>
      %120 = arith.addf %109, %119 : vector<1x256xf32>
      %c77 = arith.constant 77 : index
      %121 = memref.load %arg2[%c77] : memref<98xf32, #tpu.memory_space<smem>>
      %c1_58 = arith.constant 1 : index
      %c0_59 = arith.constant 0 : index
      %c64_60 = arith.constant 64 : index
      %122 = vector.load %arg8[%c1_58, %c0_59, %c64_60] : memref<2x1x358xf32, #tpu.memory_space<vmem>>, vector<1x1x256xf32>
      %123 = vector.shape_cast %122 : vector<1x1x256xf32> to vector<1x256xf32>
      %cst_61 = arith.constant 0.000000e+00 : f32
      %124 = vector.broadcast %cst_61 : f32 to vector<1x256xf32>
      %125 = arith.select %112, %123, %124 : vector<1x256xi1>, vector<1x256xf32>
      %126 = vector.broadcast %121 : f32 to vector<1x256xf32>
      %127 = arith.mulf %126, %125 : vector<1x256xf32>
      %128 = arith.addf %120, %127 : vector<1x256xf32>
      %c224_i32 = arith.constant 224 : i32
      %129 = vector.broadcast %c224_i32 : i32 to vector<1x256xi32>
      %130 = arith.cmpi slt, %29, %129 : vector<1x256xi32>
      %131 = arith.andi %36, %130 : vector<1x256xi1>
      %c35 = arith.constant 35 : index
      %132 = memref.load %arg2[%c35] : memref<98xf32, #tpu.memory_space<smem>>
      %c0_62 = arith.constant 0 : index
      %c0_63 = arith.constant 0 : index
      %c80 = arith.constant 80 : index
      %133 = vector.load %arg8[%c0_62, %c0_63, %c80] : memref<2x1x358xf32, #tpu.memory_space<vmem>>, vector<1x1x256xf32>
      %134 = vector.shape_cast %133 : vector<1x1x256xf32> to vector<1x256xf32>
      %cst_64 = arith.constant 0.000000e+00 : f32
      %135 = vector.broadcast %cst_64 : f32 to vector<1x256xf32>
      %136 = arith.select %131, %134, %135 : vector<1x256xi1>, vector<1x256xf32>
      %137 = vector.broadcast %132 : f32 to vector<1x256xf32>
      %138 = arith.mulf %137, %136 : vector<1x256xf32>
      %139 = arith.addf %128, %138 : vector<1x256xf32>
      %c84 = arith.constant 84 : index
      %140 = memref.load %arg2[%c84] : memref<98xf32, #tpu.memory_space<smem>>
      %c1_65 = arith.constant 1 : index
      %c0_66 = arith.constant 0 : index
      %c80_67 = arith.constant 80 : index
      %141 = vector.load %arg8[%c1_65, %c0_66, %c80_67] : memref<2x1x358xf32, #tpu.memory_space<vmem>>, vector<1x1x256xf32>
      %142 = vector.shape_cast %141 : vector<1x1x256xf32> to vector<1x256xf32>
      %cst_68 = arith.constant 0.000000e+00 : f32
      %143 = vector.broadcast %cst_68 : f32 to vector<1x256xf32>
      %144 = arith.select %131, %142, %143 : vector<1x256xi1>, vector<1x256xf32>
      %145 = vector.broadcast %140 : f32 to vector<1x256xf32>
      %146 = arith.mulf %145, %144 : vector<1x256xf32>
      %147 = arith.addf %139, %146 : vector<1x256xf32>
      %c208_i32 = arith.constant 208 : i32
      %148 = vector.broadcast %c208_i32 : i32 to vector<1x256xi32>
      %149 = arith.cmpi slt, %29, %148 : vector<1x256xi32>
      %150 = arith.andi %36, %149 : vector<1x256xi1>
      %c42 = arith.constant 42 : index
      %151 = memref.load %arg2[%c42] : memref<98xf32, #tpu.memory_space<smem>>
      %c0_69 = arith.constant 0 : index
      %c0_70 = arith.constant 0 : index
      %c96 = arith.constant 96 : index
      %152 = vector.load %arg8[%c0_69, %c0_70, %c96] : memref<2x1x358xf32, #tpu.memory_space<vmem>>, vector<1x1x256xf32>
      %153 = vector.shape_cast %152 : vector<1x1x256xf32> to vector<1x256xf32>
      %cst_71 = arith.constant 0.000000e+00 : f32
      %154 = vector.broadcast %cst_71 : f32 to vector<1x256xf32>
      %155 = arith.select %150, %153, %154 : vector<1x256xi1>, vector<1x256xf32>
      %156 = vector.broadcast %151 : f32 to vector<1x256xf32>
      %157 = arith.mulf %156, %155 : vector<1x256xf32>
      %158 = arith.addf %147, %157 : vector<1x256xf32>
      %c91 = arith.constant 91 : index
      %159 = memref.load %arg2[%c91] : memref<98xf32, #tpu.memory_space<smem>>
      %c1_72 = arith.constant 1 : index
      %c0_73 = arith.constant 0 : index
      %c96_74 = arith.constant 96 : index
      %160 = vector.load %arg8[%c1_72, %c0_73, %c96_74] : memref<2x1x358xf32, #tpu.memory_space<vmem>>, vector<1x1x256xf32>
      %161 = vector.shape_cast %160 : vector<1x1x256xf32> to vector<1x256xf32>
      %cst_75 = arith.constant 0.000000e+00 : f32
      %162 = vector.broadcast %cst_75 : f32 to vector<1x256xf32>
      %163 = arith.select %150, %161, %162 : vector<1x256xi1>, vector<1x256xf32>
      %164 = vector.broadcast %159 : f32 to vector<1x256xf32>
      %165 = arith.mulf %164, %163 : vector<1x256xf32>
      %166 = arith.addf %158, %165 : vector<1x256xf32>
      %c2_i32 = arith.constant 2 : i32
      %167 = vector.broadcast %c2_i32 : i32 to vector<1x256xi32>
      %168 = arith.cmpi sge, %31, %167 : vector<1x256xi32>
      %c48_i32_76 = arith.constant 48 : i32
      %169 = vector.broadcast %c48_i32_76 : i32 to vector<1x256xi32>
      %170 = arith.cmpi sge, %29, %169 : vector<1x256xi32>
      %171 = arith.andi %168, %170 : vector<1x256xi1>
      %c1_77 = arith.constant 1 : index
      %172 = memref.load %arg2[%c1_77] : memref<98xf32, #tpu.memory_space<smem>>
      %c0_78 = arith.constant 0 : index
      %c0_79 = arith.constant 0 : index
      %c1_80 = arith.constant 1 : index
      %173 = vector.load %arg8[%c0_78, %c0_79, %c1_80] : memref<2x1x358xf32, #tpu.memory_space<vmem>>, vector<1x1x256xf32>
      %174 = vector.shape_cast %173 : vector<1x1x256xf32> to vector<1x256xf32>
      %cst_81 = arith.constant 0.000000e+00 : f32
      %175 = vector.broadcast %cst_81 : f32 to vector<1x256xf32>
      %176 = arith.select %171, %174, %175 : vector<1x256xi1>, vector<1x256xf32>
      %177 = vector.broadcast %172 : f32 to vector<1x256xf32>
      %178 = arith.mulf %177, %176 : vector<1x256xf32>
      %179 = arith.addf %166, %178 : vector<1x256xf32>
      %c50 = arith.constant 50 : index
      %180 = memref.load %arg2[%c50] : memref<98xf32, #tpu.memory_space<smem>>
      %c1_82 = arith.constant 1 : index
      %c0_83 = arith.constant 0 : index
      %c1_84 = arith.constant 1 : index
      %181 = vector.load %arg8[%c1_82, %c0_83, %c1_84] : memref<2x1x358xf32, #tpu.memory_space<vmem>>, vector<1x1x256xf32>
      %182 = vector.shape_cast %181 : vector<1x1x256xf32> to vector<1x256xf32>
      %cst_85 = arith.constant 0.000000e+00 : f32
      %183 = vector.broadcast %cst_85 : f32 to vector<1x256xf32>
      %184 = arith.select %171, %182, %183 : vector<1x256xi1>, vector<1x256xf32>
      %185 = vector.broadcast %180 : f32 to vector<1x256xf32>
      %186 = arith.mulf %185, %184 : vector<1x256xf32>
      %187 = arith.addf %179, %186 : vector<1x256xf32>
      %c32_i32_86 = arith.constant 32 : i32
      %188 = vector.broadcast %c32_i32_86 : i32 to vector<1x256xi32>
      %189 = arith.cmpi sge, %29, %188 : vector<1x256xi32>
      %190 = arith.andi %168, %189 : vector<1x256xi1>
      %c8 = arith.constant 8 : index
      %191 = memref.load %arg2[%c8] : memref<98xf32, #tpu.memory_space<smem>>
      %c0_87 = arith.constant 0 : index
      %c0_88 = arith.constant 0 : index
      %c17 = arith.constant 17 : index
      %192 = vector.load %arg8[%c0_87, %c0_88, %c17] : memref<2x1x358xf32, #tpu.memory_space<vmem>>, vector<1x1x256xf32>
      %193 = vector.shape_cast %192 : vector<1x1x256xf32> to vector<1x256xf32>
      %cst_89 = arith.constant 0.000000e+00 : f32
      %194 = vector.broadcast %cst_89 : f32 to vector<1x256xf32>
      %195 = arith.select %190, %193, %194 : vector<1x256xi1>, vector<1x256xf32>
      %196 = vector.broadcast %191 : f32 to vector<1x256xf32>
      %197 = arith.mulf %196, %195 : vector<1x256xf32>
      %198 = arith.addf %187, %197 : vector<1x256xf32>
      %c57 = arith.constant 57 : index
      %199 = memref.load %arg2[%c57] : memref<98xf32, #tpu.memory_space<smem>>
      %c1_90 = arith.constant 1 : index
      %c0_91 = arith.constant 0 : index
      %c17_92 = arith.constant 17 : index
      %200 = vector.load %arg8[%c1_90, %c0_91, %c17_92] : memref<2x1x358xf32, #tpu.memory_space<vmem>>, vector<1x1x256xf32>
      %201 = vector.shape_cast %200 : vector<1x1x256xf32> to vector<1x256xf32>
      %cst_93 = arith.constant 0.000000e+00 : f32
      %202 = vector.broadcast %cst_93 : f32 to vector<1x256xf32>
      %203 = arith.select %190, %201, %202 : vector<1x256xi1>, vector<1x256xf32>
      %204 = vector.broadcast %199 : f32 to vector<1x256xf32>
      %205 = arith.mulf %204, %203 : vector<1x256xf32>
      %206 = arith.addf %198, %205 : vector<1x256xf32>
      %c16_i32_94 = arith.constant 16 : i32
      %207 = vector.broadcast %c16_i32_94 : i32 to vector<1x256xi32>
      %208 = arith.cmpi sge, %29, %207 : vector<1x256xi32>
      %209 = arith.andi %168, %208 : vector<1x256xi1>
      %c15 = arith.constant 15 : index
      %210 = memref.load %arg2[%c15] : memref<98xf32, #tpu.memory_space<smem>>
      %c0_95 = arith.constant 0 : index
      %c0_96 = arith.constant 0 : index
      %c33 = arith.constant 33 : index
      %211 = vector.load %arg8[%c0_95, %c0_96, %c33] : memref<2x1x358xf32, #tpu.memory_space<vmem>>, vector<1x1x256xf32>
      %212 = vector.shape_cast %211 : vector<1x1x256xf32> to vector<1x256xf32>
      %cst_97 = arith.constant 0.000000e+00 : f32
      %213 = vector.broadcast %cst_97 : f32 to vector<1x256xf32>
      %214 = arith.select %209, %212, %213 : vector<1x256xi1>, vector<1x256xf32>
      %215 = vector.broadcast %210 : f32 to vector<1x256xf32>
      %216 = arith.mulf %215, %214 : vector<1x256xf32>
      %217 = arith.addf %206, %216 : vector<1x256xf32>
      %c64_98 = arith.constant 64 : index
      %218 = memref.load %arg2[%c64_98] : memref<98xf32, #tpu.memory_space<smem>>
      %c1_99 = arith.constant 1 : index
      %c0_100 = arith.constant 0 : index
      %c33_101 = arith.constant 33 : index
      %219 = vector.load %arg8[%c1_99, %c0_100, %c33_101] : memref<2x1x358xf32, #tpu.memory_space<vmem>>, vector<1x1x256xf32>
      %220 = vector.shape_cast %219 : vector<1x1x256xf32> to vector<1x256xf32>
      %cst_102 = arith.constant 0.000000e+00 : f32
      %221 = vector.broadcast %cst_102 : f32 to vector<1x256xf32>
      %222 = arith.select %209, %220, %221 : vector<1x256xi1>, vector<1x256xf32>
      %223 = vector.broadcast %218 : f32 to vector<1x256xf32>
      %224 = arith.mulf %223, %222 : vector<1x256xf32>
      %225 = arith.addf %217, %224 : vector<1x256xf32>
      %c22 = arith.constant 22 : index
      %226 = memref.load %arg2[%c22] : memref<98xf32, #tpu.memory_space<smem>>
      %c0_103 = arith.constant 0 : index
      %c0_104 = arith.constant 0 : index
      %c49_105 = arith.constant 49 : index
      %227 = vector.load %arg8[%c0_103, %c0_104, %c49_105] : memref<2x1x358xf32, #tpu.memory_space<vmem>>, vector<1x1x256xf32>
      %228 = vector.shape_cast %227 : vector<1x1x256xf32> to vector<1x256xf32>
      %cst_106 = arith.constant 0.000000e+00 : f32
      %229 = vector.broadcast %cst_106 : f32 to vector<1x256xf32>
      %230 = arith.select %168, %228, %229 : vector<1x256xi1>, vector<1x256xf32>
      %231 = vector.broadcast %226 : f32 to vector<1x256xf32>
      %232 = arith.mulf %231, %230 : vector<1x256xf32>
      %233 = arith.addf %225, %232 : vector<1x256xf32>
      %c71 = arith.constant 71 : index
      %234 = memref.load %arg2[%c71] : memref<98xf32, #tpu.memory_space<smem>>
      %c1_107 = arith.constant 1 : index
      %c0_108 = arith.constant 0 : index
      %c49_109 = arith.constant 49 : index
      %235 = vector.load %arg8[%c1_107, %c0_108, %c49_109] : memref<2x1x358xf32, #tpu.memory_space<vmem>>, vector<1x1x256xf32>
      %236 = vector.shape_cast %235 : vector<1x1x256xf32> to vector<1x256xf32>
      %cst_110 = arith.constant 0.000000e+00 : f32
      %237 = vector.broadcast %cst_110 : f32 to vector<1x256xf32>
      %238 = arith.select %168, %236, %237 : vector<1x256xi1>, vector<1x256xf32>
      %239 = vector.broadcast %234 : f32 to vector<1x256xf32>
      %240 = arith.mulf %239, %238 : vector<1x256xf32>
      %241 = arith.addf %233, %240 : vector<1x256xf32>
      %c240_i32_111 = arith.constant 240 : i32
      %242 = vector.broadcast %c240_i32_111 : i32 to vector<1x256xi32>
      %243 = arith.cmpi slt, %29, %242 : vector<1x256xi32>
      %244 = arith.andi %168, %243 : vector<1x256xi1>
      %c29 = arith.constant 29 : index
      %245 = memref.load %arg2[%c29] : memref<98xf32, #tpu.memory_space<smem>>
      %c0_112 = arith.constant 0 : index
      %c0_113 = arith.constant 0 : index
      %c65 = arith.constant 65 : index
      %246 = vector.load %arg8[%c0_112, %c0_113, %c65] : memref<2x1x358xf32, #tpu.memory_space<vmem>>, vector<1x1x256xf32>
      %247 = vector.shape_cast %246 : vector<1x1x256xf32> to vector<1x256xf32>
      %cst_114 = arith.constant 0.000000e+00 : f32
      %248 = vector.broadcast %cst_114 : f32 to vector<1x256xf32>
      %249 = arith.select %244, %247, %248 : vector<1x256xi1>, vector<1x256xf32>
      %250 = vector.broadcast %245 : f32 to vector<1x256xf32>
      %251 = arith.mulf %250, %249 : vector<1x256xf32>
      %252 = arith.addf %241, %251 : vector<1x256xf32>
      %c78 = arith.constant 78 : index
      %253 = memref.load %arg2[%c78] : memref<98xf32, #tpu.memory_space<smem>>
      %c1_115 = arith.constant 1 : index
      %c0_116 = arith.constant 0 : index
      %c65_117 = arith.constant 65 : index
      %254 = vector.load %arg8[%c1_115, %c0_116, %c65_117] : memref<2x1x358xf32, #tpu.memory_space<vmem>>, vector<1x1x256xf32>
      %255 = vector.shape_cast %254 : vector<1x1x256xf32> to vector<1x256xf32>
      %cst_118 = arith.constant 0.000000e+00 : f32
      %256 = vector.broadcast %cst_118 : f32 to vector<1x256xf32>
      %257 = arith.select %244, %255, %256 : vector<1x256xi1>, vector<1x256xf32>
      %258 = vector.broadcast %253 : f32 to vector<1x256xf32>
      %259 = arith.mulf %258, %257 : vector<1x256xf32>
      %260 = arith.addf %252, %259 : vector<1x256xf32>
      %c224_i32_119 = arith.constant 224 : i32
      %261 = vector.broadcast %c224_i32_119 : i32 to vector<1x256xi32>
      %262 = arith.cmpi slt, %29, %261 : vector<1x256xi32>
      %263 = arith.andi %168, %262 : vector<1x256xi1>
      %c36 = arith.constant 36 : index
      %264 = memref.load %arg2[%c36] : memref<98xf32, #tpu.memory_space<smem>>
      %c0_120 = arith.constant 0 : index
      %c0_121 = arith.constant 0 : index
      %c81 = arith.constant 81 : index
      %265 = vector.load %arg8[%c0_120, %c0_121, %c81] : memref<2x1x358xf32, #tpu.memory_space<vmem>>, vector<1x1x256xf32>
      %266 = vector.shape_cast %265 : vector<1x1x256xf32> to vector<1x256xf32>
      %cst_122 = arith.constant 0.000000e+00 : f32
      %267 = vector.broadcast %cst_122 : f32 to vector<1x256xf32>
      %268 = arith.select %263, %266, %267 : vector<1x256xi1>, vector<1x256xf32>
      %269 = vector.broadcast %264 : f32 to vector<1x256xf32>
      %270 = arith.mulf %269, %268 : vector<1x256xf32>
      %271 = arith.addf %260, %270 : vector<1x256xf32>
      %c85 = arith.constant 85 : index
      %272 = memref.load %arg2[%c85] : memref<98xf32, #tpu.memory_space<smem>>
      %c1_123 = arith.constant 1 : index
      %c0_124 = arith.constant 0 : index
      %c81_125 = arith.constant 81 : index
      %273 = vector.load %arg8[%c1_123, %c0_124, %c81_125] : memref<2x1x358xf32, #tpu.memory_space<vmem>>, vector<1x1x256xf32>
      %274 = vector.shape_cast %273 : vector<1x1x256xf32> to vector<1x256xf32>
      %cst_126 = arith.constant 0.000000e+00 : f32
      %275 = vector.broadcast %cst_126 : f32 to vector<1x256xf32>
      %276 = arith.select %263, %274, %275 : vector<1x256xi1>, vector<1x256xf32>
      %277 = vector.broadcast %272 : f32 to vector<1x256xf32>
      %278 = arith.mulf %277, %276 : vector<1x256xf32>
      %279 = arith.addf %271, %278 : vector<1x256xf32>
      %c208_i32_127 = arith.constant 208 : i32
      %280 = vector.broadcast %c208_i32_127 : i32 to vector<1x256xi32>
      %281 = arith.cmpi slt, %29, %280 : vector<1x256xi32>
      %282 = arith.andi %168, %281 : vector<1x256xi1>
      %c43 = arith.constant 43 : index
      %283 = memref.load %arg2[%c43] : memref<98xf32, #tpu.memory_space<smem>>
      %c0_128 = arith.constant 0 : index
      %c0_129 = arith.constant 0 : index
      %c97 = arith.constant 97 : index
      %284 = vector.load %arg8[%c0_128, %c0_129, %c97] : memref<2x1x358xf32, #tpu.memory_space<vmem>>, vector<1x1x256xf32>
      %285 = vector.shape_cast %284 : vector<1x1x256xf32> to vector<1x256xf32>
      %cst_130 = arith.constant 0.000000e+00 : f32
      %286 = vector.broadcast %cst_130 : f32 to vector<1x256xf32>
      %287 = arith.select %282, %285, %286 : vector<1x256xi1>, vector<1x256xf32>
      %288 = vector.broadcast %283 : f32 to vector<1x256xf32>
      %289 = arith.mulf %288, %287 : vector<1x256xf32>
      %290 = arith.addf %279, %289 : vector<1x256xf32>
      %c92 = arith.constant 92 : index
      %291 = memref.load %arg2[%c92] : memref<98xf32, #tpu.memory_space<smem>>
      %c1_131 = arith.constant 1 : index
      %c0_132 = arith.constant 0 : index
      %c97_133 = arith.constant 97 : index
      %292 = vector.load %arg8[%c1_131, %c0_132, %c97_133] : memref<2x1x358xf32, #tpu.memory_space<vmem>>, vector<1x1x256xf32>
      %293 = vector.shape_cast %292 : vector<1x1x256xf32> to vector<1x256xf32>
      %cst_134 = arith.constant 0.000000e+00 : f32
      %294 = vector.broadcast %cst_134 : f32 to vector<1x256xf32>
      %295 = arith.select %282, %293, %294 : vector<1x256xi1>, vector<1x256xf32>
      %296 = vector.broadcast %291 : f32 to vector<1x256xf32>
      %297 = arith.mulf %296, %295 : vector<1x256xf32>
      %298 = arith.addf %290, %297 : vector<1x256xf32>
      %c1_i32 = arith.constant 1 : i32
      %299 = vector.broadcast %c1_i32 : i32 to vector<1x256xi32>
      %300 = arith.cmpi sge, %31, %299 : vector<1x256xi32>
      %c48_i32_135 = arith.constant 48 : i32
      %301 = vector.broadcast %c48_i32_135 : i32 to vector<1x256xi32>
      %302 = arith.cmpi sge, %29, %301 : vector<1x256xi32>
      %303 = arith.andi %300, %302 : vector<1x256xi1>
      %c2 = arith.constant 2 : index
      %304 = memref.load %arg2[%c2] : memref<98xf32, #tpu.memory_space<smem>>
      %c0_136 = arith.constant 0 : index
      %c0_137 = arith.constant 0 : index
      %c2_138 = arith.constant 2 : index
      %305 = vector.load %arg8[%c0_136, %c0_137, %c2_138] : memref<2x1x358xf32, #tpu.memory_space<vmem>>, vector<1x1x256xf32>
      %306 = vector.shape_cast %305 : vector<1x1x256xf32> to vector<1x256xf32>
      %cst_139 = arith.constant 0.000000e+00 : f32
      %307 = vector.broadcast %cst_139 : f32 to vector<1x256xf32>
      %308 = arith.select %303, %306, %307 : vector<1x256xi1>, vector<1x256xf32>
      %309 = vector.broadcast %304 : f32 to vector<1x256xf32>
      %310 = arith.mulf %309, %308 : vector<1x256xf32>
      %311 = arith.addf %298, %310 : vector<1x256xf32>
      %c51_140 = arith.constant 51 : index
      %312 = memref.load %arg2[%c51_140] : memref<98xf32, #tpu.memory_space<smem>>
      %c1_141 = arith.constant 1 : index
      %c0_142 = arith.constant 0 : index
      %c2_143 = arith.constant 2 : index
      %313 = vector.load %arg8[%c1_141, %c0_142, %c2_143] : memref<2x1x358xf32, #tpu.memory_space<vmem>>, vector<1x1x256xf32>
      %314 = vector.shape_cast %313 : vector<1x1x256xf32> to vector<1x256xf32>
      %cst_144 = arith.constant 0.000000e+00 : f32
      %315 = vector.broadcast %cst_144 : f32 to vector<1x256xf32>
      %316 = arith.select %303, %314, %315 : vector<1x256xi1>, vector<1x256xf32>
      %317 = vector.broadcast %312 : f32 to vector<1x256xf32>
      %318 = arith.mulf %317, %316 : vector<1x256xf32>
      %319 = arith.addf %311, %318 : vector<1x256xf32>
      %c32_i32_145 = arith.constant 32 : i32
      %320 = vector.broadcast %c32_i32_145 : i32 to vector<1x256xi32>
      %321 = arith.cmpi sge, %29, %320 : vector<1x256xi32>
      %322 = arith.andi %300, %321 : vector<1x256xi1>
      %c9 = arith.constant 9 : index
      %323 = memref.load %arg2[%c9] : memref<98xf32, #tpu.memory_space<smem>>
      %c0_146 = arith.constant 0 : index
      %c0_147 = arith.constant 0 : index
      %c18 = arith.constant 18 : index
      %324 = vector.load %arg8[%c0_146, %c0_147, %c18] : memref<2x1x358xf32, #tpu.memory_space<vmem>>, vector<1x1x256xf32>
      %325 = vector.shape_cast %324 : vector<1x1x256xf32> to vector<1x256xf32>
      %cst_148 = arith.constant 0.000000e+00 : f32
      %326 = vector.broadcast %cst_148 : f32 to vector<1x256xf32>
      %327 = arith.select %322, %325, %326 : vector<1x256xi1>, vector<1x256xf32>
      %328 = vector.broadcast %323 : f32 to vector<1x256xf32>
      %329 = arith.mulf %328, %327 : vector<1x256xf32>
      %330 = arith.addf %319, %329 : vector<1x256xf32>
      %c58 = arith.constant 58 : index
      %331 = memref.load %arg2[%c58] : memref<98xf32, #tpu.memory_space<smem>>
      %c1_149 = arith.constant 1 : index
      %c0_150 = arith.constant 0 : index
      %c18_151 = arith.constant 18 : index
      %332 = vector.load %arg8[%c1_149, %c0_150, %c18_151] : memref<2x1x358xf32, #tpu.memory_space<vmem>>, vector<1x1x256xf32>
      %333 = vector.shape_cast %332 : vector<1x1x256xf32> to vector<1x256xf32>
      %cst_152 = arith.constant 0.000000e+00 : f32
      %334 = vector.broadcast %cst_152 : f32 to vector<1x256xf32>
      %335 = arith.select %322, %333, %334 : vector<1x256xi1>, vector<1x256xf32>
      %336 = vector.broadcast %331 : f32 to vector<1x256xf32>
      %337 = arith.mulf %336, %335 : vector<1x256xf32>
      %338 = arith.addf %330, %337 : vector<1x256xf32>
      %c16_i32_153 = arith.constant 16 : i32
      %339 = vector.broadcast %c16_i32_153 : i32 to vector<1x256xi32>
      %340 = arith.cmpi sge, %29, %339 : vector<1x256xi32>
      %341 = arith.andi %300, %340 : vector<1x256xi1>
      %c16_154 = arith.constant 16 : index
      %342 = memref.load %arg2[%c16_154] : memref<98xf32, #tpu.memory_space<smem>>
      %c0_155 = arith.constant 0 : index
      %c0_156 = arith.constant 0 : index
      %c34 = arith.constant 34 : index
      %343 = vector.load %arg8[%c0_155, %c0_156, %c34] : memref<2x1x358xf32, #tpu.memory_space<vmem>>, vector<1x1x256xf32>
      %344 = vector.shape_cast %343 : vector<1x1x256xf32> to vector<1x256xf32>
      %cst_157 = arith.constant 0.000000e+00 : f32
      %345 = vector.broadcast %cst_157 : f32 to vector<1x256xf32>
      %346 = arith.select %341, %344, %345 : vector<1x256xi1>, vector<1x256xf32>
      %347 = vector.broadcast %342 : f32 to vector<1x256xf32>
      %348 = arith.mulf %347, %346 : vector<1x256xf32>
      %349 = arith.addf %338, %348 : vector<1x256xf32>
      %c65_158 = arith.constant 65 : index
      %350 = memref.load %arg2[%c65_158] : memref<98xf32, #tpu.memory_space<smem>>
      %c1_159 = arith.constant 1 : index
      %c0_160 = arith.constant 0 : index
      %c34_161 = arith.constant 34 : index
      %351 = vector.load %arg8[%c1_159, %c0_160, %c34_161] : memref<2x1x358xf32, #tpu.memory_space<vmem>>, vector<1x1x256xf32>
      %352 = vector.shape_cast %351 : vector<1x1x256xf32> to vector<1x256xf32>
      %cst_162 = arith.constant 0.000000e+00 : f32
      %353 = vector.broadcast %cst_162 : f32 to vector<1x256xf32>
      %354 = arith.select %341, %352, %353 : vector<1x256xi1>, vector<1x256xf32>
      %355 = vector.broadcast %350 : f32 to vector<1x256xf32>
      %356 = arith.mulf %355, %354 : vector<1x256xf32>
      %357 = arith.addf %349, %356 : vector<1x256xf32>
      %c23 = arith.constant 23 : index
      %358 = memref.load %arg2[%c23] : memref<98xf32, #tpu.memory_space<smem>>
      %c0_163 = arith.constant 0 : index
      %c0_164 = arith.constant 0 : index
      %c50_165 = arith.constant 50 : index
      %359 = vector.load %arg8[%c0_163, %c0_164, %c50_165] : memref<2x1x358xf32, #tpu.memory_space<vmem>>, vector<1x1x256xf32>
      %360 = vector.shape_cast %359 : vector<1x1x256xf32> to vector<1x256xf32>
      %cst_166 = arith.constant 0.000000e+00 : f32
      %361 = vector.broadcast %cst_166 : f32 to vector<1x256xf32>
      %362 = arith.select %300, %360, %361 : vector<1x256xi1>, vector<1x256xf32>
      %363 = vector.broadcast %358 : f32 to vector<1x256xf32>
      %364 = arith.mulf %363, %362 : vector<1x256xf32>
      %365 = arith.addf %357, %364 : vector<1x256xf32>
      %c72 = arith.constant 72 : index
      %366 = memref.load %arg2[%c72] : memref<98xf32, #tpu.memory_space<smem>>
      %c1_167 = arith.constant 1 : index
      %c0_168 = arith.constant 0 : index
      %c50_169 = arith.constant 50 : index
      %367 = vector.load %arg8[%c1_167, %c0_168, %c50_169] : memref<2x1x358xf32, #tpu.memory_space<vmem>>, vector<1x1x256xf32>
      %368 = vector.shape_cast %367 : vector<1x1x256xf32> to vector<1x256xf32>
      %cst_170 = arith.constant 0.000000e+00 : f32
      %369 = vector.broadcast %cst_170 : f32 to vector<1x256xf32>
      %370 = arith.select %300, %368, %369 : vector<1x256xi1>, vector<1x256xf32>
      %371 = vector.broadcast %366 : f32 to vector<1x256xf32>
      %372 = arith.mulf %371, %370 : vector<1x256xf32>
      %373 = arith.addf %365, %372 : vector<1x256xf32>
      %c240_i32_171 = arith.constant 240 : i32
      %374 = vector.broadcast %c240_i32_171 : i32 to vector<1x256xi32>
      %375 = arith.cmpi slt, %29, %374 : vector<1x256xi32>
      %376 = arith.andi %300, %375 : vector<1x256xi1>
      %c30 = arith.constant 30 : index
      %377 = memref.load %arg2[%c30] : memref<98xf32, #tpu.memory_space<smem>>
      %c0_172 = arith.constant 0 : index
      %c0_173 = arith.constant 0 : index
      %c66 = arith.constant 66 : index
      %378 = vector.load %arg8[%c0_172, %c0_173, %c66] : memref<2x1x358xf32, #tpu.memory_space<vmem>>, vector<1x1x256xf32>
      %379 = vector.shape_cast %378 : vector<1x1x256xf32> to vector<1x256xf32>
      %cst_174 = arith.constant 0.000000e+00 : f32
      %380 = vector.broadcast %cst_174 : f32 to vector<1x256xf32>
      %381 = arith.select %376, %379, %380 : vector<1x256xi1>, vector<1x256xf32>
      %382 = vector.broadcast %377 : f32 to vector<1x256xf32>
      %383 = arith.mulf %382, %381 : vector<1x256xf32>
      %384 = arith.addf %373, %383 : vector<1x256xf32>
      %c79 = arith.constant 79 : index
      %385 = memref.load %arg2[%c79] : memref<98xf32, #tpu.memory_space<smem>>
      %c1_175 = arith.constant 1 : index
      %c0_176 = arith.constant 0 : index
      %c66_177 = arith.constant 66 : index
      %386 = vector.load %arg8[%c1_175, %c0_176, %c66_177] : memref<2x1x358xf32, #tpu.memory_space<vmem>>, vector<1x1x256xf32>
      %387 = vector.shape_cast %386 : vector<1x1x256xf32> to vector<1x256xf32>
      %cst_178 = arith.constant 0.000000e+00 : f32
      %388 = vector.broadcast %cst_178 : f32 to vector<1x256xf32>
      %389 = arith.select %376, %387, %388 : vector<1x256xi1>, vector<1x256xf32>
      %390 = vector.broadcast %385 : f32 to vector<1x256xf32>
      %391 = arith.mulf %390, %389 : vector<1x256xf32>
      %392 = arith.addf %384, %391 : vector<1x256xf32>
      %c224_i32_179 = arith.constant 224 : i32
      %393 = vector.broadcast %c224_i32_179 : i32 to vector<1x256xi32>
      %394 = arith.cmpi slt, %29, %393 : vector<1x256xi32>
      %395 = arith.andi %300, %394 : vector<1x256xi1>
      %c37 = arith.constant 37 : index
      %396 = memref.load %arg2[%c37] : memref<98xf32, #tpu.memory_space<smem>>
      %c0_180 = arith.constant 0 : index
      %c0_181 = arith.constant 0 : index
      %c82 = arith.constant 82 : index
      %397 = vector.load %arg8[%c0_180, %c0_181, %c82] : memref<2x1x358xf32, #tpu.memory_space<vmem>>, vector<1x1x256xf32>
      %398 = vector.shape_cast %397 : vector<1x1x256xf32> to vector<1x256xf32>
      %cst_182 = arith.constant 0.000000e+00 : f32
      %399 = vector.broadcast %cst_182 : f32 to vector<1x256xf32>
      %400 = arith.select %395, %398, %399 : vector<1x256xi1>, vector<1x256xf32>
      %401 = vector.broadcast %396 : f32 to vector<1x256xf32>
      %402 = arith.mulf %401, %400 : vector<1x256xf32>
      %403 = arith.addf %392, %402 : vector<1x256xf32>
      %c86 = arith.constant 86 : index
      %404 = memref.load %arg2[%c86] : memref<98xf32, #tpu.memory_space<smem>>
      %c1_183 = arith.constant 1 : index
      %c0_184 = arith.constant 0 : index
      %c82_185 = arith.constant 82 : index
      %405 = vector.load %arg8[%c1_183, %c0_184, %c82_185] : memref<2x1x358xf32, #tpu.memory_space<vmem>>, vector<1x1x256xf32>
      %406 = vector.shape_cast %405 : vector<1x1x256xf32> to vector<1x256xf32>
      %cst_186 = arith.constant 0.000000e+00 : f32
      %407 = vector.broadcast %cst_186 : f32 to vector<1x256xf32>
      %408 = arith.select %395, %406, %407 : vector<1x256xi1>, vector<1x256xf32>
      %409 = vector.broadcast %404 : f32 to vector<1x256xf32>
      %410 = arith.mulf %409, %408 : vector<1x256xf32>
      %411 = arith.addf %403, %410 : vector<1x256xf32>
      %c208_i32_187 = arith.constant 208 : i32
      %412 = vector.broadcast %c208_i32_187 : i32 to vector<1x256xi32>
      %413 = arith.cmpi slt, %29, %412 : vector<1x256xi32>
      %414 = arith.andi %300, %413 : vector<1x256xi1>
      %c44 = arith.constant 44 : index
      %415 = memref.load %arg2[%c44] : memref<98xf32, #tpu.memory_space<smem>>
      %c0_188 = arith.constant 0 : index
      %c0_189 = arith.constant 0 : index
      %c98 = arith.constant 98 : index
      %416 = vector.load %arg8[%c0_188, %c0_189, %c98] : memref<2x1x358xf32, #tpu.memory_space<vmem>>, vector<1x1x256xf32>
      %417 = vector.shape_cast %416 : vector<1x1x256xf32> to vector<1x256xf32>
      %cst_190 = arith.constant 0.000000e+00 : f32
      %418 = vector.broadcast %cst_190 : f32 to vector<1x256xf32>
      %419 = arith.select %414, %417, %418 : vector<1x256xi1>, vector<1x256xf32>
      %420 = vector.broadcast %415 : f32 to vector<1x256xf32>
      %421 = arith.mulf %420, %419 : vector<1x256xf32>
      %422 = arith.addf %411, %421 : vector<1x256xf32>
      %c93 = arith.constant 93 : index
      %423 = memref.load %arg2[%c93] : memref<98xf32, #tpu.memory_space<smem>>
      %c1_191 = arith.constant 1 : index
      %c0_192 = arith.constant 0 : index
      %c98_193 = arith.constant 98 : index
      %424 = vector.load %arg8[%c1_191, %c0_192, %c98_193] : memref<2x1x358xf32, #tpu.memory_space<vmem>>, vector<1x1x256xf32>
      %425 = vector.shape_cast %424 : vector<1x1x256xf32> to vector<1x256xf32>
      %cst_194 = arith.constant 0.000000e+00 : f32
      %426 = vector.broadcast %cst_194 : f32 to vector<1x256xf32>
      %427 = arith.select %414, %425, %426 : vector<1x256xi1>, vector<1x256xf32>
      %428 = vector.broadcast %423 : f32 to vector<1x256xf32>
      %429 = arith.mulf %428, %427 : vector<1x256xf32>
      %430 = arith.addf %422, %429 : vector<1x256xf32>
      %c48_i32_195 = arith.constant 48 : i32
      %431 = vector.broadcast %c48_i32_195 : i32 to vector<1x256xi32>
      %432 = arith.cmpi sge, %29, %431 : vector<1x256xi32>
      %c3 = arith.constant 3 : index
      %433 = memref.load %arg2[%c3] : memref<98xf32, #tpu.memory_space<smem>>
      %c0_196 = arith.constant 0 : index
      %c0_197 = arith.constant 0 : index
      %c3_198 = arith.constant 3 : index
      %434 = vector.load %arg8[%c0_196, %c0_197, %c3_198] : memref<2x1x358xf32, #tpu.memory_space<vmem>>, vector<1x1x256xf32>
      %435 = vector.shape_cast %434 : vector<1x1x256xf32> to vector<1x256xf32>
      %cst_199 = arith.constant 0.000000e+00 : f32
      %436 = vector.broadcast %cst_199 : f32 to vector<1x256xf32>
      %437 = arith.select %432, %435, %436 : vector<1x256xi1>, vector<1x256xf32>
      %438 = vector.broadcast %433 : f32 to vector<1x256xf32>
      %439 = arith.mulf %438, %437 : vector<1x256xf32>
      %440 = arith.addf %430, %439 : vector<1x256xf32>
      %c52 = arith.constant 52 : index
      %441 = memref.load %arg2[%c52] : memref<98xf32, #tpu.memory_space<smem>>
      %c1_200 = arith.constant 1 : index
      %c0_201 = arith.constant 0 : index
      %c3_202 = arith.constant 3 : index
      %442 = vector.load %arg8[%c1_200, %c0_201, %c3_202] : memref<2x1x358xf32, #tpu.memory_space<vmem>>, vector<1x1x256xf32>
      %443 = vector.shape_cast %442 : vector<1x1x256xf32> to vector<1x256xf32>
      %cst_203 = arith.constant 0.000000e+00 : f32
      %444 = vector.broadcast %cst_203 : f32 to vector<1x256xf32>
      %445 = arith.select %432, %443, %444 : vector<1x256xi1>, vector<1x256xf32>
      %446 = vector.broadcast %441 : f32 to vector<1x256xf32>
      %447 = arith.mulf %446, %445 : vector<1x256xf32>
      %448 = arith.addf %440, %447 : vector<1x256xf32>
      %c32_i32_204 = arith.constant 32 : i32
      %449 = vector.broadcast %c32_i32_204 : i32 to vector<1x256xi32>
      %450 = arith.cmpi sge, %29, %449 : vector<1x256xi32>
      %c10 = arith.constant 10 : index
      %451 = memref.load %arg2[%c10] : memref<98xf32, #tpu.memory_space<smem>>
      %c0_205 = arith.constant 0 : index
      %c0_206 = arith.constant 0 : index
      %c19 = arith.constant 19 : index
      %452 = vector.load %arg8[%c0_205, %c0_206, %c19] : memref<2x1x358xf32, #tpu.memory_space<vmem>>, vector<1x1x256xf32>
      %453 = vector.shape_cast %452 : vector<1x1x256xf32> to vector<1x256xf32>
      %cst_207 = arith.constant 0.000000e+00 : f32
      %454 = vector.broadcast %cst_207 : f32 to vector<1x256xf32>
      %455 = arith.select %450, %453, %454 : vector<1x256xi1>, vector<1x256xf32>
      %456 = vector.broadcast %451 : f32 to vector<1x256xf32>
      %457 = arith.mulf %456, %455 : vector<1x256xf32>
      %458 = arith.addf %448, %457 : vector<1x256xf32>
      %c59 = arith.constant 59 : index
      %459 = memref.load %arg2[%c59] : memref<98xf32, #tpu.memory_space<smem>>
      %c1_208 = arith.constant 1 : index
      %c0_209 = arith.constant 0 : index
      %c19_210 = arith.constant 19 : index
      %460 = vector.load %arg8[%c1_208, %c0_209, %c19_210] : memref<2x1x358xf32, #tpu.memory_space<vmem>>, vector<1x1x256xf32>
      %461 = vector.shape_cast %460 : vector<1x1x256xf32> to vector<1x256xf32>
      %cst_211 = arith.constant 0.000000e+00 : f32
      %462 = vector.broadcast %cst_211 : f32 to vector<1x256xf32>
      %463 = arith.select %450, %461, %462 : vector<1x256xi1>, vector<1x256xf32>
      %464 = vector.broadcast %459 : f32 to vector<1x256xf32>
      %465 = arith.mulf %464, %463 : vector<1x256xf32>
      %466 = arith.addf %458, %465 : vector<1x256xf32>
      %c16_i32_212 = arith.constant 16 : i32
      %467 = vector.broadcast %c16_i32_212 : i32 to vector<1x256xi32>
      %468 = arith.cmpi sge, %29, %467 : vector<1x256xi32>
      %c17_213 = arith.constant 17 : index
      %469 = memref.load %arg2[%c17_213] : memref<98xf32, #tpu.memory_space<smem>>
      %c0_214 = arith.constant 0 : index
      %c0_215 = arith.constant 0 : index
      %c35_216 = arith.constant 35 : index
      %470 = vector.load %arg8[%c0_214, %c0_215, %c35_216] : memref<2x1x358xf32, #tpu.memory_space<vmem>>, vector<1x1x256xf32>
      %471 = vector.shape_cast %470 : vector<1x1x256xf32> to vector<1x256xf32>
      %cst_217 = arith.constant 0.000000e+00 : f32
      %472 = vector.broadcast %cst_217 : f32 to vector<1x256xf32>
      %473 = arith.select %468, %471, %472 : vector<1x256xi1>, vector<1x256xf32>
      %474 = vector.broadcast %469 : f32 to vector<1x256xf32>
      %475 = arith.mulf %474, %473 : vector<1x256xf32>
      %476 = arith.addf %466, %475 : vector<1x256xf32>
      %c66_218 = arith.constant 66 : index
      %477 = memref.load %arg2[%c66_218] : memref<98xf32, #tpu.memory_space<smem>>
      %c1_219 = arith.constant 1 : index
      %c0_220 = arith.constant 0 : index
      %c35_221 = arith.constant 35 : index
      %478 = vector.load %arg8[%c1_219, %c0_220, %c35_221] : memref<2x1x358xf32, #tpu.memory_space<vmem>>, vector<1x1x256xf32>
      %479 = vector.shape_cast %478 : vector<1x1x256xf32> to vector<1x256xf32>
      %cst_222 = arith.constant 0.000000e+00 : f32
      %480 = vector.broadcast %cst_222 : f32 to vector<1x256xf32>
      %481 = arith.select %468, %479, %480 : vector<1x256xi1>, vector<1x256xf32>
      %482 = vector.broadcast %477 : f32 to vector<1x256xf32>
      %483 = arith.mulf %482, %481 : vector<1x256xf32>
      %484 = arith.addf %476, %483 : vector<1x256xf32>
      %c24 = arith.constant 24 : index
      %485 = memref.load %arg2[%c24] : memref<98xf32, #tpu.memory_space<smem>>
      %c0_223 = arith.constant 0 : index
      %c0_224 = arith.constant 0 : index
      %c51_225 = arith.constant 51 : index
      %486 = vector.load %arg8[%c0_223, %c0_224, %c51_225] : memref<2x1x358xf32, #tpu.memory_space<vmem>>, vector<1x1x256xf32>
      %487 = vector.shape_cast %486 : vector<1x1x256xf32> to vector<1x256xf32>
      %488 = vector.broadcast %485 : f32 to vector<1x256xf32>
      %489 = arith.mulf %488, %487 : vector<1x256xf32>
      %490 = arith.addf %484, %489 : vector<1x256xf32>
      %c73 = arith.constant 73 : index
      %491 = memref.load %arg2[%c73] : memref<98xf32, #tpu.memory_space<smem>>
      %c1_226 = arith.constant 1 : index
      %c0_227 = arith.constant 0 : index
      %c51_228 = arith.constant 51 : index
      %492 = vector.load %arg8[%c1_226, %c0_227, %c51_228] : memref<2x1x358xf32, #tpu.memory_space<vmem>>, vector<1x1x256xf32>
      %493 = vector.shape_cast %492 : vector<1x1x256xf32> to vector<1x256xf32>
      %494 = vector.broadcast %491 : f32 to vector<1x256xf32>
      %495 = arith.mulf %494, %493 : vector<1x256xf32>
      %496 = arith.addf %490, %495 : vector<1x256xf32>
      %c240_i32_229 = arith.constant 240 : i32
      %497 = vector.broadcast %c240_i32_229 : i32 to vector<1x256xi32>
      %498 = arith.cmpi slt, %29, %497 : vector<1x256xi32>
      %c31 = arith.constant 31 : index
      %499 = memref.load %arg2[%c31] : memref<98xf32, #tpu.memory_space<smem>>
      %c0_230 = arith.constant 0 : index
      %c0_231 = arith.constant 0 : index
      %c67 = arith.constant 67 : index
      %500 = vector.load %arg8[%c0_230, %c0_231, %c67] : memref<2x1x358xf32, #tpu.memory_space<vmem>>, vector<1x1x256xf32>
      %501 = vector.shape_cast %500 : vector<1x1x256xf32> to vector<1x256xf32>
      %cst_232 = arith.constant 0.000000e+00 : f32
      %502 = vector.broadcast %cst_232 : f32 to vector<1x256xf32>
      %503 = arith.select %498, %501, %502 : vector<1x256xi1>, vector<1x256xf32>
      %504 = vector.broadcast %499 : f32 to vector<1x256xf32>
      %505 = arith.mulf %504, %503 : vector<1x256xf32>
      %506 = arith.addf %496, %505 : vector<1x256xf32>
      %c80_233 = arith.constant 80 : index
      %507 = memref.load %arg2[%c80_233] : memref<98xf32, #tpu.memory_space<smem>>
      %c1_234 = arith.constant 1 : index
      %c0_235 = arith.constant 0 : index
      %c67_236 = arith.constant 67 : index
      %508 = vector.load %arg8[%c1_234, %c0_235, %c67_236] : memref<2x1x358xf32, #tpu.memory_space<vmem>>, vector<1x1x256xf32>
      %509 = vector.shape_cast %508 : vector<1x1x256xf32> to vector<1x256xf32>
      %cst_237 = arith.constant 0.000000e+00 : f32
      %510 = vector.broadcast %cst_237 : f32 to vector<1x256xf32>
      %511 = arith.select %498, %509, %510 : vector<1x256xi1>, vector<1x256xf32>
      %512 = vector.broadcast %507 : f32 to vector<1x256xf32>
      %513 = arith.mulf %512, %511 : vector<1x256xf32>
      %514 = arith.addf %506, %513 : vector<1x256xf32>
      %c224_i32_238 = arith.constant 224 : i32
      %515 = vector.broadcast %c224_i32_238 : i32 to vector<1x256xi32>
      %516 = arith.cmpi slt, %29, %515 : vector<1x256xi32>
      %c38 = arith.constant 38 : index
      %517 = memref.load %arg2[%c38] : memref<98xf32, #tpu.memory_space<smem>>
      %c0_239 = arith.constant 0 : index
      %c0_240 = arith.constant 0 : index
      %c83 = arith.constant 83 : index
      %518 = vector.load %arg8[%c0_239, %c0_240, %c83] : memref<2x1x358xf32, #tpu.memory_space<vmem>>, vector<1x1x256xf32>
      %519 = vector.shape_cast %518 : vector<1x1x256xf32> to vector<1x256xf32>
      %cst_241 = arith.constant 0.000000e+00 : f32
      %520 = vector.broadcast %cst_241 : f32 to vector<1x256xf32>
      %521 = arith.select %516, %519, %520 : vector<1x256xi1>, vector<1x256xf32>
      %522 = vector.broadcast %517 : f32 to vector<1x256xf32>
      %523 = arith.mulf %522, %521 : vector<1x256xf32>
      %524 = arith.addf %514, %523 : vector<1x256xf32>
      %c87 = arith.constant 87 : index
      %525 = memref.load %arg2[%c87] : memref<98xf32, #tpu.memory_space<smem>>
      %c1_242 = arith.constant 1 : index
      %c0_243 = arith.constant 0 : index
      %c83_244 = arith.constant 83 : index
      %526 = vector.load %arg8[%c1_242, %c0_243, %c83_244] : memref<2x1x358xf32, #tpu.memory_space<vmem>>, vector<1x1x256xf32>
      %527 = vector.shape_cast %526 : vector<1x1x256xf32> to vector<1x256xf32>
      %cst_245 = arith.constant 0.000000e+00 : f32
      %528 = vector.broadcast %cst_245 : f32 to vector<1x256xf32>
      %529 = arith.select %516, %527, %528 : vector<1x256xi1>, vector<1x256xf32>
      %530 = vector.broadcast %525 : f32 to vector<1x256xf32>
      %531 = arith.mulf %530, %529 : vector<1x256xf32>
      %532 = arith.addf %524, %531 : vector<1x256xf32>
      %c208_i32_246 = arith.constant 208 : i32
      %533 = vector.broadcast %c208_i32_246 : i32 to vector<1x256xi32>
      %534 = arith.cmpi slt, %29, %533 : vector<1x256xi32>
      %c45 = arith.constant 45 : index
      %535 = memref.load %arg2[%c45] : memref<98xf32, #tpu.memory_space<smem>>
      %c0_247 = arith.constant 0 : index
      %c0_248 = arith.constant 0 : index
      %c99 = arith.constant 99 : index
      %536 = vector.load %arg8[%c0_247, %c0_248, %c99] : memref<2x1x358xf32, #tpu.memory_space<vmem>>, vector<1x1x256xf32>
      %537 = vector.shape_cast %536 : vector<1x1x256xf32> to vector<1x256xf32>
      %cst_249 = arith.constant 0.000000e+00 : f32
      %538 = vector.broadcast %cst_249 : f32 to vector<1x256xf32>
      %539 = arith.select %534, %537, %538 : vector<1x256xi1>, vector<1x256xf32>
      %540 = vector.broadcast %535 : f32 to vector<1x256xf32>
      %541 = arith.mulf %540, %539 : vector<1x256xf32>
      %542 = arith.addf %532, %541 : vector<1x256xf32>
      %c94 = arith.constant 94 : index
      %543 = memref.load %arg2[%c94] : memref<98xf32, #tpu.memory_space<smem>>
      %c1_250 = arith.constant 1 : index
      %c0_251 = arith.constant 0 : index
      %c99_252 = arith.constant 99 : index
      %544 = vector.load %arg8[%c1_250, %c0_251, %c99_252] : memref<2x1x358xf32, #tpu.memory_space<vmem>>, vector<1x1x256xf32>
      %545 = vector.shape_cast %544 : vector<1x1x256xf32> to vector<1x256xf32>
      %cst_253 = arith.constant 0.000000e+00 : f32
      %546 = vector.broadcast %cst_253 : f32 to vector<1x256xf32>
      %547 = arith.select %534, %545, %546 : vector<1x256xi1>, vector<1x256xf32>
      %548 = vector.broadcast %543 : f32 to vector<1x256xf32>
      %549 = arith.mulf %548, %547 : vector<1x256xf32>
      %550 = arith.addf %542, %549 : vector<1x256xf32>
      %c15_i32_254 = arith.constant 15 : i32
      %551 = vector.broadcast %c15_i32_254 : i32 to vector<1x256xi32>
      %552 = arith.cmpi slt, %31, %551 : vector<1x256xi32>
      %c48_i32_255 = arith.constant 48 : i32
      %553 = vector.broadcast %c48_i32_255 : i32 to vector<1x256xi32>
      %554 = arith.cmpi sge, %29, %553 : vector<1x256xi32>
      %555 = arith.andi %552, %554 : vector<1x256xi1>
      %c4 = arith.constant 4 : index
      %556 = memref.load %arg2[%c4] : memref<98xf32, #tpu.memory_space<smem>>
      %c0_256 = arith.constant 0 : index
      %c0_257 = arith.constant 0 : index
      %c4_258 = arith.constant 4 : index
      %557 = vector.load %arg8[%c0_256, %c0_257, %c4_258] : memref<2x1x358xf32, #tpu.memory_space<vmem>>, vector<1x1x256xf32>
      %558 = vector.shape_cast %557 : vector<1x1x256xf32> to vector<1x256xf32>
      %cst_259 = arith.constant 0.000000e+00 : f32
      %559 = vector.broadcast %cst_259 : f32 to vector<1x256xf32>
      %560 = arith.select %555, %558, %559 : vector<1x256xi1>, vector<1x256xf32>
      %561 = vector.broadcast %556 : f32 to vector<1x256xf32>
      %562 = arith.mulf %561, %560 : vector<1x256xf32>
      %563 = arith.addf %550, %562 : vector<1x256xf32>
      %c53 = arith.constant 53 : index
      %564 = memref.load %arg2[%c53] : memref<98xf32, #tpu.memory_space<smem>>
      %c1_260 = arith.constant 1 : index
      %c0_261 = arith.constant 0 : index
      %c4_262 = arith.constant 4 : index
      %565 = vector.load %arg8[%c1_260, %c0_261, %c4_262] : memref<2x1x358xf32, #tpu.memory_space<vmem>>, vector<1x1x256xf32>
      %566 = vector.shape_cast %565 : vector<1x1x256xf32> to vector<1x256xf32>
      %cst_263 = arith.constant 0.000000e+00 : f32
      %567 = vector.broadcast %cst_263 : f32 to vector<1x256xf32>
      %568 = arith.select %555, %566, %567 : vector<1x256xi1>, vector<1x256xf32>
      %569 = vector.broadcast %564 : f32 to vector<1x256xf32>
      %570 = arith.mulf %569, %568 : vector<1x256xf32>
      %571 = arith.addf %563, %570 : vector<1x256xf32>
      %c32_i32_264 = arith.constant 32 : i32
      %572 = vector.broadcast %c32_i32_264 : i32 to vector<1x256xi32>
      %573 = arith.cmpi sge, %29, %572 : vector<1x256xi32>
      %574 = arith.andi %552, %573 : vector<1x256xi1>
      %c11 = arith.constant 11 : index
      %575 = memref.load %arg2[%c11] : memref<98xf32, #tpu.memory_space<smem>>
      %c0_265 = arith.constant 0 : index
      %c0_266 = arith.constant 0 : index
      %c20 = arith.constant 20 : index
      %576 = vector.load %arg8[%c0_265, %c0_266, %c20] : memref<2x1x358xf32, #tpu.memory_space<vmem>>, vector<1x1x256xf32>
      %577 = vector.shape_cast %576 : vector<1x1x256xf32> to vector<1x256xf32>
      %cst_267 = arith.constant 0.000000e+00 : f32
      %578 = vector.broadcast %cst_267 : f32 to vector<1x256xf32>
      %579 = arith.select %574, %577, %578 : vector<1x256xi1>, vector<1x256xf32>
      %580 = vector.broadcast %575 : f32 to vector<1x256xf32>
      %581 = arith.mulf %580, %579 : vector<1x256xf32>
      %582 = arith.addf %571, %581 : vector<1x256xf32>
      %c60 = arith.constant 60 : index
      %583 = memref.load %arg2[%c60] : memref<98xf32, #tpu.memory_space<smem>>
      %c1_268 = arith.constant 1 : index
      %c0_269 = arith.constant 0 : index
      %c20_270 = arith.constant 20 : index
      %584 = vector.load %arg8[%c1_268, %c0_269, %c20_270] : memref<2x1x358xf32, #tpu.memory_space<vmem>>, vector<1x1x256xf32>
      %585 = vector.shape_cast %584 : vector<1x1x256xf32> to vector<1x256xf32>
      %cst_271 = arith.constant 0.000000e+00 : f32
      %586 = vector.broadcast %cst_271 : f32 to vector<1x256xf32>
      %587 = arith.select %574, %585, %586 : vector<1x256xi1>, vector<1x256xf32>
      %588 = vector.broadcast %583 : f32 to vector<1x256xf32>
      %589 = arith.mulf %588, %587 : vector<1x256xf32>
      %590 = arith.addf %582, %589 : vector<1x256xf32>
      %c16_i32_272 = arith.constant 16 : i32
      %591 = vector.broadcast %c16_i32_272 : i32 to vector<1x256xi32>
      %592 = arith.cmpi sge, %29, %591 : vector<1x256xi32>
      %593 = arith.andi %552, %592 : vector<1x256xi1>
      %c18_273 = arith.constant 18 : index
      %594 = memref.load %arg2[%c18_273] : memref<98xf32, #tpu.memory_space<smem>>
      %c0_274 = arith.constant 0 : index
      %c0_275 = arith.constant 0 : index
      %c36_276 = arith.constant 36 : index
      %595 = vector.load %arg8[%c0_274, %c0_275, %c36_276] : memref<2x1x358xf32, #tpu.memory_space<vmem>>, vector<1x1x256xf32>
      %596 = vector.shape_cast %595 : vector<1x1x256xf32> to vector<1x256xf32>
      %cst_277 = arith.constant 0.000000e+00 : f32
      %597 = vector.broadcast %cst_277 : f32 to vector<1x256xf32>
      %598 = arith.select %593, %596, %597 : vector<1x256xi1>, vector<1x256xf32>
      %599 = vector.broadcast %594 : f32 to vector<1x256xf32>
      %600 = arith.mulf %599, %598 : vector<1x256xf32>
      %601 = arith.addf %590, %600 : vector<1x256xf32>
      %c67_278 = arith.constant 67 : index
      %602 = memref.load %arg2[%c67_278] : memref<98xf32, #tpu.memory_space<smem>>
      %c1_279 = arith.constant 1 : index
      %c0_280 = arith.constant 0 : index
      %c36_281 = arith.constant 36 : index
      %603 = vector.load %arg8[%c1_279, %c0_280, %c36_281] : memref<2x1x358xf32, #tpu.memory_space<vmem>>, vector<1x1x256xf32>
      %604 = vector.shape_cast %603 : vector<1x1x256xf32> to vector<1x256xf32>
      %cst_282 = arith.constant 0.000000e+00 : f32
      %605 = vector.broadcast %cst_282 : f32 to vector<1x256xf32>
      %606 = arith.select %593, %604, %605 : vector<1x256xi1>, vector<1x256xf32>
      %607 = vector.broadcast %602 : f32 to vector<1x256xf32>
      %608 = arith.mulf %607, %606 : vector<1x256xf32>
      %609 = arith.addf %601, %608 : vector<1x256xf32>
      %c25 = arith.constant 25 : index
      %610 = memref.load %arg2[%c25] : memref<98xf32, #tpu.memory_space<smem>>
      %c0_283 = arith.constant 0 : index
      %c0_284 = arith.constant 0 : index
      %c52_285 = arith.constant 52 : index
      %611 = vector.load %arg8[%c0_283, %c0_284, %c52_285] : memref<2x1x358xf32, #tpu.memory_space<vmem>>, vector<1x1x256xf32>
      %612 = vector.shape_cast %611 : vector<1x1x256xf32> to vector<1x256xf32>
      %cst_286 = arith.constant 0.000000e+00 : f32
      %613 = vector.broadcast %cst_286 : f32 to vector<1x256xf32>
      %614 = arith.select %552, %612, %613 : vector<1x256xi1>, vector<1x256xf32>
      %615 = vector.broadcast %610 : f32 to vector<1x256xf32>
      %616 = arith.mulf %615, %614 : vector<1x256xf32>
      %617 = arith.addf %609, %616 : vector<1x256xf32>
      %c74 = arith.constant 74 : index
      %618 = memref.load %arg2[%c74] : memref<98xf32, #tpu.memory_space<smem>>
      %c1_287 = arith.constant 1 : index
      %c0_288 = arith.constant 0 : index
      %c52_289 = arith.constant 52 : index
      %619 = vector.load %arg8[%c1_287, %c0_288, %c52_289] : memref<2x1x358xf32, #tpu.memory_space<vmem>>, vector<1x1x256xf32>
      %620 = vector.shape_cast %619 : vector<1x1x256xf32> to vector<1x256xf32>
      %cst_290 = arith.constant 0.000000e+00 : f32
      %621 = vector.broadcast %cst_290 : f32 to vector<1x256xf32>
      %622 = arith.select %552, %620, %621 : vector<1x256xi1>, vector<1x256xf32>
      %623 = vector.broadcast %618 : f32 to vector<1x256xf32>
      %624 = arith.mulf %623, %622 : vector<1x256xf32>
      %625 = arith.addf %617, %624 : vector<1x256xf32>
      %c240_i32_291 = arith.constant 240 : i32
      %626 = vector.broadcast %c240_i32_291 : i32 to vector<1x256xi32>
      %627 = arith.cmpi slt, %29, %626 : vector<1x256xi32>
      %628 = arith.andi %552, %627 : vector<1x256xi1>
      %c32_292 = arith.constant 32 : index
      %629 = memref.load %arg2[%c32_292] : memref<98xf32, #tpu.memory_space<smem>>
      %c0_293 = arith.constant 0 : index
      %c0_294 = arith.constant 0 : index
      %c68 = arith.constant 68 : index
      %630 = vector.load %arg8[%c0_293, %c0_294, %c68] : memref<2x1x358xf32, #tpu.memory_space<vmem>>, vector<1x1x256xf32>
      %631 = vector.shape_cast %630 : vector<1x1x256xf32> to vector<1x256xf32>
      %cst_295 = arith.constant 0.000000e+00 : f32
      %632 = vector.broadcast %cst_295 : f32 to vector<1x256xf32>
      %633 = arith.select %628, %631, %632 : vector<1x256xi1>, vector<1x256xf32>
      %634 = vector.broadcast %629 : f32 to vector<1x256xf32>
      %635 = arith.mulf %634, %633 : vector<1x256xf32>
      %636 = arith.addf %625, %635 : vector<1x256xf32>
      %c81_296 = arith.constant 81 : index
      %637 = memref.load %arg2[%c81_296] : memref<98xf32, #tpu.memory_space<smem>>
      %c1_297 = arith.constant 1 : index
      %c0_298 = arith.constant 0 : index
      %c68_299 = arith.constant 68 : index
      %638 = vector.load %arg8[%c1_297, %c0_298, %c68_299] : memref<2x1x358xf32, #tpu.memory_space<vmem>>, vector<1x1x256xf32>
      %639 = vector.shape_cast %638 : vector<1x1x256xf32> to vector<1x256xf32>
      %cst_300 = arith.constant 0.000000e+00 : f32
      %640 = vector.broadcast %cst_300 : f32 to vector<1x256xf32>
      %641 = arith.select %628, %639, %640 : vector<1x256xi1>, vector<1x256xf32>
      %642 = vector.broadcast %637 : f32 to vector<1x256xf32>
      %643 = arith.mulf %642, %641 : vector<1x256xf32>
      %644 = arith.addf %636, %643 : vector<1x256xf32>
      %c224_i32_301 = arith.constant 224 : i32
      %645 = vector.broadcast %c224_i32_301 : i32 to vector<1x256xi32>
      %646 = arith.cmpi slt, %29, %645 : vector<1x256xi32>
      %647 = arith.andi %552, %646 : vector<1x256xi1>
      %c39 = arith.constant 39 : index
      %648 = memref.load %arg2[%c39] : memref<98xf32, #tpu.memory_space<smem>>
      %c0_302 = arith.constant 0 : index
      %c0_303 = arith.constant 0 : index
      %c84_304 = arith.constant 84 : index
      %649 = vector.load %arg8[%c0_302, %c0_303, %c84_304] : memref<2x1x358xf32, #tpu.memory_space<vmem>>, vector<1x1x256xf32>
      %650 = vector.shape_cast %649 : vector<1x1x256xf32> to vector<1x256xf32>
      %cst_305 = arith.constant 0.000000e+00 : f32
      %651 = vector.broadcast %cst_305 : f32 to vector<1x256xf32>
      %652 = arith.select %647, %650, %651 : vector<1x256xi1>, vector<1x256xf32>
      %653 = vector.broadcast %648 : f32 to vector<1x256xf32>
      %654 = arith.mulf %653, %652 : vector<1x256xf32>
      %655 = arith.addf %644, %654 : vector<1x256xf32>
      %c88 = arith.constant 88 : index
      %656 = memref.load %arg2[%c88] : memref<98xf32, #tpu.memory_space<smem>>
      %c1_306 = arith.constant 1 : index
      %c0_307 = arith.constant 0 : index
      %c84_308 = arith.constant 84 : index
      %657 = vector.load %arg8[%c1_306, %c0_307, %c84_308] : memref<2x1x358xf32, #tpu.memory_space<vmem>>, vector<1x1x256xf32>
      %658 = vector.shape_cast %657 : vector<1x1x256xf32> to vector<1x256xf32>
      %cst_309 = arith.constant 0.000000e+00 : f32
      %659 = vector.broadcast %cst_309 : f32 to vector<1x256xf32>
      %660 = arith.select %647, %658, %659 : vector<1x256xi1>, vector<1x256xf32>
      %661 = vector.broadcast %656 : f32 to vector<1x256xf32>
      %662 = arith.mulf %661, %660 : vector<1x256xf32>
      %663 = arith.addf %655, %662 : vector<1x256xf32>
      %c208_i32_310 = arith.constant 208 : i32
      %664 = vector.broadcast %c208_i32_310 : i32 to vector<1x256xi32>
      %665 = arith.cmpi slt, %29, %664 : vector<1x256xi32>
      %666 = arith.andi %552, %665 : vector<1x256xi1>
      %c46 = arith.constant 46 : index
      %667 = memref.load %arg2[%c46] : memref<98xf32, #tpu.memory_space<smem>>
      %c0_311 = arith.constant 0 : index
      %c0_312 = arith.constant 0 : index
      %c100 = arith.constant 100 : index
      %668 = vector.load %arg8[%c0_311, %c0_312, %c100] : memref<2x1x358xf32, #tpu.memory_space<vmem>>, vector<1x1x256xf32>
      %669 = vector.shape_cast %668 : vector<1x1x256xf32> to vector<1x256xf32>
      %cst_313 = arith.constant 0.000000e+00 : f32
      %670 = vector.broadcast %cst_313 : f32 to vector<1x256xf32>
      %671 = arith.select %666, %669, %670 : vector<1x256xi1>, vector<1x256xf32>
      %672 = vector.broadcast %667 : f32 to vector<1x256xf32>
      %673 = arith.mulf %672, %671 : vector<1x256xf32>
      %674 = arith.addf %663, %673 : vector<1x256xf32>
      %c95 = arith.constant 95 : index
      %675 = memref.load %arg2[%c95] : memref<98xf32, #tpu.memory_space<smem>>
      %c1_314 = arith.constant 1 : index
      %c0_315 = arith.constant 0 : index
      %c100_316 = arith.constant 100 : index
      %676 = vector.load %arg8[%c1_314, %c0_315, %c100_316] : memref<2x1x358xf32, #tpu.memory_space<vmem>>, vector<1x1x256xf32>
      %677 = vector.shape_cast %676 : vector<1x1x256xf32> to vector<1x256xf32>
      %cst_317 = arith.constant 0.000000e+00 : f32
      %678 = vector.broadcast %cst_317 : f32 to vector<1x256xf32>
      %679 = arith.select %666, %677, %678 : vector<1x256xi1>, vector<1x256xf32>
      %680 = vector.broadcast %675 : f32 to vector<1x256xf32>
      %681 = arith.mulf %680, %679 : vector<1x256xf32>
      %682 = arith.addf %674, %681 : vector<1x256xf32>
      %c14_i32 = arith.constant 14 : i32
      %683 = vector.broadcast %c14_i32 : i32 to vector<1x256xi32>
      %684 = arith.cmpi slt, %31, %683 : vector<1x256xi32>
      %c48_i32_318 = arith.constant 48 : i32
      %685 = vector.broadcast %c48_i32_318 : i32 to vector<1x256xi32>
      %686 = arith.cmpi sge, %29, %685 : vector<1x256xi32>
      %687 = arith.andi %684, %686 : vector<1x256xi1>
      %c5 = arith.constant 5 : index
      %688 = memref.load %arg2[%c5] : memref<98xf32, #tpu.memory_space<smem>>
      %c0_319 = arith.constant 0 : index
      %c0_320 = arith.constant 0 : index
      %c5_321 = arith.constant 5 : index
      %689 = vector.load %arg8[%c0_319, %c0_320, %c5_321] : memref<2x1x358xf32, #tpu.memory_space<vmem>>, vector<1x1x256xf32>
      %690 = vector.shape_cast %689 : vector<1x1x256xf32> to vector<1x256xf32>
      %cst_322 = arith.constant 0.000000e+00 : f32
      %691 = vector.broadcast %cst_322 : f32 to vector<1x256xf32>
      %692 = arith.select %687, %690, %691 : vector<1x256xi1>, vector<1x256xf32>
      %693 = vector.broadcast %688 : f32 to vector<1x256xf32>
      %694 = arith.mulf %693, %692 : vector<1x256xf32>
      %695 = arith.addf %682, %694 : vector<1x256xf32>
      %c54 = arith.constant 54 : index
      %696 = memref.load %arg2[%c54] : memref<98xf32, #tpu.memory_space<smem>>
      %c1_323 = arith.constant 1 : index
      %c0_324 = arith.constant 0 : index
      %c5_325 = arith.constant 5 : index
      %697 = vector.load %arg8[%c1_323, %c0_324, %c5_325] : memref<2x1x358xf32, #tpu.memory_space<vmem>>, vector<1x1x256xf32>
      %698 = vector.shape_cast %697 : vector<1x1x256xf32> to vector<1x256xf32>
      %cst_326 = arith.constant 0.000000e+00 : f32
      %699 = vector.broadcast %cst_326 : f32 to vector<1x256xf32>
      %700 = arith.select %687, %698, %699 : vector<1x256xi1>, vector<1x256xf32>
      %701 = vector.broadcast %696 : f32 to vector<1x256xf32>
      %702 = arith.mulf %701, %700 : vector<1x256xf32>
      %703 = arith.addf %695, %702 : vector<1x256xf32>
      %c32_i32_327 = arith.constant 32 : i32
      %704 = vector.broadcast %c32_i32_327 : i32 to vector<1x256xi32>
      %705 = arith.cmpi sge, %29, %704 : vector<1x256xi32>
      %706 = arith.andi %684, %705 : vector<1x256xi1>
      %c12 = arith.constant 12 : index
      %707 = memref.load %arg2[%c12] : memref<98xf32, #tpu.memory_space<smem>>
      %c0_328 = arith.constant 0 : index
      %c0_329 = arith.constant 0 : index
      %c21_330 = arith.constant 21 : index
      %708 = vector.load %arg8[%c0_328, %c0_329, %c21_330] : memref<2x1x358xf32, #tpu.memory_space<vmem>>, vector<1x1x256xf32>
      %709 = vector.shape_cast %708 : vector<1x1x256xf32> to vector<1x256xf32>
      %cst_331 = arith.constant 0.000000e+00 : f32
      %710 = vector.broadcast %cst_331 : f32 to vector<1x256xf32>
      %711 = arith.select %706, %709, %710 : vector<1x256xi1>, vector<1x256xf32>
      %712 = vector.broadcast %707 : f32 to vector<1x256xf32>
      %713 = arith.mulf %712, %711 : vector<1x256xf32>
      %714 = arith.addf %703, %713 : vector<1x256xf32>
      %c61 = arith.constant 61 : index
      %715 = memref.load %arg2[%c61] : memref<98xf32, #tpu.memory_space<smem>>
      %c1_332 = arith.constant 1 : index
      %c0_333 = arith.constant 0 : index
      %c21_334 = arith.constant 21 : index
      %716 = vector.load %arg8[%c1_332, %c0_333, %c21_334] : memref<2x1x358xf32, #tpu.memory_space<vmem>>, vector<1x1x256xf32>
      %717 = vector.shape_cast %716 : vector<1x1x256xf32> to vector<1x256xf32>
      %cst_335 = arith.constant 0.000000e+00 : f32
      %718 = vector.broadcast %cst_335 : f32 to vector<1x256xf32>
      %719 = arith.select %706, %717, %718 : vector<1x256xi1>, vector<1x256xf32>
      %720 = vector.broadcast %715 : f32 to vector<1x256xf32>
      %721 = arith.mulf %720, %719 : vector<1x256xf32>
      %722 = arith.addf %714, %721 : vector<1x256xf32>
      %c16_i32_336 = arith.constant 16 : i32
      %723 = vector.broadcast %c16_i32_336 : i32 to vector<1x256xi32>
      %724 = arith.cmpi sge, %29, %723 : vector<1x256xi32>
      %725 = arith.andi %684, %724 : vector<1x256xi1>
      %c19_337 = arith.constant 19 : index
      %726 = memref.load %arg2[%c19_337] : memref<98xf32, #tpu.memory_space<smem>>
      %c0_338 = arith.constant 0 : index
      %c0_339 = arith.constant 0 : index
      %c37_340 = arith.constant 37 : index
      %727 = vector.load %arg8[%c0_338, %c0_339, %c37_340] : memref<2x1x358xf32, #tpu.memory_space<vmem>>, vector<1x1x256xf32>
      %728 = vector.shape_cast %727 : vector<1x1x256xf32> to vector<1x256xf32>
      %cst_341 = arith.constant 0.000000e+00 : f32
      %729 = vector.broadcast %cst_341 : f32 to vector<1x256xf32>
      %730 = arith.select %725, %728, %729 : vector<1x256xi1>, vector<1x256xf32>
      %731 = vector.broadcast %726 : f32 to vector<1x256xf32>
      %732 = arith.mulf %731, %730 : vector<1x256xf32>
      %733 = arith.addf %722, %732 : vector<1x256xf32>
      %c68_342 = arith.constant 68 : index
      %734 = memref.load %arg2[%c68_342] : memref<98xf32, #tpu.memory_space<smem>>
      %c1_343 = arith.constant 1 : index
      %c0_344 = arith.constant 0 : index
      %c37_345 = arith.constant 37 : index
      %735 = vector.load %arg8[%c1_343, %c0_344, %c37_345] : memref<2x1x358xf32, #tpu.memory_space<vmem>>, vector<1x1x256xf32>
      %736 = vector.shape_cast %735 : vector<1x1x256xf32> to vector<1x256xf32>
      %cst_346 = arith.constant 0.000000e+00 : f32
      %737 = vector.broadcast %cst_346 : f32 to vector<1x256xf32>
      %738 = arith.select %725, %736, %737 : vector<1x256xi1>, vector<1x256xf32>
      %739 = vector.broadcast %734 : f32 to vector<1x256xf32>
      %740 = arith.mulf %739, %738 : vector<1x256xf32>
      %741 = arith.addf %733, %740 : vector<1x256xf32>
      %c26 = arith.constant 26 : index
      %742 = memref.load %arg2[%c26] : memref<98xf32, #tpu.memory_space<smem>>
      %c0_347 = arith.constant 0 : index
      %c0_348 = arith.constant 0 : index
      %c53_349 = arith.constant 53 : index
      %743 = vector.load %arg8[%c0_347, %c0_348, %c53_349] : memref<2x1x358xf32, #tpu.memory_space<vmem>>, vector<1x1x256xf32>
      %744 = vector.shape_cast %743 : vector<1x1x256xf32> to vector<1x256xf32>
      %cst_350 = arith.constant 0.000000e+00 : f32
      %745 = vector.broadcast %cst_350 : f32 to vector<1x256xf32>
      %746 = arith.select %684, %744, %745 : vector<1x256xi1>, vector<1x256xf32>
      %747 = vector.broadcast %742 : f32 to vector<1x256xf32>
      %748 = arith.mulf %747, %746 : vector<1x256xf32>
      %749 = arith.addf %741, %748 : vector<1x256xf32>
      %c75 = arith.constant 75 : index
      %750 = memref.load %arg2[%c75] : memref<98xf32, #tpu.memory_space<smem>>
      %c1_351 = arith.constant 1 : index
      %c0_352 = arith.constant 0 : index
      %c53_353 = arith.constant 53 : index
      %751 = vector.load %arg8[%c1_351, %c0_352, %c53_353] : memref<2x1x358xf32, #tpu.memory_space<vmem>>, vector<1x1x256xf32>
      %752 = vector.shape_cast %751 : vector<1x1x256xf32> to vector<1x256xf32>
      %cst_354 = arith.constant 0.000000e+00 : f32
      %753 = vector.broadcast %cst_354 : f32 to vector<1x256xf32>
      %754 = arith.select %684, %752, %753 : vector<1x256xi1>, vector<1x256xf32>
      %755 = vector.broadcast %750 : f32 to vector<1x256xf32>
      %756 = arith.mulf %755, %754 : vector<1x256xf32>
      %757 = arith.addf %749, %756 : vector<1x256xf32>
      %c240_i32_355 = arith.constant 240 : i32
      %758 = vector.broadcast %c240_i32_355 : i32 to vector<1x256xi32>
      %759 = arith.cmpi slt, %29, %758 : vector<1x256xi32>
      %760 = arith.andi %684, %759 : vector<1x256xi1>
      %c33_356 = arith.constant 33 : index
      %761 = memref.load %arg2[%c33_356] : memref<98xf32, #tpu.memory_space<smem>>
      %c0_357 = arith.constant 0 : index
      %c0_358 = arith.constant 0 : index
      %c69 = arith.constant 69 : index
      %762 = vector.load %arg8[%c0_357, %c0_358, %c69] : memref<2x1x358xf32, #tpu.memory_space<vmem>>, vector<1x1x256xf32>
      %763 = vector.shape_cast %762 : vector<1x1x256xf32> to vector<1x256xf32>
      %cst_359 = arith.constant 0.000000e+00 : f32
      %764 = vector.broadcast %cst_359 : f32 to vector<1x256xf32>
      %765 = arith.select %760, %763, %764 : vector<1x256xi1>, vector<1x256xf32>
      %766 = vector.broadcast %761 : f32 to vector<1x256xf32>
      %767 = arith.mulf %766, %765 : vector<1x256xf32>
      %768 = arith.addf %757, %767 : vector<1x256xf32>
      %c82_360 = arith.constant 82 : index
      %769 = memref.load %arg2[%c82_360] : memref<98xf32, #tpu.memory_space<smem>>
      %c1_361 = arith.constant 1 : index
      %c0_362 = arith.constant 0 : index
      %c69_363 = arith.constant 69 : index
      %770 = vector.load %arg8[%c1_361, %c0_362, %c69_363] : memref<2x1x358xf32, #tpu.memory_space<vmem>>, vector<1x1x256xf32>
      %771 = vector.shape_cast %770 : vector<1x1x256xf32> to vector<1x256xf32>
      %cst_364 = arith.constant 0.000000e+00 : f32
      %772 = vector.broadcast %cst_364 : f32 to vector<1x256xf32>
      %773 = arith.select %760, %771, %772 : vector<1x256xi1>, vector<1x256xf32>
      %774 = vector.broadcast %769 : f32 to vector<1x256xf32>
      %775 = arith.mulf %774, %773 : vector<1x256xf32>
      %776 = arith.addf %768, %775 : vector<1x256xf32>
      %c224_i32_365 = arith.constant 224 : i32
      %777 = vector.broadcast %c224_i32_365 : i32 to vector<1x256xi32>
      %778 = arith.cmpi slt, %29, %777 : vector<1x256xi32>
      %779 = arith.andi %684, %778 : vector<1x256xi1>
      %c40 = arith.constant 40 : index
      %780 = memref.load %arg2[%c40] : memref<98xf32, #tpu.memory_space<smem>>
      %c0_366 = arith.constant 0 : index
      %c0_367 = arith.constant 0 : index
      %c85_368 = arith.constant 85 : index
      %781 = vector.load %arg8[%c0_366, %c0_367, %c85_368] : memref<2x1x358xf32, #tpu.memory_space<vmem>>, vector<1x1x256xf32>
      %782 = vector.shape_cast %781 : vector<1x1x256xf32> to vector<1x256xf32>
      %cst_369 = arith.constant 0.000000e+00 : f32
      %783 = vector.broadcast %cst_369 : f32 to vector<1x256xf32>
      %784 = arith.select %779, %782, %783 : vector<1x256xi1>, vector<1x256xf32>
      %785 = vector.broadcast %780 : f32 to vector<1x256xf32>
      %786 = arith.mulf %785, %784 : vector<1x256xf32>
      %787 = arith.addf %776, %786 : vector<1x256xf32>
      %c89 = arith.constant 89 : index
      %788 = memref.load %arg2[%c89] : memref<98xf32, #tpu.memory_space<smem>>
      %c1_370 = arith.constant 1 : index
      %c0_371 = arith.constant 0 : index
      %c85_372 = arith.constant 85 : index
      %789 = vector.load %arg8[%c1_370, %c0_371, %c85_372] : memref<2x1x358xf32, #tpu.memory_space<vmem>>, vector<1x1x256xf32>
      %790 = vector.shape_cast %789 : vector<1x1x256xf32> to vector<1x256xf32>
      %cst_373 = arith.constant 0.000000e+00 : f32
      %791 = vector.broadcast %cst_373 : f32 to vector<1x256xf32>
      %792 = arith.select %779, %790, %791 : vector<1x256xi1>, vector<1x256xf32>
      %793 = vector.broadcast %788 : f32 to vector<1x256xf32>
      %794 = arith.mulf %793, %792 : vector<1x256xf32>
      %795 = arith.addf %787, %794 : vector<1x256xf32>
      %c208_i32_374 = arith.constant 208 : i32
      %796 = vector.broadcast %c208_i32_374 : i32 to vector<1x256xi32>
      %797 = arith.cmpi slt, %29, %796 : vector<1x256xi32>
      %798 = arith.andi %684, %797 : vector<1x256xi1>
      %c47 = arith.constant 47 : index
      %799 = memref.load %arg2[%c47] : memref<98xf32, #tpu.memory_space<smem>>
      %c0_375 = arith.constant 0 : index
      %c0_376 = arith.constant 0 : index
      %c101 = arith.constant 101 : index
      %800 = vector.load %arg8[%c0_375, %c0_376, %c101] : memref<2x1x358xf32, #tpu.memory_space<vmem>>, vector<1x1x256xf32>
      %801 = vector.shape_cast %800 : vector<1x1x256xf32> to vector<1x256xf32>
      %cst_377 = arith.constant 0.000000e+00 : f32
      %802 = vector.broadcast %cst_377 : f32 to vector<1x256xf32>
      %803 = arith.select %798, %801, %802 : vector<1x256xi1>, vector<1x256xf32>
      %804 = vector.broadcast %799 : f32 to vector<1x256xf32>
      %805 = arith.mulf %804, %803 : vector<1x256xf32>
      %806 = arith.addf %795, %805 : vector<1x256xf32>
      %c96_378 = arith.constant 96 : index
      %807 = memref.load %arg2[%c96_378] : memref<98xf32, #tpu.memory_space<smem>>
      %c1_379 = arith.constant 1 : index
      %c0_380 = arith.constant 0 : index
      %c101_381 = arith.constant 101 : index
      %808 = vector.load %arg8[%c1_379, %c0_380, %c101_381] : memref<2x1x358xf32, #tpu.memory_space<vmem>>, vector<1x1x256xf32>
      %809 = vector.shape_cast %808 : vector<1x1x256xf32> to vector<1x256xf32>
      %cst_382 = arith.constant 0.000000e+00 : f32
      %810 = vector.broadcast %cst_382 : f32 to vector<1x256xf32>
      %811 = arith.select %798, %809, %810 : vector<1x256xi1>, vector<1x256xf32>
      %812 = vector.broadcast %807 : f32 to vector<1x256xf32>
      %813 = arith.mulf %812, %811 : vector<1x256xf32>
      %814 = arith.addf %806, %813 : vector<1x256xf32>
      %c13_i32 = arith.constant 13 : i32
      %815 = vector.broadcast %c13_i32 : i32 to vector<1x256xi32>
      %816 = arith.cmpi slt, %31, %815 : vector<1x256xi32>
      %c48_i32_383 = arith.constant 48 : i32
      %817 = vector.broadcast %c48_i32_383 : i32 to vector<1x256xi32>
      %818 = arith.cmpi sge, %29, %817 : vector<1x256xi32>
      %819 = arith.andi %816, %818 : vector<1x256xi1>
      %c6 = arith.constant 6 : index
      %820 = memref.load %arg2[%c6] : memref<98xf32, #tpu.memory_space<smem>>
      %c0_384 = arith.constant 0 : index
      %c0_385 = arith.constant 0 : index
      %c6_386 = arith.constant 6 : index
      %821 = vector.load %arg8[%c0_384, %c0_385, %c6_386] : memref<2x1x358xf32, #tpu.memory_space<vmem>>, vector<1x1x256xf32>
      %822 = vector.shape_cast %821 : vector<1x1x256xf32> to vector<1x256xf32>
      %cst_387 = arith.constant 0.000000e+00 : f32
      %823 = vector.broadcast %cst_387 : f32 to vector<1x256xf32>
      %824 = arith.select %819, %822, %823 : vector<1x256xi1>, vector<1x256xf32>
      %825 = vector.broadcast %820 : f32 to vector<1x256xf32>
      %826 = arith.mulf %825, %824 : vector<1x256xf32>
      %827 = arith.addf %814, %826 : vector<1x256xf32>
      %c55 = arith.constant 55 : index
      %828 = memref.load %arg2[%c55] : memref<98xf32, #tpu.memory_space<smem>>
      %c1_388 = arith.constant 1 : index
      %c0_389 = arith.constant 0 : index
      %c6_390 = arith.constant 6 : index
      %829 = vector.load %arg8[%c1_388, %c0_389, %c6_390] : memref<2x1x358xf32, #tpu.memory_space<vmem>>, vector<1x1x256xf32>
      %830 = vector.shape_cast %829 : vector<1x1x256xf32> to vector<1x256xf32>
      %cst_391 = arith.constant 0.000000e+00 : f32
      %831 = vector.broadcast %cst_391 : f32 to vector<1x256xf32>
      %832 = arith.select %819, %830, %831 : vector<1x256xi1>, vector<1x256xf32>
      %833 = vector.broadcast %828 : f32 to vector<1x256xf32>
      %834 = arith.mulf %833, %832 : vector<1x256xf32>
      %835 = arith.addf %827, %834 : vector<1x256xf32>
      %c32_i32_392 = arith.constant 32 : i32
      %836 = vector.broadcast %c32_i32_392 : i32 to vector<1x256xi32>
      %837 = arith.cmpi sge, %29, %836 : vector<1x256xi32>
      %838 = arith.andi %816, %837 : vector<1x256xi1>
      %c13 = arith.constant 13 : index
      %839 = memref.load %arg2[%c13] : memref<98xf32, #tpu.memory_space<smem>>
      %c0_393 = arith.constant 0 : index
      %c0_394 = arith.constant 0 : index
      %c22_395 = arith.constant 22 : index
      %840 = vector.load %arg8[%c0_393, %c0_394, %c22_395] : memref<2x1x358xf32, #tpu.memory_space<vmem>>, vector<1x1x256xf32>
      %841 = vector.shape_cast %840 : vector<1x1x256xf32> to vector<1x256xf32>
      %cst_396 = arith.constant 0.000000e+00 : f32
      %842 = vector.broadcast %cst_396 : f32 to vector<1x256xf32>
      %843 = arith.select %838, %841, %842 : vector<1x256xi1>, vector<1x256xf32>
      %844 = vector.broadcast %839 : f32 to vector<1x256xf32>
      %845 = arith.mulf %844, %843 : vector<1x256xf32>
      %846 = arith.addf %835, %845 : vector<1x256xf32>
      %c62 = arith.constant 62 : index
      %847 = memref.load %arg2[%c62] : memref<98xf32, #tpu.memory_space<smem>>
      %c1_397 = arith.constant 1 : index
      %c0_398 = arith.constant 0 : index
      %c22_399 = arith.constant 22 : index
      %848 = vector.load %arg8[%c1_397, %c0_398, %c22_399] : memref<2x1x358xf32, #tpu.memory_space<vmem>>, vector<1x1x256xf32>
      %849 = vector.shape_cast %848 : vector<1x1x256xf32> to vector<1x256xf32>
      %cst_400 = arith.constant 0.000000e+00 : f32
      %850 = vector.broadcast %cst_400 : f32 to vector<1x256xf32>
      %851 = arith.select %838, %849, %850 : vector<1x256xi1>, vector<1x256xf32>
      %852 = vector.broadcast %847 : f32 to vector<1x256xf32>
      %853 = arith.mulf %852, %851 : vector<1x256xf32>
      %854 = arith.addf %846, %853 : vector<1x256xf32>
      %c16_i32_401 = arith.constant 16 : i32
      %855 = vector.broadcast %c16_i32_401 : i32 to vector<1x256xi32>
      %856 = arith.cmpi sge, %29, %855 : vector<1x256xi32>
      %857 = arith.andi %816, %856 : vector<1x256xi1>
      %c20_402 = arith.constant 20 : index
      %858 = memref.load %arg2[%c20_402] : memref<98xf32, #tpu.memory_space<smem>>
      %c0_403 = arith.constant 0 : index
      %c0_404 = arith.constant 0 : index
      %c38_405 = arith.constant 38 : index
      %859 = vector.load %arg8[%c0_403, %c0_404, %c38_405] : memref<2x1x358xf32, #tpu.memory_space<vmem>>, vector<1x1x256xf32>
      %860 = vector.shape_cast %859 : vector<1x1x256xf32> to vector<1x256xf32>
      %cst_406 = arith.constant 0.000000e+00 : f32
      %861 = vector.broadcast %cst_406 : f32 to vector<1x256xf32>
      %862 = arith.select %857, %860, %861 : vector<1x256xi1>, vector<1x256xf32>
      %863 = vector.broadcast %858 : f32 to vector<1x256xf32>
      %864 = arith.mulf %863, %862 : vector<1x256xf32>
      %865 = arith.addf %854, %864 : vector<1x256xf32>
      %c69_407 = arith.constant 69 : index
      %866 = memref.load %arg2[%c69_407] : memref<98xf32, #tpu.memory_space<smem>>
      %c1_408 = arith.constant 1 : index
      %c0_409 = arith.constant 0 : index
      %c38_410 = arith.constant 38 : index
      %867 = vector.load %arg8[%c1_408, %c0_409, %c38_410] : memref<2x1x358xf32, #tpu.memory_space<vmem>>, vector<1x1x256xf32>
      %868 = vector.shape_cast %867 : vector<1x1x256xf32> to vector<1x256xf32>
      %cst_411 = arith.constant 0.000000e+00 : f32
      %869 = vector.broadcast %cst_411 : f32 to vector<1x256xf32>
      %870 = arith.select %857, %868, %869 : vector<1x256xi1>, vector<1x256xf32>
      %871 = vector.broadcast %866 : f32 to vector<1x256xf32>
      %872 = arith.mulf %871, %870 : vector<1x256xf32>
      %873 = arith.addf %865, %872 : vector<1x256xf32>
      %c27 = arith.constant 27 : index
      %874 = memref.load %arg2[%c27] : memref<98xf32, #tpu.memory_space<smem>>
      %c0_412 = arith.constant 0 : index
      %c0_413 = arith.constant 0 : index
      %c54_414 = arith.constant 54 : index
      %875 = vector.load %arg8[%c0_412, %c0_413, %c54_414] : memref<2x1x358xf32, #tpu.memory_space<vmem>>, vector<1x1x256xf32>
      %876 = vector.shape_cast %875 : vector<1x1x256xf32> to vector<1x256xf32>
      %cst_415 = arith.constant 0.000000e+00 : f32
      %877 = vector.broadcast %cst_415 : f32 to vector<1x256xf32>
      %878 = arith.select %816, %876, %877 : vector<1x256xi1>, vector<1x256xf32>
      %879 = vector.broadcast %874 : f32 to vector<1x256xf32>
      %880 = arith.mulf %879, %878 : vector<1x256xf32>
      %881 = arith.addf %873, %880 : vector<1x256xf32>
      %c76 = arith.constant 76 : index
      %882 = memref.load %arg2[%c76] : memref<98xf32, #tpu.memory_space<smem>>
      %c1_416 = arith.constant 1 : index
      %c0_417 = arith.constant 0 : index
      %c54_418 = arith.constant 54 : index
      %883 = vector.load %arg8[%c1_416, %c0_417, %c54_418] : memref<2x1x358xf32, #tpu.memory_space<vmem>>, vector<1x1x256xf32>
      %884 = vector.shape_cast %883 : vector<1x1x256xf32> to vector<1x256xf32>
      %cst_419 = arith.constant 0.000000e+00 : f32
      %885 = vector.broadcast %cst_419 : f32 to vector<1x256xf32>
      %886 = arith.select %816, %884, %885 : vector<1x256xi1>, vector<1x256xf32>
      %887 = vector.broadcast %882 : f32 to vector<1x256xf32>
      %888 = arith.mulf %887, %886 : vector<1x256xf32>
      %889 = arith.addf %881, %888 : vector<1x256xf32>
      %c240_i32_420 = arith.constant 240 : i32
      %890 = vector.broadcast %c240_i32_420 : i32 to vector<1x256xi32>
      %891 = arith.cmpi slt, %29, %890 : vector<1x256xi32>
      %892 = arith.andi %816, %891 : vector<1x256xi1>
      %c34_421 = arith.constant 34 : index
      %893 = memref.load %arg2[%c34_421] : memref<98xf32, #tpu.memory_space<smem>>
      %c0_422 = arith.constant 0 : index
      %c0_423 = arith.constant 0 : index
      %c70_424 = arith.constant 70 : index
      %894 = vector.load %arg8[%c0_422, %c0_423, %c70_424] : memref<2x1x358xf32, #tpu.memory_space<vmem>>, vector<1x1x256xf32>
      %895 = vector.shape_cast %894 : vector<1x1x256xf32> to vector<1x256xf32>
      %cst_425 = arith.constant 0.000000e+00 : f32
      %896 = vector.broadcast %cst_425 : f32 to vector<1x256xf32>
      %897 = arith.select %892, %895, %896 : vector<1x256xi1>, vector<1x256xf32>
      %898 = vector.broadcast %893 : f32 to vector<1x256xf32>
      %899 = arith.mulf %898, %897 : vector<1x256xf32>
      %900 = arith.addf %889, %899 : vector<1x256xf32>
      %c83_426 = arith.constant 83 : index
      %901 = memref.load %arg2[%c83_426] : memref<98xf32, #tpu.memory_space<smem>>
      %c1_427 = arith.constant 1 : index
      %c0_428 = arith.constant 0 : index
      %c70_429 = arith.constant 70 : index
      %902 = vector.load %arg8[%c1_427, %c0_428, %c70_429] : memref<2x1x358xf32, #tpu.memory_space<vmem>>, vector<1x1x256xf32>
      %903 = vector.shape_cast %902 : vector<1x1x256xf32> to vector<1x256xf32>
      %cst_430 = arith.constant 0.000000e+00 : f32
      %904 = vector.broadcast %cst_430 : f32 to vector<1x256xf32>
      %905 = arith.select %892, %903, %904 : vector<1x256xi1>, vector<1x256xf32>
      %906 = vector.broadcast %901 : f32 to vector<1x256xf32>
      %907 = arith.mulf %906, %905 : vector<1x256xf32>
      %908 = arith.addf %900, %907 : vector<1x256xf32>
      %c224_i32_431 = arith.constant 224 : i32
      %909 = vector.broadcast %c224_i32_431 : i32 to vector<1x256xi32>
      %910 = arith.cmpi slt, %29, %909 : vector<1x256xi32>
      %911 = arith.andi %816, %910 : vector<1x256xi1>
      %c41 = arith.constant 41 : index
      %912 = memref.load %arg2[%c41] : memref<98xf32, #tpu.memory_space<smem>>
      %c0_432 = arith.constant 0 : index
      %c0_433 = arith.constant 0 : index
      %c86_434 = arith.constant 86 : index
      %913 = vector.load %arg8[%c0_432, %c0_433, %c86_434] : memref<2x1x358xf32, #tpu.memory_space<vmem>>, vector<1x1x256xf32>
      %914 = vector.shape_cast %913 : vector<1x1x256xf32> to vector<1x256xf32>
      %cst_435 = arith.constant 0.000000e+00 : f32
      %915 = vector.broadcast %cst_435 : f32 to vector<1x256xf32>
      %916 = arith.select %911, %914, %915 : vector<1x256xi1>, vector<1x256xf32>
      %917 = vector.broadcast %912 : f32 to vector<1x256xf32>
      %918 = arith.mulf %917, %916 : vector<1x256xf32>
      %919 = arith.addf %908, %918 : vector<1x256xf32>
      %c90 = arith.constant 90 : index
      %920 = memref.load %arg2[%c90] : memref<98xf32, #tpu.memory_space<smem>>
      %c1_436 = arith.constant 1 : index
      %c0_437 = arith.constant 0 : index
      %c86_438 = arith.constant 86 : index
      %921 = vector.load %arg8[%c1_436, %c0_437, %c86_438] : memref<2x1x358xf32, #tpu.memory_space<vmem>>, vector<1x1x256xf32>
      %922 = vector.shape_cast %921 : vector<1x1x256xf32> to vector<1x256xf32>
      %cst_439 = arith.constant 0.000000e+00 : f32
      %923 = vector.broadcast %cst_439 : f32 to vector<1x256xf32>
      %924 = arith.select %911, %922, %923 : vector<1x256xi1>, vector<1x256xf32>
      %925 = vector.broadcast %920 : f32 to vector<1x256xf32>
      %926 = arith.mulf %925, %924 : vector<1x256xf32>
      %927 = arith.addf %919, %926 : vector<1x256xf32>
      %c208_i32_440 = arith.constant 208 : i32
      %928 = vector.broadcast %c208_i32_440 : i32 to vector<1x256xi32>
      %929 = arith.cmpi slt, %29, %928 : vector<1x256xi32>
      %930 = arith.andi %816, %929 : vector<1x256xi1>
      %c48_441 = arith.constant 48 : index
      %931 = memref.load %arg2[%c48_441] : memref<98xf32, #tpu.memory_space<smem>>
      %c0_442 = arith.constant 0 : index
      %c0_443 = arith.constant 0 : index
      %c102 = arith.constant 102 : index
      %932 = vector.load %arg8[%c0_442, %c0_443, %c102] : memref<2x1x358xf32, #tpu.memory_space<vmem>>, vector<1x1x256xf32>
      %933 = vector.shape_cast %932 : vector<1x1x256xf32> to vector<1x256xf32>
      %cst_444 = arith.constant 0.000000e+00 : f32
      %934 = vector.broadcast %cst_444 : f32 to vector<1x256xf32>
      %935 = arith.select %930, %933, %934 : vector<1x256xi1>, vector<1x256xf32>
      %936 = vector.broadcast %931 : f32 to vector<1x256xf32>
      %937 = arith.mulf %936, %935 : vector<1x256xf32>
      %938 = arith.addf %927, %937 : vector<1x256xf32>
      %c97_445 = arith.constant 97 : index
      %939 = memref.load %arg2[%c97_445] : memref<98xf32, #tpu.memory_space<smem>>
      %c1_446 = arith.constant 1 : index
      %c0_447 = arith.constant 0 : index
      %c102_448 = arith.constant 102 : index
      %940 = vector.load %arg8[%c1_446, %c0_447, %c102_448] : memref<2x1x358xf32, #tpu.memory_space<vmem>>, vector<1x1x256xf32>
      %941 = vector.shape_cast %940 : vector<1x1x256xf32> to vector<1x256xf32>
      %cst_449 = arith.constant 0.000000e+00 : f32
      %942 = vector.broadcast %cst_449 : f32 to vector<1x256xf32>
      %943 = arith.select %930, %941, %942 : vector<1x256xi1>, vector<1x256xf32>
      %944 = vector.broadcast %939 : f32 to vector<1x256xf32>
      %945 = arith.mulf %944, %943 : vector<1x256xf32>
      %946 = arith.addf %938, %945 : vector<1x256xf32>
      %cst_450 = arith.constant 0.000000e+00 : f32
      %947 = vector.broadcast %cst_450 : f32 to vector<1x256xf32>
      %948 = arith.maximumf %946, %947 : vector<1x256xf32>
      %c0_451 = arith.constant 0 : index
      %c0_452 = arith.constant 0 : index
      %c0_453 = arith.constant 0 : index
      %949 = vector.load %arg5[%c0_451, %c0_452, %c0_453] : memref<1x1x256xf32, #tpu.memory_space<vmem>>, vector<1x1x256xf32>
      %950 = vector.shape_cast %949 : vector<1x1x256xf32> to vector<1x256xf32>
      %951 = vector.shape_cast %948 : vector<1x256xf32> to vector<1x1x256xf32>
      tpu.vector_store %arg5[%c0_451, %c0_452, %c0_453], %951 {strides = array<i32>} : memref<1x1x256xf32, #tpu.memory_space<vmem>>, vector<1x1x256xf32>,
    } else {
    }
    return
  }
  func.func @transform_0(%arg0: i32, %arg1: i32) -> i32 {
    %c0_i32 = arith.constant 0 : i32
    %c0_i32_0 = arith.constant 0 : i32
    return %c0_i32 : i32
  }
  func.func @transform_1(%arg0: i32, %arg1: i32) -> i32 {
    %c0_i32 = arith.constant 0 : i32
    %c0_i32_0 = arith.constant 0 : i32
    return %c0_i32 : i32
  }
  func.func @transform_2(%arg0: i32, %arg1: i32) -> (i32, i32, i32) {
    %c0_i32 = arith.constant 0 : i32
    %c0_i32_0 = arith.constant 0 : i32
    return %arg0, %arg1, %c0_i32 : i32, i32, i32
  }
  func.func @transform_3(%arg0: i32, %arg1: i32) -> (i32, i32, i32) {
    %c0_i32 = arith.constant 0 : i32
    %c0_i32_0 = arith.constant 0 : i32
    %c0_i32_1 = arith.constant 0 : i32
    return %arg0, %c0_i32, %c0_i32_0 : i32, i32, i32
  }
}

</mosaic_0001>

<llo_original>
// kernel: tpu_custom_call.1
$region0: #{tpu_custom_call.1}
  #allocation0 [shape = 'u32[]', space=smem, size = 0x4, offset = 0x4, fixed_abs, tag = 'smem constant byte address 0x4 - core index']
  #allocation1 [shape = 'u32[144,128]{1,0:T(1,128)}', space=vmem, size = 0x12000, scoped, tag = 'internal scratch']
  #allocation2 [shape = 'f32[1,256]{1,0:T(1,128)}', space=vmem, size = 0x400, scoped, tag = 'scratch operand']
  #allocation3 [shape = 'f32[1,256]{1,0:T(1,128)}', space=vmem, size = 0x400, scoped, tag = 'scratch operand']
  #allocation4 [shape = 'f32[2,1,358]{2,1,0:T(1,128)}', space=vmem, size = 0xc00, scoped, tag = 'scratch operand']
  #allocation5 [shape = 'f32[1]{0:T(128)S(6)}', space=smem, size = 0x200, scoped, tag = 'scoped memory for tpu_custom_call.1']
  %s0 = inlined_call_operand.vmem [shape: f32[98], index: 0, kind: input, shape index: {}]
  %s1 = inlined_call_operand.<no memory space> [shape: f32[1], index: 1, kind: input, shape index: {}]
  %s2 = inlined_call_operand.hbm [shape: f32[2,4,256], index: 2, kind: input, shape index: {}]
  %s3 = inlined_call_operand.hbm [shape: f32[2,1,256], index: 3, kind: output, shape index: {}]
  %s4 = sld [smem:[#allocation0]]
  $region61: #{tpu_custom_call.1} parent=0
    _
  %s6 = ssub.s32 1, %s4
  %s7 = scalar_select 0, %s6, %s4
  %8 = sst [smem:[#allocation5]] %s1
  $region1: #{tpu_custom_call.1} parent=0
    #allocation6 [shape = 'u8[512]{0}', space=smem, size = 0x200, scoped, tag = 'input window, operand 0, single buffered']
    #allocation7 [shape = 's32[2]{0}', space=sflag, size = 0x8, scoped, tag = 'scoped memory for tpu_custom_call.1']
    #allocation8 [shape = 's32[2]{0}', space=sflag, size = 0x8, scoped, tag = 'scoped memory for tpu_custom_call.1']
    #allocation9 [shape = 's32[2]{0}', space=sflag, size = 0x8, scoped, tag = 'scoped memory for tpu_custom_call.1']
    #allocation10 [shape = 'u8[8192]{0}', space=vmem, size = 0x2000, scoped, tag = 'input window, operand 2']
    #allocation11 [shape = 'u8[2048]{0}', space=vmem, size = 0x800, scoped, tag = 'output window, operand 0']
    %9 = vsyncpa [#allocation9], 0
    %10 = vsyncpa [#allocation7], 0
    %s11 = scalar_lea.sflag [#allocation7], 1
    %12 = vsyncpa %s11, 0
    %13 = vsyncpa [#allocation8], 0
    %s14 = scalar_lea.sflag [#allocation8], 1
    %15 = vsyncpa %s14, 0
    loop: start=0, step=1, limit=4
    $region2: #{tpu_custom_call.1} parent=1 // loop_pre_header
      _
    $region3: #{tpu_custom_call.1} parent=1 // loop_header
      %s17 = sphi 0, %s21
      %p18 = scmp.ge.s32.totalorder %s17, 4
      %s24 = sphi 0, %s36
      %s25 = sphi 0, %s32
      %s26 = sphi 0, %s24
      %s27 = sphi 0, %s25
      %s28 = sphi 0, %s26
      %s29 = sphi 0, %s27
      %s37 = sphi 0, %s37
      %s39 = sphi 0, %s37
      %s40 = sphi 0, %s39
      %s54 = sphi 0, %s40
      %s58 = sphi 0, %s58
      %s60 = sphi 0, %s58
      %s61 = sphi 0, %s60
      %s75 = sphi 0, %s61
      %s83 = sphi 0, %s85
      %s86 = sphi 0, %s83
      %s87 = sphi 0, %s86
      %s103 = sphi 0, %s87
      %s109 = sphi 0, %s111
      %s112 = sphi 0, %s109
      %s113 = sphi 0, %s112
      %s129 = sphi 0, %s113
    $region4: #{tpu_custom_call.1} parent=1 // loop_header_branch
      %20 = sbr.rel (%p18) target = $region8
    $region5: #{tpu_custom_call.1} parent=1 // loop_body
      %s22 = ssub.s32 %s17, 1
      %s23 = ssub.s32 %s17, 2
      %s30 = sadd.s32 1, %s25
      %p31 = scmp.ge.s32.totalorder %s30, 1
      %s32 = scalar_select %p31, 0, %s30
      %s33 = sadd.s32 1, %s24
      %s34 = scalar_select %p31, %s33, %s24
      %p35 = scmp.ge.s32.totalorder %s34, 2
      %s36 = scalar_select %p35, 0, %s34
      %s38 = sadd.s32 %s37, 1
      %p41 = scmp.eq.s32.totalorder %s17, 1
      %p42 = scmp.ne.s32.totalorder %s37, %s39
      %p43 = scmp.eq.s32.totalorder %s17, 0
      %p44 = por %p42, %p43
      %p45 = scmp.ne.s32.totalorder %s37, %s39
      %p46 = scmp.eq.s32.totalorder %s22, 1
      %p47 = por %p45, %p46
      %p48 = scmp.ne.s32.totalorder %s39, %s40
      %p49 = scmp.eq.s32.totalorder %s22, 0
      %p50 = por %p48, %p49
      %p51 = scmp.ne.s32.totalorder %s39, %s40
      %p52 = scmp.eq.s32.totalorder %s23, 1
      %p53 = por %p51, %p52
      %p55 = scmp.ne.s32.totalorder %s40, %s54
      %p56 = scmp.eq.s32.totalorder %s23, 0
      %p57 = por %p55, %p56
      %s59 = sadd.s32 %s58, 1
      %p62 = scmp.eq.s32.totalorder %s17, 1
      %p63 = scmp.ne.s32.totalorder %s58, %s60
      %p64 = scmp.eq.s32.totalorder %s17, 0
      %p65 = por %p63, %p64
      %p66 = scmp.ne.s32.totalorder %s58, %s60
      %p67 = scmp.eq.s32.totalorder %s22, 1
      %p68 = por %p66, %p67
      %p69 = scmp.ne.s32.totalorder %s60, %s61
      %p70 = scmp.eq.s32.totalorder %s22, 0
      %p71 = por %p69, %p70
      %p72 = scmp.ne.s32.totalorder %s60, %s61
      %p73 = scmp.eq.s32.totalorder %s23, 1
      %p74 = por %p72, %p73
      %p76 = scmp.ne.s32.totalorder %s61, %s75
      %p77 = scmp.eq.s32.totalorder %s23, 0
      %p78 = por %p76, %p77
      %s79 = ssub.s32 %s24, %s36
      %s80 = ssub.s32 %s25, %s32
      %s81 = sor.u32 %s79, %s80
      %p82 = scmp.eq.s32.totalorder %s81, 0
      %s84 = sadd.s32 %s83, 1
      %s85 = scalar_select %p82, %s83, %s84
      %p88 = pneg %p82
      %p89 = scmp.eq.s32.totalorder %s17, 1
      %p90 = por %p88, %p89
      %p91 = scmp.ne.s32.totalorder %s83, %s86
      %p92 = scmp.eq.s32.totalorder %s17, 0
      %p93 = por %p91, %p92
      %p94 = scmp.ne.s32.totalorder %s83, %s86
      %p95 = scmp.eq.s32.totalorder %s22, 1
      %p96 = por %p94, %p95
      %p97 = scmp.ne.s32.totalorder %s86, %s87
      %p98 = scmp.eq.s32.totalorder %s22, 0
      %p99 = por %p97, %p98
      %p100 = scmp.ne.s32.totalorder %s86, %s87
      %p101 = scmp.eq.s32.totalorder %s23, 1
      %p102 = por %p100, %p101
      %p104 = scmp.ne.s32.totalorder %s87, %s103
      %p105 = scmp.eq.s32.totalorder %s23, 0
      %p106 = por %p104, %p105
      %s107 = ssub.s32 %s24, %s36
      %p108 = scmp.eq.s32.totalorder %s107, 0
      %s110 = sadd.s32 %s109, 1
      %s111 = scalar_select %p108, %s109, %s110
      %p114 = pneg %p108
      %p115 = scmp.eq.s32.totalorder %s17, 1
      %p116 = por %p114, %p115
      %p117 = scmp.ne.s32.totalorder %s109, %s112
      %p118 = scmp.eq.s32.totalorder %s17, 0
      %p119 = por %p117, %p118
      %p120 = scmp.ne.s32.totalorder %s109, %s112
      %p121 = scmp.eq.s32.totalorder %s22, 1
      %p122 = por %p120, %p121
      %p123 = scmp.ne.s32.totalorder %s112, %s113
      %p124 = scmp.eq.s32.totalorder %s22, 0
      %p125 = por %p123, %p124
      %p126 = scmp.ne.s32.totalorder %s112, %s113
      %p127 = scmp.eq.s32.totalorder %s23, 1
      %p128 = por %p126, %p127
      %p130 = scmp.ne.s32.totalorder %s113, %s129
      %p131 = scmp.eq.s32.totalorder %s23, 0
      %p132 = por %p130, %p131
      %p133 = scmp.le.s32.totalorder 1, %s17
      %p134 = scmp.lt.s32.totalorder %s17, 3
      %p135 = pnand %p133, %p134
      %p136 = pneg %p135
      // Predicated region
      $region9: #{tpu_custom_call.1} parent=5 // pred_check
        _
      $region10: #{tpu_custom_call.1} parent=5 // pred_check_branch
        %138 = sbr.rel (%p135) target = $region12
      $region11: #{tpu_custom_call.1} parent=5 // pred_region
        %s139 = ssub.s32 %s17, 1
        // Predicated region
        $region13: #{tpu_custom_call.1} parent=11 // pred_check
          %p140 = pneg %p50
        $region14: #{tpu_custom_call.1} parent=11 // pred_check_branch
          %142 = sbr.rel (%p140) target = $region16
        $region15: #{tpu_custom_call.1} parent=11 // pred_region
          %s144 = ssub.s32 16, 16
          %145 = vsyncadd [#allocation9], %s144
          %s147 = sshll.u32 %s0, 4
          %s148 = int_to_ptr.vmem [resolvable:$true] %s147
          %150 = dma.vmem_to_smem %s148, 16, [#allocation6], [#allocation9]
        $region16: #{tpu_custom_call.1} parent=11 // pred_fallthru
          _
        // Predicated region
        $region17: #{tpu_custom_call.1} parent=11 // pred_check
          %p151 = pneg %p71
        $region18: #{tpu_custom_call.1} parent=11 // pred_check_branch
          %153 = sbr.rel (%p151) target = $region20
        $region19: #{tpu_custom_call.1} parent=11 // pred_region
          _
        $region20: #{tpu_custom_call.1} parent=11 // pred_fallthru
          _
      $region12: #{tpu_custom_call.1} parent=5 // pred_fallthru
        _
      %p154 = scmp.lt.s32.totalorder %s17, 2
      // Predicated region
      $region21: #{tpu_custom_call.1} parent=5 // pred_check
        %p155 = pneg %p154
      $region22: #{tpu_custom_call.1} parent=5 // pred_check_branch
        %157 = sbr.rel (%p155) target = $region24
      $region23: #{tpu_custom_call.1} parent=5 // pred_region
        // Predicated region
        $region25: #{tpu_custom_call.1} parent=23 // pred_check
          %p158 = pneg %p93
        $region26: #{tpu_custom_call.1} parent=23 // pred_check_branch
          %160 = sbr.rel (%p158) target = $region28
        $region27: #{tpu_custom_call.1} parent=23 // pred_region
          %s161 = sand.u32 %s83, 1
          %s162 = scalar_lea.sflag [#allocation7], %s161
          %s163 = sand.u32 %s83, 1
          %s164 = smul.addr %s163, 8
          %s165 = scalar_lea.vmem [#allocation10], %s164
          %s167 = ssub.s32 128, 128
          %168 = vsyncadd %s162, %s167
          %s169 = smul.addr %s25, 2
          %s170 = smul.addr %s24, 2
          %s171 = sadd.s32 %s169, %s170
          %s172 = smul.addr %s171, 64
          %s173 = scalar_lea.hbm %s2, %s172
          %s175 = sshll.u32 %s165, 4
          %s176 = int_to_ptr.vmem [resolvable:$true] %s175
          %178 = dma.hbm_to_vmem [thread:$0]  %s173, 128, %s176, %s162
        $region28: #{tpu_custom_call.1} parent=23 // pred_fallthru
          _
      $region24: #{tpu_custom_call.1} parent=5 // pred_fallthru
        _
      %p179 = scmp.le.s32.totalorder 1, %s17
      %p180 = scmp.lt.s32.totalorder %s17, 3
      %p181 = pnand %p179, %p180
      %p182 = pneg %p181
      // Predicated region
      $region29: #{tpu_custom_call.1} parent=5 // pred_check
        _
      $region30: #{tpu_custom_call.1} parent=5 // pred_check_branch
        %184 = sbr.rel (%p181) target = $region32
      $region31: #{tpu_custom_call.1} parent=5 // pred_region
        %s185 = ssub.s32 %s17, 1
        // Predicated region
        $region33: #{tpu_custom_call.1} parent=31 // pred_check
          %p186 = pneg %p50
        $region34: #{tpu_custom_call.1} parent=31 // pred_check_branch
          %188 = sbr.rel (%p186) target = $region36
        $region35: #{tpu_custom_call.1} parent=31 // pred_region
          %189 = dma.done [#allocation9], 16
        $region36: #{tpu_custom_call.1} parent=31 // pred_fallthru
          _
        %s190 = sand.u32 %s86, 1
        %s191 = scalar_lea.sflag [#allocation7], %s190
        %s192 = sand.u32 %s86, 1
        %s193 = smul.addr %s192, 8
        %s194 = scalar_lea.vmem [#allocation10], %s193
        // Predicated region
        $region37: #{tpu_custom_call.1} parent=31 // pred_check
          %p195 = pneg %p99
        $region38: #{tpu_custom_call.1} parent=31 // pred_check_branch
          %197 = sbr.rel (%p195) target = $region40
        $region39: #{tpu_custom_call.1} parent=31 // pred_region
          %198 = dma.done %s191, 128
        $region40: #{tpu_custom_call.1} parent=31 // pred_fallthru
          _
        %199 = sfence
        %p200 = pneg %p50
        %p201 = pneg %p47
        %p202 = pneg %p71
        %p203 = pneg %p68
        %s204 = sand.u32 %s86, 1
        %s205 = scalar_lea.sflag [#allocation7], %s204
        %s206 = sand.u32 %s86, 1
        %s207 = smul.addr %s206, 8
        %s208 = scalar_lea.vmem [#allocation10], %s207
        %p209 = pneg %p99
        %p210 = pneg %p96
        %p211 = pneg %p125
        %p212 = pneg %p122
        %s213 = sand.u32 %s112, 1
        %s214 = scalar_lea.sflag [#allocation8], %s213
        %s215 = sand.u32 %s112, 1
        %s216 = smul.addr %s215, 2
        %s217 = scalar_lea.vmem [#allocation11], %s216
        %p218 = scmp.eq.s32.totalorder %s27, 0
        // Predicated region
        $region41: #{tpu_custom_call.1} parent=31 // pred_check
          %p219 = pneg %p218
        $region42: #{tpu_custom_call.1} parent=31 // pred_check_branch
          %221 = sbr.rel (%p219) target = $region44
        $region43: #{tpu_custom_call.1} parent=31 // pred_region
          %v222 = vlaneseq
          %vm223 = vcmp.ge.s32.totalorder %v222, 0
          %vm224 = vcmp.lt.s32.totalorder %v222, 256
          %vm225 = vmand %vm223, %vm224
          %226 = vst.msk [vmem:[#allocation2] sm:$0x3] %vm225, 0.0
          %227 = vst.msk [vmem:[#allocation3] sm:$0x3] %vm225, -inf
        $region44: #{tpu_custom_call.1} parent=31 // pred_fallthru
          _
        %v228 = vld [vmem:[%s194] sm:$0xff]
        %v229 = vld [vmem:[#allocation2] sm:$0x3]
        %v231 = vcombine.high %v228, %v228
        %vm233 = vcmask 1043456
        %v234 = vsel %vm233, %v228, 0.0
        %v235 = vrot.slane %v234, 4
        %v236 = vadd.f32 %v234, %v235
        %v237 = vrot.slane %v236, 2
        %v238 = vadd.f32 %v236, %v237
        %v239 = vrot.slane %v238, 1
        %v240 = vadd.f32 %v238, %v239
        %v241 = vsel %vm233, %v231, 0.0
        %v242 = vrot.slane %v241, 4
        %v243 = vadd.f32 %v241, %v242
        %v244 = vrot.slane %v243, 2
        %v245 = vadd.f32 %v243, %v244
        %v246 = vrot.slane %v245, 1
        %v247 = vadd.f32 %v245, %v246
        %v250 = vcombine.low %v240, %v247
        %v252 = vunpack.c.l.s4 1966171168
        %v253 = vunpack.c.0.s8 %v252
        %v254 = vlaneseq
        %v255 = vshrl.u32 %v254, 7
        %v256 = vsub.s32 %v253, %v255
        %v257 = vrot.slane %v250, %v256
        %v259 = vunpack.c.l.s4 1966171168
        %v260 = vunpack.c.0.s8 %v259
        %v261 = vlaneseq
        %v262 = vshrl.u32 %v261, 7
        %v263 = vsub.s32 %v260, %v262
        %v264 = vrot.slane %v257, %v263
        %v266 = vadd.f32 %v229, %v264
        %v267 = vlaneseq
        %vm268 = vcmp.ge.s32.totalorder %v267, 0
        %vm269 = vcmp.lt.s32.totalorder %v267, 256
        %vm270 = vmand %vm268, %vm269
        %271 = vst.msk [vmem:[#allocation2] sm:$0x3] %vm270, %v266
        %v272 = vld [vmem:[#allocation3] sm:$0x3]
        %v273 = vsel %vm233, %v228, -inf
        %v274 = vrot.slane %v273, 4
        %v275 = vmax.f32 %v273, %v274
        %v276 = vrot.slane %v275, 2
        %v277 = vmax.f32 %v275, %v276
        %v278 = vrot.slane %v277, 1
        %v279 = vmax.f32 %v277, %v278
        %v280 = vsel %vm233, %v231, -inf
        %v281 = vrot.slane %v280, 4
        %v282 = vmax.f32 %v280, %v281
        %v283 = vrot.slane %v282, 2
        %v284 = vmax.f32 %v282, %v283
        %v285 = vrot.slane %v284, 1
        %v286 = vmax.f32 %v284, %v285
        %v289 = vcombine.low %v279, %v286
        %v291 = vunpack.c.l.s4 1966171168
        %v292 = vunpack.c.0.s8 %v291
        %v293 = vlaneseq
        %v294 = vshrl.u32 %v293, 7
        %v295 = vsub.s32 %v292, %v294
        %v296 = vrot.slane %v289, %v295
        %v298 = vunpack.c.l.s4 1966171168
        %v299 = vunpack.c.0.s8 %v298
        %v300 = vlaneseq
        %v301 = vshrl.u32 %v300, 7
        %v302 = vsub.s32 %v299, %v301
        %v303 = vrot.slane %v296, %v302
        %v305 = vmax.f32 %v272, %v303
        %306 = vst.msk [vmem:[#allocation3] sm:$0x3] %vm270, %v305
        // Predicated region
        $region45: #{tpu_custom_call.1} parent=31 // pred_check
          %p307 = pneg %p218
        $region46: #{tpu_custom_call.1} parent=31 // pred_check_branch
          %309 = sbr.rel (%p307) target = $region48
        $region47: #{tpu_custom_call.1} parent=31 // pred_region
          %v310 = vld [vmem:[#allocation2] sm:$0x3]
          %312 = vrot.lane.b32.xlu0 %v310, 51
          %v313 = vpop.permute.xlu0 %312
          %v314 = vrot.slane %v313, 7
          %vm315 = vcmask 416768
          %v316 = vsel %vm315, %v314, %v313
          %vm318 = vcmp.ge.s32.totalorder %v267, 51
          %vm319 = vcmp.lt.s32.totalorder %v267, 307
          %vm320 = vmand %vm318, %vm319
          %321 = vst.msk [vmem:[#allocation4] sm:$0x7] %vm320, %v316
          %v322 = vld [vmem:[#allocation3] sm:$0x3]
          %324 = vrot.lane.b32.xlu0 %v322, 51
          %v325 = vpop.permute.xlu0 %324
          %v326 = vrot.slane %v325, 7
          %v327 = vsel %vm315, %v326, %v325
          %s329 = scalar_lea.vmem [#allocation4], 3
          %330 = vst.msk [vmem:[%s329] sm:$0x7] %vm320, %v327
          %s331 = sld [smem:[#allocation5]]
          %v332 = vlaneseq
          %v333 = vand.u32 %v332, 127
          %v334 = vadd.s32 %v333, 128
          %v335 = vand.u32 %v333, 15
          %v336 = vand.u32 %v334, 15
          %v337 = vstv %s331
          %v338 = vadd.f32 %v337, 0.0
          %vm339 = vcmp.ge.s32.totalorder %v335, 3
          %vm340 = vcmp.ge.s32.totalorder %v336, 3
          %vm341 = vcmp.ge.s32.totalorder %v333, 48
          %vm342 = vcmp.ge.s32.totalorder %v334, 48
          %vm343 = vmand %vm339, %vm341
          %vm344 = vmand %vm340, %vm342
          %s345 = sld [smem:[#allocation6]]
          %v346 = vld [vmem:[#allocation4] sm:$0x3]
          %v348 = vlaneseq
          %v349 = vshrl.u32 %v348, 7
          %v350 = vsub.s32 0, %v349
          %v351 = vrot.slane %v346, %v350
          %v352 = vlaneseq
          %v353 = vshrl.u32 %v352, 7
          %v354 = vsub.s32 1, %v353
          %v355 = vrot.slane %v346, %v354
          %v358 = vsel %vm343, %v351, 0.0
          %v359 = vsel %vm344, %v355, 0.0
          %v360 = vstv %s345
          %v361 = vmul.f32 %v360, %v358
          %v362 = vmul.f32 %v360, %v359
          %v363 = vadd.f32 %v338, %v361
          %v364 = vadd.f32 %v338, %v362
          %s365 = sld [smem:[#allocation6 + $0x31]]
          %v366 = vld [vmem:[%s329] sm:$0x3]
          %v368 = vlaneseq
          %v369 = vshrl.u32 %v368, 7
          %v370 = vsub.s32 0, %v369
          %v371 = vrot.slane %v366, %v370
          %v372 = vlaneseq
          %v373 = vshrl.u32 %v372, 7
          %v374 = vsub.s32 1, %v373
          %v375 = vrot.slane %v366, %v374
          %v378 = vsel %vm343, %v371, 0.0
          %v379 = vsel %vm344, %v375, 0.0
          %v380 = vstv %s365
          %v381 = vmul.f32 %v380, %v378
          %v382 = vmul.f32 %v380, %v379
          %v383 = vadd.f32 %v363, %v381
          %v384 = vadd.f32 %v364, %v382
          %vm385 = vcmp.ge.s32.totalorder %v333, 32
          %vm386 = vcmp.ge.s32.totalorder %v334, 32
          %vm387 = vmand %vm339, %vm385
          %vm388 = vmand %vm340, %vm386
          %s389 = sld [smem:[#allocation6 + $0x7]]
          %v390 = vld [vmem:[#allocation4] sm:$0x7]
          %v392 = vlaneseq
          %v393 = vshrl.u32 %v392, 7
          %v394 = vsub.s32 0, %v393
          %v395 = vrot.slane %v390, %v394
          %v396 = vlaneseq
          %v397 = vshrl.u32 %v396, 7
          %v398 = vsub.s32 1, %v397
          %v399 = vrot.slane %v390, %v398
          %v400 = vlaneseq
          %v401 = vshrl.u32 %v400, 7
          %v402 = vsub.s32 2, %v401
          %v403 = vrot.slane %v390, %v402
          %404 = vrot.lane.b32.xlu0 %v395, 112
          %v405 = vpop.permute.xlu0 %404
          %406 = vrot.lane.b32.xlu0 %v399, 112
          %v407 = vpop.permute.xlu0 %406
          %408 = vrot.lane.b32.xlu0 %v403, 112
          %v409 = vpop.permute.xlu0 %408
          %vm410 = vcmask 916480
          %v411 = vsel %vm410, %v405, %v407
          %v412 = vsel %vm410, %v407, %v409
          %v415 = vsel %vm387, %v411, 0.0
          %v416 = vsel %vm388, %v412, 0.0
          %v417 = vstv %s389
          %v418 = vmul.f32 %v417, %v415
          %v419 = vmul.f32 %v417, %v416
          %v420 = vadd.f32 %v383, %v418
          %v421 = vadd.f32 %v384, %v419
          %s422 = sld [smem:[#allocation6 + $0x38]]
          %v423 = vld [vmem:[%s329] sm:$0x7]
          %v425 = vlaneseq
          %v426 = vshrl.u32 %v425, 7
          %v427 = vsub.s32 0, %v426
          %v428 = vrot.slane %v423, %v427
          %v429 = vlaneseq
          %v430 = vshrl.u32 %v429, 7
          %v431 = vsub.s32 1, %v430
          %v432 = vrot.slane %v423, %v431
          %v433 = vlaneseq
          %v434 = vshrl.u32 %v433, 7
          %v435 = vsub.s32 2, %v434
          %v436 = vrot.slane %v423, %v435
          %437 = vrot.lane.b32.xlu0 %v428, 112
          %v438 = vpop.permute.xlu0 %437
          %439 = vrot.lane.b32.xlu0 %v432, 112
          %v440 = vpop.permute.xlu0 %439
          %441 = vrot.lane.b32.xlu0 %v436, 112
          %v442 = vpop.permute.xlu0 %441
          %v443 = vsel %vm410, %v438, %v440
          %v444 = vsel %vm410, %v440, %v442
          %v447 = vsel %vm387, %v443, 0.0
          %v448 = vsel %vm388, %v444, 0.0
          %v449 = vstv %s422
          %v450 = vmul.f32 %v449, %v447
          %v451 = vmul.f32 %v449, %v448
          %v452 = vadd.f32 %v420, %v450
          %v453 = vadd.f32 %v421, %v451
          %vm454 = vcmp.ge.s32.totalorder %v333, 16
          %vm455 = vcmp.ge.s32.totalorder %v334, 16
          %vm456 = vmand %vm339, %vm454
          %vm457 = vmand %vm340, %vm455
          %s458 = sld [smem:[#allocation6 + $0xe]]
          %459 = vrot.lane.b32.xlu0 %v395, 96
          %v460 = vpop.permute.xlu0 %459
          %461 = vrot.lane.b32.xlu0 %v399, 96
          %v462 = vpop.permute.xlu0 %461
          %463 = vrot.lane.b32.xlu0 %v403, 96
          %v464 = vpop.permute.xlu0 %463
          %vm465 = vcmask 785408
          %v466 = vsel %vm465, %v460, %v462
          %v467 = vsel %vm465, %v462, %v464
          %v470 = vsel %vm456, %v466, 0.0
          %v471 = vsel %vm457, %v467, 0.0
          %v472 = vstv %s458
          %v473 = vmul.f32 %v472, %v470
          %v474 = vmul.f32 %v472, %v471
          %v475 = vadd.f32 %v452, %v473
          %v476 = vadd.f32 %v453, %v474
          %s477 = sld [smem:[#allocation6 + $0x3f]]
          %478 = vrot.lane.b32.xlu0 %v428, 96
          %v479 = vpop.permute.xlu0 %478
          %480 = vrot.lane.b32.xlu0 %v432, 96
          %v481 = vpop.permute.xlu0 %480
          %482 = vrot.lane.b32.xlu0 %v436, 96
          %v483 = vpop.permute.xlu0 %482
          %v484 = vsel %vm465, %v479, %v481
          %v485 = vsel %vm465, %v481, %v483
          %v488 = vsel %vm456, %v484, 0.0
          %v489 = vsel %vm457, %v485, 0.0
          %v490 = vstv %s477
          %v491 = vmul.f32 %v490, %v488
          %v492 = vmul.f32 %v490, %v489
          %v493 = vadd.f32 %v475, %v491
          %v494 = vadd.f32 %v476, %v492
          %s495 = sld [smem:[#allocation6 + $0x15]]
          %496 = vrot.lane.b32.xlu0 %v395, 80
          %v497 = vpop.permute.xlu0 %496
          %498 = vrot.lane.b32.xlu0 %v399, 80
          %v499 = vpop.permute.xlu0 %498
          %500 = vrot.lane.b32.xlu0 %v403, 80
          %v501 = vpop.permute.xlu0 %500
          %vm502 = vcmask 654336
          %v503 = vsel %vm502, %v497, %v499
          %v504 = vsel %vm502, %v499, %v501
          %v507 = vsel %vm339, %v503, 0.0
          %v508 = vsel %vm340, %v504, 0.0
          %v509 = vstv %s495
          %v510 = vmul.f32 %v509, %v507
          %v511 = vmul.f32 %v509, %v508
          %v512 = vadd.f32 %v493, %v510
          %v513 = vadd.f32 %v494, %v511
          %s514 = sld [smem:[#allocation6 + $0x46]]
          %515 = vrot.lane.b32.xlu0 %v428, 80
          %v516 = vpop.permute.xlu0 %515
          %517 = vrot.lane.b32.xlu0 %v432, 80
          %v518 = vpop.permute.xlu0 %517
          %519 = vrot.lane.b32.xlu0 %v436, 80
          %v520 = vpop.permute.xlu0 %519
          %v521 = vsel %vm502, %v516, %v518
          %v522 = vsel %vm502, %v518, %v520
          %v525 = vsel %vm339, %v521, 0.0
          %v526 = vsel %vm340, %v522, 0.0
          %v527 = vstv %s514
          %v528 = vmul.f32 %v527, %v525
          %v529 = vmul.f32 %v527, %v526
          %v530 = vadd.f32 %v512, %v528
          %v531 = vadd.f32 %v513, %v529
          %vm532 = vcmp.lt.s32.totalorder %v333, 240
          %vm533 = vcmp.lt.s32.totalorder %v334, 240
          %vm534 = vmand %vm339, %vm532
          %vm535 = vmand %vm340, %vm533
          %s536 = sld [smem:[#allocation6 + $0x1c]]
          %537 = vrot.lane.b32.xlu0 %v395, 64
          %v538 = vpop.permute.xlu0 %537
          %539 = vrot.lane.b32.xlu0 %v399, 64
          %v540 = vpop.permute.xlu0 %539
          %541 = vrot.lane.b32.xlu0 %v403, 64
          %v542 = vpop.permute.xlu0 %541
          %vm543 = vcmask 523264
          %v544 = vsel %vm543, %v538, %v540
          %v545 = vsel %vm543, %v540, %v542
          %v548 = vsel %vm534, %v544, 0.0
          %v549 = vsel %vm535, %v545, 0.0
          %v550 = vstv %s536
          %v551 = vmul.f32 %v550, %v548
          %v552 = vmul.f32 %v550, %v549
          %v553 = vadd.f32 %v530, %v551
          %v554 = vadd.f32 %v531, %v552
          %s555 = sld [smem:[#allocation6 + $0x4d]]
          %556 = vrot.lane.b32.xlu0 %v428, 64
          %v557 = vpop.permute.xlu0 %556
          %558 = vrot.lane.b32.xlu0 %v432, 64
          %v559 = vpop.permute.xlu0 %558
          %560 = vrot.lane.b32.xlu0 %v436, 64
          %v561 = vpop.permute.xlu0 %560
          %v562 = vsel %vm543, %v557, %v559
          %v563 = vsel %vm543, %v559, %v561
          %v566 = vsel %vm534, %v562, 0.0
          %v567 = vsel %vm535, %v563, 0.0
          %v568 = vstv %s555
          %v569 = vmul.f32 %v568, %v566
          %v570 = vmul.f32 %v568, %v567
          %v571 = vadd.f32 %v553, %v569
          %v572 = vadd.f32 %v554, %v570
          %vm573 = vcmp.lt.s32.totalorder %v333, 224
          %vm574 = vcmp.lt.s32.totalorder %v334, 224
          %vm575 = vmand %vm339, %vm573
          %vm576 = vmand %vm340, %vm574
          %s577 = sld [smem:[#allocation6 + $0x23]]
          %578 = vrot.lane.b32.xlu0 %v395, 48
          %v579 = vpop.permute.xlu0 %578
          %580 = vrot.lane.b32.xlu0 %v399, 48
          %v581 = vpop.permute.xlu0 %580
          %582 = vrot.lane.b32.xlu0 %v403, 48
          %v583 = vpop.permute.xlu0 %582
          %vm584 = vcmask 392192
          %v585 = vsel %vm584, %v579, %v581
          %v586 = vsel %vm584, %v581, %v583
          %v589 = vsel %vm575, %v585, 0.0
          %v590 = vsel %vm576, %v586, 0.0
          %v591 = vstv %s577
          %v592 = vmul.f32 %v591, %v589
          %v593 = vmul.f32 %v591, %v590
          %v594 = vadd.f32 %v571, %v592
          %v595 = vadd.f32 %v572, %v593
          %s596 = sld [smem:[#allocation6 + $0x54]]
          %597 = vrot.lane.b32.xlu0 %v428, 48
          %v598 = vpop.permute.xlu0 %597
          %599 = vrot.lane.b32.xlu0 %v432, 48
          %v600 = vpop.permute.xlu0 %599
          %601 = vrot.lane.b32.xlu0 %v436, 48
          %v602 = vpop.permute.xlu0 %601
          %v603 = vsel %vm584, %v598, %v600
          %v604 = vsel %vm584, %v600, %v602
          %v607 = vsel %vm575, %v603, 0.0
          %v608 = vsel %vm576, %v604, 0.0
          %v609 = vstv %s596
          %v610 = vmul.f32 %v609, %v607
          %v611 = vmul.f32 %v609, %v608
          %v612 = vadd.f32 %v594, %v610
          %v613 = vadd.f32 %v595, %v611
          %vm614 = vcmp.lt.s32.totalorder %v333, 208
          %vm615 = vcmp.lt.s32.totalorder %v334, 208
          %vm616 = vmand %vm339, %vm614
          %vm617 = vmand %vm340, %vm615
          %s618 = sld [smem:[#allocation6 + $0x2a]]
          %619 = vrot.lane.b32.xlu0 %v395, 32
          %v620 = vpop.permute.xlu0 %619
          %621 = vrot.lane.b32.xlu0 %v399, 32
          %v622 = vpop.permute.xlu0 %621
          %623 = vrot.lane.b32.xlu0 %v403, 32
          %v624 = vpop.permute.xlu0 %623
          %vm625 = vcmask 261120
          %v626 = vsel %vm625, %v620, %v622
          %v627 = vsel %vm625, %v622, %v624
          %v630 = vsel %vm616, %v626, 0.0
          %v631 = vsel %vm617, %v627, 0.0
          %v632 = vstv %s618
          %v633 = vmul.f32 %v632, %v630
          %v634 = vmul.f32 %v632, %v631
          %v635 = vadd.f32 %v612, %v633
          %v636 = vadd.f32 %v613, %v634
          %s637 = sld [smem:[#allocation6 + $0x5b]]
          %638 = vrot.lane.b32.xlu0 %v428, 32
          %v639 = vpop.permute.xlu0 %638
          %640 = vrot.lane.b32.xlu0 %v432, 32
          %v641 = vpop.permute.xlu0 %640
          %642 = vrot.lane.b32.xlu0 %v436, 32
          %v643 = vpop.permute.xlu0 %642
          %v644 = vsel %vm625, %v639, %v641
          %v645 = vsel %vm625, %v641, %v643
          %v648 = vsel %vm616, %v644, 0.0
          %v649 = vsel %vm617, %v645, 0.0
          %v650 = vstv %s637
          %v651 = vmul.f32 %v650, %v648
          %v652 = vmul.f32 %v650, %v649
          %v653 = vadd.f32 %v635, %v651
          %v654 = vadd.f32 %v636, %v652
          %vm655 = vcmp.ge.s32.totalorder %v335, 2
          %vm656 = vcmp.ge.s32.totalorder %v336, 2
          %vm657 = vmand %vm655, %vm341
          %vm658 = vmand %vm656, %vm342
          %s659 = sld [smem:[#allocation6 + $0x1]]
          %660 = vrot.lane.b32.xlu0 %v395, 127
          %v661 = vpop.permute.xlu0 %660
          %662 = vrot.lane.b32.xlu0 %v399, 127
          %v663 = vpop.permute.xlu0 %662
          %664 = vrot.lane.b32.xlu0 %v403, 127
          %v665 = vpop.permute.xlu0 %664
          %vm666 = vcmask 1039360
          %v667 = vsel %vm666, %v661, %v663
          %v668 = vsel %vm666, %v663, %v665
          %v671 = vsel %vm657, %v667, 0.0
          %v672 = vsel %vm658, %v668, 0.0
          %v673 = vstv %s659
          %v674 = vmul.f32 %v673, %v671
          %v675 = vmul.f32 %v673, %v672
          %v676 = vadd.f32 %v653, %v674
          %v677 = vadd.f32 %v654, %v675
          %s678 = sld [smem:[#allocation6 + $0x32]]
          %679 = vrot.lane.b32.xlu0 %v428, 127
          %v680 = vpop.permute.xlu0 %679
          %681 = vrot.lane.b32.xlu0 %v432, 127
          %v682 = vpop.permute.xlu0 %681
          %683 = vrot.lane.b32.xlu0 %v436, 127
          %v684 = vpop.permute.xlu0 %683
          %v685 = vsel %vm666, %v680, %v682
          %v686 = vsel %vm666, %v682, %v684
          %v689 = vsel %vm657, %v685, 0.0
          %v690 = vsel %vm658, %v686, 0.0
          %v691 = vstv %s678
          %v692 = vmul.f32 %v691, %v689
          %v693 = vmul.f32 %v691, %v690
          %v694 = vadd.f32 %v676, %v692
          %v695 = vadd.f32 %v677, %v693
          %vm696 = vmand %vm655, %vm385
          %vm697 = vmand %vm656, %vm386
          %s698 = sld [smem:[#allocation6 + $0x8]]
          %699 = vrot.lane.b32.xlu0 %v395, 111
          %v700 = vpop.permute.xlu0 %699
          %701 = vrot.lane.b32.xlu0 %v399, 111
          %v702 = vpop.permute.xlu0 %701
          %703 = vrot.lane.b32.xlu0 %v403, 111
          %v704 = vpop.permute.xlu0 %703
          %vm705 = vcmask 908288
          %v706 = vsel %vm705, %v700, %v702
          %v707 = vsel %vm705, %v702, %v704
          %v710 = vsel %vm696, %v706, 0.0
          %v711 = vsel %vm697, %v707, 0.0
          %v712 = vstv %s698
          %v713 = vmul.f32 %v712, %v710
          %v714 = vmul.f32 %v712, %v711
          %v715 = vadd.f32 %v694, %v713
          %v716 = vadd.f32 %v695, %v714
          %s717 = sld [smem:[#allocation6 + $0x39]]
          %718 = vrot.lane.b32.xlu0 %v428, 111
          %v719 = vpop.permute.xlu0 %718
          %720 = vrot.lane.b32.xlu0 %v432, 111
          %v721 = vpop.permute.xlu0 %720
          %722 = vrot.lane.b32.xlu0 %v436, 111
          %v723 = vpop.permute.xlu0 %722
          %v724 = vsel %vm705, %v719, %v721
          %v725 = vsel %vm705, %v721, %v723
          %v728 = vsel %vm696, %v724, 0.0
          %v729 = vsel %vm697, %v725, 0.0
          %v730 = vstv %s717
          %v731 = vmul.f32 %v730, %v728
          %v732 = vmul.f32 %v730, %v729
          %v733 = vadd.f32 %v715, %v731
          %v734 = vadd.f32 %v716, %v732
          %vm735 = vmand %vm655, %vm454
          %vm736 = vmand %vm656, %vm455
          %s737 = sld [smem:[#allocation6 + $0xf]]
          %738 = vrot.lane.b32.xlu0 %v395, 95
          %v739 = vpop.permute.xlu0 %738
          %740 = vrot.lane.b32.xlu0 %v399, 95
          %v741 = vpop.permute.xlu0 %740
          %742 = vrot.lane.b32.xlu0 %v403, 95
          %v743 = vpop.permute.xlu0 %742
          %vm744 = vcmask 777216
          %v745 = vsel %vm744, %v739, %v741
          %v746 = vsel %vm744, %v741, %v743
          %v749 = vsel %vm735, %v745, 0.0
          %v750 = vsel %vm736, %v746, 0.0
          %v751 = vstv %s737
          %v752 = vmul.f32 %v751, %v749
          %v753 = vmul.f32 %v751, %v750
          %v754 = vadd.f32 %v733, %v752
          %v755 = vadd.f32 %v734, %v753
          %s756 = sld [smem:[#allocation6 + $0x40]]
          %757 = vrot.lane.b32.xlu0 %v428, 95
          %v758 = vpop.permute.xlu0 %757
          %759 = vrot.lane.b32.xlu0 %v432, 95
          %v760 = vpop.permute.xlu0 %759
          %761 = vrot.lane.b32.xlu0 %v436, 95
          %v762 = vpop.permute.xlu0 %761
          %v763 = vsel %vm744, %v758, %v760
          %v764 = vsel %vm744, %v760, %v762
          %v767 = vsel %vm735, %v763, 0.0
          %v768 = vsel %vm736, %v764, 0.0
          %v769 = vstv %s756
          %v770 = vmul.f32 %v769, %v767
          %v771 = vmul.f32 %v769, %v768
          %v772 = vadd.f32 %v754, %v770
          %v773 = vadd.f32 %v755, %v771
          %s774 = sld [smem:[#allocation6 + $0x16]]
          %775 = vrot.lane.b32.xlu0 %v395, 79
          %v776 = vpop.permute.xlu0 %775
          %777 = vrot.lane.b32.xlu0 %v399, 79
          %v778 = vpop.permute.xlu0 %777
          %779 = vrot.lane.b32.xlu0 %v403, 79
          %v780 = vpop.permute.xlu0 %779
          %vm781 = vcmask 646144
          %v782 = vsel %vm781, %v776, %v778
          %v783 = vsel %vm781, %v778, %v780
          %v786 = vsel %vm655, %v782, 0.0
          %v787 = vsel %vm656, %v783, 0.0
          %v788 = vstv %s774
          %v789 = vmul.f32 %v788, %v786
          %v790 = vmul.f32 %v788, %v787
          %v791 = vadd.f32 %v772, %v789
          %v792 = vadd.f32 %v773, %v790
          %s793 = sld [smem:[#allocation6 + $0x47]]
          %794 = vrot.lane.b32.xlu0 %v428, 79
          %v795 = vpop.permute.xlu0 %794
          %796 = vrot.lane.b32.xlu0 %v432, 79
          %v797 = vpop.permute.xlu0 %796
          %798 = vrot.lane.b32.xlu0 %v436, 79
          %v799 = vpop.permute.xlu0 %798
          %v800 = vsel %vm781, %v795, %v797
          %v801 = vsel %vm781, %v797, %v799
          %v804 = vsel %vm655, %v800, 0.0
          %v805 = vsel %vm656, %v801, 0.0
          %v806 = vstv %s793
          %v807 = vmul.f32 %v806, %v804
          %v808 = vmul.f32 %v806, %v805
          %v809 = vadd.f32 %v791, %v807
          %v810 = vadd.f32 %v792, %v808
          %vm811 = vmand %vm655, %vm532
          %vm812 = vmand %vm656, %vm533
          %s813 = sld [smem:[#allocation6 + $0x1d]]
          %814 = vrot.lane.b32.xlu0 %v395, 63
          %v815 = vpop.permute.xlu0 %814
          %816 = vrot.lane.b32.xlu0 %v399, 63
          %v817 = vpop.permute.xlu0 %816
          %818 = vrot.lane.b32.xlu0 %v403, 63
          %v819 = vpop.permute.xlu0 %818
          %vm820 = vcmask 515072
          %v821 = vsel %vm820, %v815, %v817
          %v822 = vsel %vm820, %v817, %v819
          %v825 = vsel %vm811, %v821, 0.0
          %v826 = vsel %vm812, %v822, 0.0
          %v827 = vstv %s813
          %v828 = vmul.f32 %v827, %v825
          %v829 = vmul.f32 %v827, %v826
          %v830 = vadd.f32 %v809, %v828
          %v831 = vadd.f32 %v810, %v829
          %s832 = sld [smem:[#allocation6 + $0x4e]]
          %833 = vrot.lane.b32.xlu0 %v428, 63
          %v834 = vpop.permute.xlu0 %833
          %835 = vrot.lane.b32.xlu0 %v432, 63
          %v836 = vpop.permute.xlu0 %835
          %837 = vrot.lane.b32.xlu0 %v436, 63
          %v838 = vpop.permute.xlu0 %837
          %v839 = vsel %vm820, %v834, %v836
          %v840 = vsel %vm820, %v836, %v838
          %v843 = vsel %vm811, %v839, 0.0
          %v844 = vsel %vm812, %v840, 0.0
          %v845 = vstv %s832
          %v846 = vmul.f32 %v845, %v843
          %v847 = vmul.f32 %v845, %v844
          %v848 = vadd.f32 %v830, %v846
          %v849 = vadd.f32 %v831, %v847
          %vm850 = vmand %vm655, %vm573
          %vm851 = vmand %vm656, %vm574
          %s852 = sld [smem:[#allocation6 + $0x24]]
          %853 = vrot.lane.b32.xlu0 %v395, 47
          %v854 = vpop.permute.xlu0 %853
          %855 = vrot.lane.b32.xlu0 %v399, 47
          %v856 = vpop.permute.xlu0 %855
          %857 = vrot.lane.b32.xlu0 %v403, 47
          %v858 = vpop.permute.xlu0 %857
          %vm859 = vcmask 384000
          %v860 = vsel %vm859, %v854, %v856
          %v861 = vsel %vm859, %v856, %v858
          %v864 = vsel %vm850, %v860, 0.0
          %v865 = vsel %vm851, %v861, 0.0
          %v866 = vstv %s852
          %v867 = vmul.f32 %v866, %v864
          %v868 = vmul.f32 %v866, %v865
          %v869 = vadd.f32 %v848, %v867
          %v870 = vadd.f32 %v849, %v868
          %s871 = sld [smem:[#allocation6 + $0x55]]
          %872 = vrot.lane.b32.xlu0 %v428, 47
          %v873 = vpop.permute.xlu0 %872
          %874 = vrot.lane.b32.xlu0 %v432, 47
          %v875 = vpop.permute.xlu0 %874
          %876 = vrot.lane.b32.xlu0 %v436, 47
          %v877 = vpop.permute.xlu0 %876
          %v878 = vsel %vm859, %v873, %v875
          %v879 = vsel %vm859, %v875, %v877
          %v882 = vsel %vm850, %v878, 0.0
          %v883 = vsel %vm851, %v879, 0.0
          %v884 = vstv %s871
          %v885 = vmul.f32 %v884, %v882
          %v886 = vmul.f32 %v884, %v883
          %v887 = vadd.f32 %v869, %v885
          %v888 = vadd.f32 %v870, %v886
          %vm889 = vmand %vm655, %vm614
          %vm890 = vmand %vm656, %vm615
          %s891 = sld [smem:[#allocation6 + $0x2b]]
          %892 = vrot.lane.b32.xlu0 %v395, 31
          %v893 = vpop.permute.xlu0 %892
          %894 = vrot.lane.b32.xlu0 %v399, 31
          %v895 = vpop.permute.xlu0 %894
          %896 = vrot.lane.b32.xlu0 %v403, 31
          %v897 = vpop.permute.xlu0 %896
          %vm898 = vcmask 252928
          %v899 = vsel %vm898, %v893, %v895
          %v900 = vsel %vm898, %v895, %v897
          %v903 = vsel %vm889, %v899, 0.0
          %v904 = vsel %vm890, %v900, 0.0
          %v905 = vstv %s891
          %v906 = vmul.f32 %v905, %v903
          %v907 = vmul.f32 %v905, %v904
          %v908 = vadd.f32 %v887, %v906
          %v909 = vadd.f32 %v888, %v907
          %s910 = sld [smem:[#allocation6 + $0x5c]]
          %911 = vrot.lane.b32.xlu0 %v428, 31
          %v912 = vpop.permute.xlu0 %911
          %913 = vrot.lane.b32.xlu0 %v432, 31
          %v914 = vpop.permute.xlu0 %913
          %915 = vrot.lane.b32.xlu0 %v436, 31
          %v916 = vpop.permute.xlu0 %915
          %v917 = vsel %vm898, %v912, %v914
          %v918 = vsel %vm898, %v914, %v916
          %v921 = vsel %vm889, %v917, 0.0
          %v922 = vsel %vm890, %v918, 0.0
          %v923 = vstv %s910
          %v924 = vmul.f32 %v923, %v921
          %v925 = vmul.f32 %v923, %v922
          %v926 = vadd.f32 %v908, %v924
          %v927 = vadd.f32 %v909, %v925
          %vm928 = vcmp.ge.s32.totalorder %v335, 1
          %vm929 = vcmp.ge.s32.totalorder %v336, 1
          %vm930 = vmand %vm928, %vm341
          %vm931 = vmand %vm929, %vm342
          %s932 = sld [smem:[#allocation6 + $0x2]]
          %933 = vrot.lane.b32.xlu0 %v395, 126
          %v934 = vpop.permute.xlu0 %933
          %935 = vrot.lane.b32.xlu0 %v399, 126
          %v936 = vpop.permute.xlu0 %935
          %937 = vrot.lane.b32.xlu0 %v403, 126
          %v938 = vpop.permute.xlu0 %937
          %vm939 = vcmask 1031168
          %v940 = vsel %vm939, %v934, %v936
          %v941 = vsel %vm939, %v936, %v938
          %v944 = vsel %vm930, %v940, 0.0
          %v945 = vsel %vm931, %v941, 0.0
          %v946 = vstv %s932
          %v947 = vmul.f32 %v946, %v944
          %v948 = vmul.f32 %v946, %v945
          %v949 = vadd.f32 %v926, %v947
          %v950 = vadd.f32 %v927, %v948
          %s951 = sld [smem:[#allocation6 + $0x33]]
          %952 = vrot.lane.b32.xlu0 %v428, 126
          %v953 = vpop.permute.xlu0 %952
          %954 = vrot.lane.b32.xlu0 %v432, 126
          %v955 = vpop.permute.xlu0 %954
          %956 = vrot.lane.b32.xlu0 %v436, 126
          %v957 = vpop.permute.xlu0 %956
          %v958 = vsel %vm939, %v953, %v955
          %v959 = vsel %vm939, %v955, %v957
          %v962 = vsel %vm930, %v958, 0.0
          %v963 = vsel %vm931, %v959, 0.0
          %v964 = vstv %s951
          %v965 = vmul.f32 %v964, %v962
          %v966 = vmul.f32 %v964, %v963
          %v967 = vadd.f32 %v949, %v965
          %v968 = vadd.f32 %v950, %v966
          %vm969 = vmand %vm928, %vm385
          %vm970 = vmand %vm929, %vm386
          %s971 = sld [smem:[#allocation6 + $0x9]]
          %972 = vrot.lane.b32.xlu0 %v395, 110
          %v973 = vpop.permute.xlu0 %972
          %974 = vrot.lane.b32.xlu0 %v399, 110
          %v975 = vpop.permute.xlu0 %974
          %976 = vrot.lane.b32.xlu0 %v403, 110
          %v977 = vpop.permute.xlu0 %976
          %vm978 = vcmask 900096
          %v979 = vsel %vm978, %v973, %v975
          %v980 = vsel %vm978, %v975, %v977
          %v983 = vsel %vm969, %v979, 0.0
          %v984 = vsel %vm970, %v980, 0.0
          %v985 = vstv %s971
          %v986 = vmul.f32 %v985, %v983
          %v987 = vmul.f32 %v985, %v984
          %v988 = vadd.f32 %v967, %v986
          %v989 = vadd.f32 %v968, %v987
          %s990 = sld [smem:[#allocation6 + $0x3a]]
          %991 = vrot.lane.b32.xlu0 %v428, 110
          %v992 = vpop.permute.xlu0 %991
          %993 = vrot.lane.b32.xlu0 %v432, 110
          %v994 = vpop.permute.xlu0 %993
          %995 = vrot.lane.b32.xlu0 %v436, 110
          %v996 = vpop.permute.xlu0 %995
          %v997 = vsel %vm978, %v992, %v994
          %v998 = vsel %vm978, %v994, %v996
          %v1001 = vsel %vm969, %v997, 0.0
          %v1002 = vsel %vm970, %v998, 0.0
          %v1003 = vstv %s990
          %v1004 = vmul.f32 %v1003, %v1001
          %v1005 = vmul.f32 %v1003, %v1002
          %v1006 = vadd.f32 %v988, %v1004
          %v1007 = vadd.f32 %v989, %v1005
          %vm1008 = vmand %vm928, %vm454
          %vm1009 = vmand %vm929, %vm455
          %s1010 = sld [smem:[#allocation6 + $0x10]]
          %1011 = vrot.lane.b32.xlu0 %v395, 94
          %v1012 = vpop.permute.xlu0 %1011
          %1013 = vrot.lane.b32.xlu0 %v399, 94
          %v1014 = vpop.permute.xlu0 %1013
          %1015 = vrot.lane.b32.xlu0 %v403, 94
          %v1016 = vpop.permute.xlu0 %1015
          %vm1017 = vcmask 769024
          %v1018 = vsel %vm1017, %v1012, %v1014
          %v1019 = vsel %vm1017, %v1014, %v1016
          %v1022 = vsel %vm1008, %v1018, 0.0
          %v1023 = vsel %vm1009, %v1019, 0.0
          %v1024 = vstv %s1010
          %v1025 = vmul.f32 %v1024, %v1022
          %v1026 = vmul.f32 %v1024, %v1023
          %v1027 = vadd.f32 %v1006, %v1025
          %v1028 = vadd.f32 %v1007, %v1026
          %s1029 = sld [smem:[#allocation6 + $0x41]]
          %1030 = vrot.lane.b32.xlu0 %v428, 94
          %v1031 = vpop.permute.xlu0 %1030
          %1032 = vrot.lane.b32.xlu0 %v432, 94
          %v1033 = vpop.permute.xlu0 %1032
          %1034 = vrot.lane.b32.xlu0 %v436, 94
          %v1035 = vpop.permute.xlu0 %1034
          %v1036 = vsel %vm1017, %v1031, %v1033
          %v1037 = vsel %vm1017, %v1033, %v1035
          %v1040 = vsel %vm1008, %v1036, 0.0
          %v1041 = vsel %vm1009, %v1037, 0.0
          %v1042 = vstv %s1029
          %v1043 = vmul.f32 %v1042, %v1040
          %v1044 = vmul.f32 %v1042, %v1041
          %v1045 = vadd.f32 %v1027, %v1043
          %v1046 = vadd.f32 %v1028, %v1044
          %s1047 = sld [smem:[#allocation6 + $0x17]]
          %1048 = vrot.lane.b32.xlu0 %v395, 78
          %v1049 = vpop.permute.xlu0 %1048
          %1050 = vrot.lane.b32.xlu0 %v399, 78
          %v1051 = vpop.permute.xlu0 %1050
          %1052 = vrot.lane.b32.xlu0 %v403, 78
          %v1053 = vpop.permute.xlu0 %1052
          %vm1054 = vcmask 637952
          %v1055 = vsel %vm1054, %v1049, %v1051
          %v1056 = vsel %vm1054, %v1051, %v1053
          %v1059 = vsel %vm928, %v1055, 0.0
          %v1060 = vsel %vm929, %v1056, 0.0
          %v1061 = vstv %s1047
          %v1062 = vmul.f32 %v1061, %v1059
          %v1063 = vmul.f32 %v1061, %v1060
          %v1064 = vadd.f32 %v1045, %v1062
          %v1065 = vadd.f32 %v1046, %v1063
          %s1066 = sld [smem:[#allocation6 + $0x48]]
          %1067 = vrot.lane.b32.xlu0 %v428, 78
          %v1068 = vpop.permute.xlu0 %1067
          %1069 = vrot.lane.b32.xlu0 %v432, 78
          %v1070 = vpop.permute.xlu0 %1069
          %1071 = vrot.lane.b32.xlu0 %v436, 78
          %v1072 = vpop.permute.xlu0 %1071
          %v1073 = vsel %vm1054, %v1068, %v1070
          %v1074 = vsel %vm1054, %v1070, %v1072
          %v1077 = vsel %vm928, %v1073, 0.0
          %v1078 = vsel %vm929, %v1074, 0.0
          %v1079 = vstv %s1066
          %v1080 = vmul.f32 %v1079, %v1077
          %v1081 = vmul.f32 %v1079, %v1078
          %v1082 = vadd.f32 %v1064, %v1080
          %v1083 = vadd.f32 %v1065, %v1081
          %vm1084 = vmand %vm928, %vm532
          %vm1085 = vmand %vm929, %vm533
          %s1086 = sld [smem:[#allocation6 + $0x1e]]
          %1087 = vrot.lane.b32.xlu0 %v395, 62
          %v1088 = vpop.permute.xlu0 %1087
          %1089 = vrot.lane.b32.xlu0 %v399, 62
          %v1090 = vpop.permute.xlu0 %1089
          %1091 = vrot.lane.b32.xlu0 %v403, 62
          %v1092 = vpop.permute.xlu0 %1091
          %vm1093 = vcmask 506880
          %v1094 = vsel %vm1093, %v1088, %v1090
          %v1095 = vsel %vm1093, %v1090, %v1092
          %v1098 = vsel %vm1084, %v1094, 0.0
          %v1099 = vsel %vm1085, %v1095, 0.0
          %v1100 = vstv %s1086
          %v1101 = vmul.f32 %v1100, %v1098
          %v1102 = vmul.f32 %v1100, %v1099
          %v1103 = vadd.f32 %v1082, %v1101
          %v1104 = vadd.f32 %v1083, %v1102
          %s1105 = sld [smem:[#allocation6 + $0x4f]]
          %1106 = vrot.lane.b32.xlu0 %v428, 62
          %v1107 = vpop.permute.xlu0 %1106
          %1108 = vrot.lane.b32.xlu0 %v432, 62
          %v1109 = vpop.permute.xlu0 %1108
          %1110 = vrot.lane.b32.xlu0 %v436, 62
          %v1111 = vpop.permute.xlu0 %1110
          %v1112 = vsel %vm1093, %v1107, %v1109
          %v1113 = vsel %vm1093, %v1109, %v1111
          %v1116 = vsel %vm1084, %v1112, 0.0
          %v1117 = vsel %vm1085, %v1113, 0.0
          %v1118 = vstv %s1105
          %v1119 = vmul.f32 %v1118, %v1116
          %v1120 = vmul.f32 %v1118, %v1117
          %v1121 = vadd.f32 %v1103, %v1119
          %v1122 = vadd.f32 %v1104, %v1120
          %vm1123 = vmand %vm928, %vm573
          %vm1124 = vmand %vm929, %vm574
          %s1125 = sld [smem:[#allocation6 + $0x25]]
          %1126 = vrot.lane.b32.xlu0 %v395, 46
          %v1127 = vpop.permute.xlu0 %1126
          %1128 = vrot.lane.b32.xlu0 %v399, 46
          %v1129 = vpop.permute.xlu0 %1128
          %1130 = vrot.lane.b32.xlu0 %v403, 46
          %v1131 = vpop.permute.xlu0 %1130
          %vm1132 = vcmask 375808
          %v1133 = vsel %vm1132, %v1127, %v1129
          %v1134 = vsel %vm1132, %v1129, %v1131
          %v1137 = vsel %vm1123, %v1133, 0.0
          %v1138 = vsel %vm1124, %v1134, 0.0
          %v1139 = vstv %s1125
          %v1140 = vmul.f32 %v1139, %v1137
          %v1141 = vmul.f32 %v1139, %v1138
          %v1142 = vadd.f32 %v1121, %v1140
          %v1143 = vadd.f32 %v1122, %v1141
          %s1144 = sld [smem:[#allocation6 + $0x56]]
          %1145 = vrot.lane.b32.xlu0 %v428, 46
          %v1146 = vpop.permute.xlu0 %1145
          %1147 = vrot.lane.b32.xlu0 %v432, 46
          %v1148 = vpop.permute.xlu0 %1147
          %1149 = vrot.lane.b32.xlu0 %v436, 46
          %v1150 = vpop.permute.xlu0 %1149
          %v1151 = vsel %vm1132, %v1146, %v1148
          %v1152 = vsel %vm1132, %v1148, %v1150
          %v1155 = vsel %vm1123, %v1151, 0.0
          %v1156 = vsel %vm1124, %v1152, 0.0
          %v1157 = vstv %s1144
          %v1158 = vmul.f32 %v1157, %v1155
          %v1159 = vmul.f32 %v1157, %v1156
          %v1160 = vadd.f32 %v1142, %v1158
          %v1161 = vadd.f32 %v1143, %v1159
          %vm1162 = vmand %vm928, %vm614
          %vm1163 = vmand %vm929, %vm615
          %s1164 = sld [smem:[#allocation6 + $0x2c]]
          %1165 = vrot.lane.b32.xlu0 %v395, 30
          %v1166 = vpop.permute.xlu0 %1165
          %1167 = vrot.lane.b32.xlu0 %v399, 30
          %v1168 = vpop.permute.xlu0 %1167
          %1169 = vrot.lane.b32.xlu0 %v403, 30
          %v1170 = vpop.permute.xlu0 %1169
          %vm1171 = vcmask 244736
          %v1172 = vsel %vm1171, %v1166, %v1168
          %v1173 = vsel %vm1171, %v1168, %v1170
          %v1176 = vsel %vm1162, %v1172, 0.0
          %v1177 = vsel %vm1163, %v1173, 0.0
          %v1178 = vstv %s1164
          %v1179 = vmul.f32 %v1178, %v1176
          %v1180 = vmul.f32 %v1178, %v1177
          %v1181 = vadd.f32 %v1160, %v1179
          %v1182 = vadd.f32 %v1161, %v1180
          %s1183 = sld [smem:[#allocation6 + $0x5d]]
          %1184 = vrot.lane.b32.xlu0 %v428, 30
          %v1185 = vpop.permute.xlu0 %1184
          %1186 = vrot.lane.b32.xlu0 %v432, 30
          %v1187 = vpop.permute.xlu0 %1186
          %1188 = vrot.lane.b32.xlu0 %v436, 30
          %v1189 = vpop.permute.xlu0 %1188
          %v1190 = vsel %vm1171, %v1185, %v1187
          %v1191 = vsel %vm1171, %v1187, %v1189
          %v1194 = vsel %vm1162, %v1190, 0.0
          %v1195 = vsel %vm1163, %v1191, 0.0
          %v1196 = vstv %s1183
          %v1197 = vmul.f32 %v1196, %v1194
          %v1198 = vmul.f32 %v1196, %v1195
          %v1199 = vadd.f32 %v1181, %v1197
          %v1200 = vadd.f32 %v1182, %v1198
          %s1201 = sld [smem:[#allocation6 + $0x3]]
          %1202 = vrot.lane.b32.xlu0 %v395, 125
          %v1203 = vpop.permute.xlu0 %1202
          %1204 = vrot.lane.b32.xlu0 %v399, 125
          %v1205 = vpop.permute.xlu0 %1204
          %1206 = vrot.lane.b32.xlu0 %v403, 125
          %v1207 = vpop.permute.xlu0 %1206
          %vm1208 = vcmask 1022976
          %v1209 = vsel %vm1208, %v1203, %v1205
          %v1210 = vsel %vm1208, %v1205, %v1207
          %v1213 = vsel %vm341, %v1209, 0.0
          %v1214 = vsel %vm342, %v1210, 0.0
          %v1215 = vstv %s1201
          %v1216 = vmul.f32 %v1215, %v1213
          %v1217 = vmul.f32 %v1215, %v1214
          %v1218 = vadd.f32 %v1199, %v1216
          %v1219 = vadd.f32 %v1200, %v1217
          %s1220 = sld [smem:[#allocation6 + $0x34]]
          %1221 = vrot.lane.b32.xlu0 %v428, 125
          %v1222 = vpop.permute.xlu0 %1221
          %1223 = vrot.lane.b32.xlu0 %v432, 125
          %v1224 = vpop.permute.xlu0 %1223
          %1225 = vrot.lane.b32.xlu0 %v436, 125
          %v1226 = vpop.permute.xlu0 %1225
          %v1227 = vsel %vm1208, %v1222, %v1224
          %v1228 = vsel %vm1208, %v1224, %v1226
          %v1231 = vsel %vm341, %v1227, 0.0
          %v1232 = vsel %vm342, %v1228, 0.0
          %v1233 = vstv %s1220
          %v1234 = vmul.f32 %v1233, %v1231
          %v1235 = vmul.f32 %v1233, %v1232
          %v1236 = vadd.f32 %v1218, %v1234
          %v1237 = vadd.f32 %v1219, %v1235
          %s1238 = sld [smem:[#allocation6 + $0xa]]
          %1239 = vrot.lane.b32.xlu0 %v395, 109
          %v1240 = vpop.permute.xlu0 %1239
          %1241 = vrot.lane.b32.xlu0 %v399, 109
          %v1242 = vpop.permute.xlu0 %1241
          %1243 = vrot.lane.b32.xlu0 %v403, 109
          %v1244 = vpop.permute.xlu0 %1243
          %vm1245 = vcmask 891904
          %v1246 = vsel %vm1245, %v1240, %v1242
          %v1247 = vsel %vm1245, %v1242, %v1244
          %v1250 = vsel %vm385, %v1246, 0.0
          %v1251 = vsel %vm386, %v1247, 0.0
          %v1252 = vstv %s1238
          %v1253 = vmul.f32 %v1252, %v1250
          %v1254 = vmul.f32 %v1252, %v1251
          %v1255 = vadd.f32 %v1236, %v1253
          %v1256 = vadd.f32 %v1237, %v1254
          %s1257 = sld [smem:[#allocation6 + $0x3b]]
          %1258 = vrot.lane.b32.xlu0 %v428, 109
          %v1259 = vpop.permute.xlu0 %1258
          %1260 = vrot.lane.b32.xlu0 %v432, 109
          %v1261 = vpop.permute.xlu0 %1260
          %1262 = vrot.lane.b32.xlu0 %v436, 109
          %v1263 = vpop.permute.xlu0 %1262
          %v1264 = vsel %vm1245, %v1259, %v1261
          %v1265 = vsel %vm1245, %v1261, %v1263
          %v1268 = vsel %vm385, %v1264, 0.0
          %v1269 = vsel %vm386, %v1265, 0.0
          %v1270 = vstv %s1257
          %v1271 = vmul.f32 %v1270, %v1268
          %v1272 = vmul.f32 %v1270, %v1269
          %v1273 = vadd.f32 %v1255, %v1271
          %v1274 = vadd.f32 %v1256, %v1272
          %s1275 = sld [smem:[#allocation6 + $0x11]]
          %1276 = vrot.lane.b32.xlu0 %v395, 93
          %v1277 = vpop.permute.xlu0 %1276
          %1278 = vrot.lane.b32.xlu0 %v399, 93
          %v1279 = vpop.permute.xlu0 %1278
          %1280 = vrot.lane.b32.xlu0 %v403, 93
          %v1281 = vpop.permute.xlu0 %1280
          %vm1282 = vcmask 760832
          %v1283 = vsel %vm1282, %v1277, %v1279
          %v1284 = vsel %vm1282, %v1279, %v1281
          %v1287 = vsel %vm454, %v1283, 0.0
          %v1288 = vsel %vm455, %v1284, 0.0
          %v1289 = vstv %s1275
          %v1290 = vmul.f32 %v1289, %v1287
          %v1291 = vmul.f32 %v1289, %v1288
          %v1292 = vadd.f32 %v1273, %v1290
          %v1293 = vadd.f32 %v1274, %v1291
          %s1294 = sld [smem:[#allocation6 + $0x42]]
          %1295 = vrot.lane.b32.xlu0 %v428, 93
          %v1296 = vpop.permute.xlu0 %1295
          %1297 = vrot.lane.b32.xlu0 %v432, 93
          %v1298 = vpop.permute.xlu0 %1297
          %1299 = vrot.lane.b32.xlu0 %v436, 93
          %v1300 = vpop.permute.xlu0 %1299
          %v1301 = vsel %vm1282, %v1296, %v1298
          %v1302 = vsel %vm1282, %v1298, %v1300
          %v1305 = vsel %vm454, %v1301, 0.0
          %v1306 = vsel %vm455, %v1302, 0.0
          %v1307 = vstv %s1294
          %v1308 = vmul.f32 %v1307, %v1305
          %v1309 = vmul.f32 %v1307, %v1306
          %v1310 = vadd.f32 %v1292, %v1308
          %v1311 = vadd.f32 %v1293, %v1309
          %s1312 = sld [smem:[#allocation6 + $0x18]]
          %v1313 = vstv %s1312
          %v1314 = vmul.f32 %v1313, %v390
          %v1316 = vlaneseq
          %v1317 = vshrl.u32 %v1316, 7
          %v1318 = vsub.s32 0, %v1317
          %v1319 = vrot.slane %v1314, %v1318
          %v1320 = vlaneseq
          %v1321 = vshrl.u32 %v1320, 7
          %v1322 = vsub.s32 1, %v1321
          %v1323 = vrot.slane %v1314, %v1322
          %v1324 = vlaneseq
          %v1325 = vshrl.u32 %v1324, 7
          %v1326 = vsub.s32 2, %v1325
          %v1327 = vrot.slane %v1314, %v1326
          %1328 = vrot.lane.b32.xlu0 %v1319, 77
          %v1329 = vpop.permute.xlu0 %1328
          %1330 = vrot.lane.b32.xlu0 %v1323, 77
          %v1331 = vpop.permute.xlu0 %1330
          %1332 = vrot.lane.b32.xlu0 %v1327, 77
          %v1333 = vpop.permute.xlu0 %1332
          %vm1334 = vcmask 629760
          %v1335 = vsel %vm1334, %v1329, %v1331
          %v1336 = vsel %vm1334, %v1331, %v1333
          %v1339 = vadd.f32 %v1310, %v1335
          %v1340 = vadd.f32 %v1311, %v1336
          %s1341 = sld [smem:[#allocation6 + $0x49]]
          %v1342 = vstv %s1341
          %v1343 = vmul.f32 %v1342, %v423
          %v1345 = vlaneseq
          %v1346 = vshrl.u32 %v1345, 7
          %v1347 = vsub.s32 0, %v1346
          %v1348 = vrot.slane %v1343, %v1347
          %v1349 = vlaneseq
          %v1350 = vshrl.u32 %v1349, 7
          %v1351 = vsub.s32 1, %v1350
          %v1352 = vrot.slane %v1343, %v1351
          %v1353 = vlaneseq
          %v1354 = vshrl.u32 %v1353, 7
          %v1355 = vsub.s32 2, %v1354
          %v1356 = vrot.slane %v1343, %v1355
          %1357 = vrot.lane.b32.xlu0 %v1348, 77
          %v1358 = vpop.permute.xlu0 %1357
          %1359 = vrot.lane.b32.xlu0 %v1352, 77
          %v1360 = vpop.permute.xlu0 %1359
          %1361 = vrot.lane.b32.xlu0 %v1356, 77
          %v1362 = vpop.permute.xlu0 %1361
          %v1363 = vsel %vm1334, %v1358, %v1360
          %v1364 = vsel %vm1334, %v1360, %v1362
          %v1367 = vadd.f32 %v1339, %v1363
          %v1368 = vadd.f32 %v1340, %v1364
          %s1369 = sld [smem:[#allocation6 + $0x1f]]
          %1370 = vrot.lane.b32.xlu0 %v395, 61
          %v1371 = vpop.permute.xlu0 %1370
          %1372 = vrot.lane.b32.xlu0 %v399, 61
          %v1373 = vpop.permute.xlu0 %1372
          %1374 = vrot.lane.b32.xlu0 %v403, 61
          %v1375 = vpop.permute.xlu0 %1374
          %vm1376 = vcmask 498688
          %v1377 = vsel %vm1376, %v1371, %v1373
          %v1378 = vsel %vm1376, %v1373, %v1375
          %v1381 = vsel %vm532, %v1377, 0.0
          %v1382 = vsel %vm533, %v1378, 0.0
          %v1383 = vstv %s1369
          %v1384 = vmul.f32 %v1383, %v1381
          %v1385 = vmul.f32 %v1383, %v1382
          %v1386 = vadd.f32 %v1367, %v1384
          %v1387 = vadd.f32 %v1368, %v1385
          %s1388 = sld [smem:[#allocation6 + $0x50]]
          %1389 = vrot.lane.b32.xlu0 %v428, 61
          %v1390 = vpop.permute.xlu0 %1389
          %1391 = vrot.lane.b32.xlu0 %v432, 61
          %v1392 = vpop.permute.xlu0 %1391
          %1393 = vrot.lane.b32.xlu0 %v436, 61
          %v1394 = vpop.permute.xlu0 %1393
          %v1395 = vsel %vm1376, %v1390, %v1392
          %v1396 = vsel %vm1376, %v1392, %v1394
          %v1399 = vsel %vm532, %v1395, 0.0
          %v1400 = vsel %vm533, %v1396, 0.0
          %v1401 = vstv %s1388
          %v1402 = vmul.f32 %v1401, %v1399
          %v1403 = vmul.f32 %v1401, %v1400
          %v1404 = vadd.f32 %v1386, %v1402
          %v1405 = vadd.f32 %v1387, %v1403
          %s1406 = sld [smem:[#allocation6 + $0x26]]
          %1407 = vrot.lane.b32.xlu0 %v395, 45
          %v1408 = vpop.permute.xlu0 %1407
          %1409 = vrot.lane.b32.xlu0 %v399, 45
          %v1410 = vpop.permute.xlu0 %1409
          %1411 = vrot.lane.b32.xlu0 %v403, 45
          %v1412 = vpop.permute.xlu0 %1411
          %vm1413 = vcmask 367616
          %v1414 = vsel %vm1413, %v1408, %v1410
          %v1415 = vsel %vm1413, %v1410, %v1412
          %v1418 = vsel %vm573, %v1414, 0.0
          %v1419 = vsel %vm574, %v1415, 0.0
          %v1420 = vstv %s1406
          %v1421 = vmul.f32 %v1420, %v1418
          %v1422 = vmul.f32 %v1420, %v1419
          %v1423 = vadd.f32 %v1404, %v1421
          %v1424 = vadd.f32 %v1405, %v1422
          %s1425 = sld [smem:[#allocation6 + $0x57]]
          %1426 = vrot.lane.b32.xlu0 %v428, 45
          %v1427 = vpop.permute.xlu0 %1426
          %1428 = vrot.lane.b32.xlu0 %v432, 45
          %v1429 = vpop.permute.xlu0 %1428
          %1430 = vrot.lane.b32.xlu0 %v436, 45
          %v1431 = vpop.permute.xlu0 %1430
          %v1432 = vsel %vm1413, %v1427, %v1429
          %v1433 = vsel %vm1413, %v1429, %v1431
          %v1436 = vsel %vm573, %v1432, 0.0
          %v1437 = vsel %vm574, %v1433, 0.0
          %v1438 = vstv %s1425
          %v1439 = vmul.f32 %v1438, %v1436
          %v1440 = vmul.f32 %v1438, %v1437
          %v1441 = vadd.f32 %v1423, %v1439
          %v1442 = vadd.f32 %v1424, %v1440
          %s1443 = sld [smem:[#allocation6 + $0x2d]]
          %1444 = vrot.lane.b32.xlu0 %v395, 29
          %v1445 = vpop.permute.xlu0 %1444
          %1446 = vrot.lane.b32.xlu0 %v399, 29
          %v1447 = vpop.permute.xlu0 %1446
          %1448 = vrot.lane.b32.xlu0 %v403, 29
          %v1449 = vpop.permute.xlu0 %1448
          %vm1450 = vcmask 236544
          %v1451 = vsel %vm1450, %v1445, %v1447
          %v1452 = vsel %vm1450, %v1447, %v1449
          %v1455 = vsel %vm614, %v1451, 0.0
          %v1456 = vsel %vm615, %v1452, 0.0
          %v1457 = vstv %s1443
          %v1458 = vmul.f32 %v1457, %v1455
          %v1459 = vmul.f32 %v1457, %v1456
          %v1460 = vadd.f32 %v1441, %v1458
          %v1461 = vadd.f32 %v1442, %v1459
          %s1462 = sld [smem:[#allocation6 + $0x5e]]
          %1463 = vrot.lane.b32.xlu0 %v428, 29
          %v1464 = vpop.permute.xlu0 %1463
          %1465 = vrot.lane.b32.xlu0 %v432, 29
          %v1466 = vpop.permute.xlu0 %1465
          %1467 = vrot.lane.b32.xlu0 %v436, 29
          %v1468 = vpop.permute.xlu0 %1467
          %v1469 = vsel %vm1450, %v1464, %v1466
          %v1470 = vsel %vm1450, %v1466, %v1468
          %v1473 = vsel %vm614, %v1469, 0.0
          %v1474 = vsel %vm615, %v1470, 0.0
          %v1475 = vstv %s1462
          %v1476 = vmul.f32 %v1475, %v1473
          %v1477 = vmul.f32 %v1475, %v1474
          %v1478 = vadd.f32 %v1460, %v1476
          %v1479 = vadd.f32 %v1461, %v1477
          %vm1480 = vcmp.lt.s32.totalorder %v335, 15
          %vm1481 = vcmp.lt.s32.totalorder %v336, 15
          %vm1482 = vmand %vm1480, %vm341
          %vm1483 = vmand %vm1481, %vm342
          %s1484 = sld [smem:[#allocation6 + $0x4]]
          %1485 = vrot.lane.b32.xlu0 %v395, 124
          %v1486 = vpop.permute.xlu0 %1485
          %1487 = vrot.lane.b32.xlu0 %v399, 124
          %v1488 = vpop.permute.xlu0 %1487
          %1489 = vrot.lane.b32.xlu0 %v403, 124
          %v1490 = vpop.permute.xlu0 %1489
          %vm1491 = vcmask 1014784
          %v1492 = vsel %vm1491, %v1486, %v1488
          %v1493 = vsel %vm1491, %v1488, %v1490
          %v1496 = vsel %vm1482, %v1492, 0.0
          %v1497 = vsel %vm1483, %v1493, 0.0
          %v1498 = vstv %s1484
          %v1499 = vmul.f32 %v1498, %v1496
          %v1500 = vmul.f32 %v1498, %v1497
          %v1501 = vadd.f32 %v1478, %v1499
          %v1502 = vadd.f32 %v1479, %v1500
          %s1503 = sld [smem:[#allocation6 + $0x35]]
          %1504 = vrot.lane.b32.xlu0 %v428, 124
          %v1505 = vpop.permute.xlu0 %1504
          %1506 = vrot.lane.b32.xlu0 %v432, 124
          %v1507 = vpop.permute.xlu0 %1506
          %1508 = vrot.lane.b32.xlu0 %v436, 124
          %v1509 = vpop.permute.xlu0 %1508
          %v1510 = vsel %vm1491, %v1505, %v1507
          %v1511 = vsel %vm1491, %v1507, %v1509
          %v1514 = vsel %vm1482, %v1510, 0.0
          %v1515 = vsel %vm1483, %v1511, 0.0
          %v1516 = vstv %s1503
          %v1517 = vmul.f32 %v1516, %v1514
          %v1518 = vmul.f32 %v1516, %v1515
          %v1519 = vadd.f32 %v1501, %v1517
          %v1520 = vadd.f32 %v1502, %v1518
          %vm1521 = vmand %vm1480, %vm385
          %vm1522 = vmand %vm1481, %vm386
          %s1523 = sld [smem:[#allocation6 + $0xb]]
          %1524 = vrot.lane.b32.xlu0 %v395, 108
          %v1525 = vpop.permute.xlu0 %1524
          %1526 = vrot.lane.b32.xlu0 %v399, 108
          %v1527 = vpop.permute.xlu0 %1526
          %1528 = vrot.lane.b32.xlu0 %v403, 108
          %v1529 = vpop.permute.xlu0 %1528
          %vm1530 = vcmask 883712
          %v1531 = vsel %vm1530, %v1525, %v1527
          %v1532 = vsel %vm1530, %v1527, %v1529
          %v1535 = vsel %vm1521, %v1531, 0.0
          %v1536 = vsel %vm1522, %v1532, 0.0
          %v1537 = vstv %s1523
          %v1538 = vmul.f32 %v1537, %v1535
          %v1539 = vmul.f32 %v1537, %v1536
          %v1540 = vadd.f32 %v1519, %v1538
          %v1541 = vadd.f32 %v1520, %v1539
          %s1542 = sld [smem:[#allocation6 + $0x3c]]
          %1543 = vrot.lane.b32.xlu0 %v428, 108
          %v1544 = vpop.permute.xlu0 %1543
          %1545 = vrot.lane.b32.xlu0 %v432, 108
          %v1546 = vpop.permute.xlu0 %1545
          %1547 = vrot.lane.b32.xlu0 %v436, 108
          %v1548 = vpop.permute.xlu0 %1547
          %v1549 = vsel %vm1530, %v1544, %v1546
          %v1550 = vsel %vm1530, %v1546, %v1548
          %v1553 = vsel %vm1521, %v1549, 0.0
          %v1554 = vsel %vm1522, %v1550, 0.0
          %v1555 = vstv %s1542
          %v1556 = vmul.f32 %v1555, %v1553
          %v1557 = vmul.f32 %v1555, %v1554
          %v1558 = vadd.f32 %v1540, %v1556
          %v1559 = vadd.f32 %v1541, %v1557
          %vm1560 = vmand %vm1480, %vm454
          %vm1561 = vmand %vm1481, %vm455
          %s1562 = sld [smem:[#allocation6 + $0x12]]
          %1563 = vrot.lane.b32.xlu0 %v395, 92
          %v1564 = vpop.permute.xlu0 %1563
          %1565 = vrot.lane.b32.xlu0 %v399, 92
          %v1566 = vpop.permute.xlu0 %1565
          %1567 = vrot.lane.b32.xlu0 %v403, 92
          %v1568 = vpop.permute.xlu0 %1567
          %vm1569 = vcmask 752640
          %v1570 = vsel %vm1569, %v1564, %v1566
          %v1571 = vsel %vm1569, %v1566, %v1568
          %v1574 = vsel %vm1560, %v1570, 0.0
          %v1575 = vsel %vm1561, %v1571, 0.0
          %v1576 = vstv %s1562
          %v1577 = vmul.f32 %v1576, %v1574
          %v1578 = vmul.f32 %v1576, %v1575
          %v1579 = vadd.f32 %v1558, %v1577
          %v1580 = vadd.f32 %v1559, %v1578
          %s1581 = sld [smem:[#allocation6 + $0x43]]
          %1582 = vrot.lane.b32.xlu0 %v428, 92
          %v1583 = vpop.permute.xlu0 %1582
          %1584 = vrot.lane.b32.xlu0 %v432, 92
          %v1585 = vpop.permute.xlu0 %1584
          %1586 = vrot.lane.b32.xlu0 %v436, 92
          %v1587 = vpop.permute.xlu0 %1586
          %v1588 = vsel %vm1569, %v1583, %v1585
          %v1589 = vsel %vm1569, %v1585, %v1587
          %v1592 = vsel %vm1560, %v1588, 0.0
          %v1593 = vsel %vm1561, %v1589, 0.0
          %v1594 = vstv %s1581
          %v1595 = vmul.f32 %v1594, %v1592
          %v1596 = vmul.f32 %v1594, %v1593
          %v1597 = vadd.f32 %v1579, %v1595
          %v1598 = vadd.f32 %v1580, %v1596
          %s1599 = sld [smem:[#allocation6 + $0x19]]
          %1600 = vrot.lane.b32.xlu0 %v395, 76
          %v1601 = vpop.permute.xlu0 %1600
          %1602 = vrot.lane.b32.xlu0 %v399, 76
          %v1603 = vpop.permute.xlu0 %1602
          %1604 = vrot.lane.b32.xlu0 %v403, 76
          %v1605 = vpop.permute.xlu0 %1604
          %vm1606 = vcmask 621568
          %v1607 = vsel %vm1606, %v1601, %v1603
          %v1608 = vsel %vm1606, %v1603, %v1605
          %v1611 = vsel %vm1480, %v1607, 0.0
          %v1612 = vsel %vm1481, %v1608, 0.0
          %v1613 = vstv %s1599
          %v1614 = vmul.f32 %v1613, %v1611
          %v1615 = vmul.f32 %v1613, %v1612
          %v1616 = vadd.f32 %v1597, %v1614
          %v1617 = vadd.f32 %v1598, %v1615
          %s1618 = sld [smem:[#allocation6 + $0x4a]]
          %1619 = vrot.lane.b32.xlu0 %v428, 76
          %v1620 = vpop.permute.xlu0 %1619
          %1621 = vrot.lane.b32.xlu0 %v432, 76
          %v1622 = vpop.permute.xlu0 %1621
          %1623 = vrot.lane.b32.xlu0 %v436, 76
          %v1624 = vpop.permute.xlu0 %1623
          %v1625 = vsel %vm1606, %v1620, %v1622
          %v1626 = vsel %vm1606, %v1622, %v1624
          %v1629 = vsel %vm1480, %v1625, 0.0
          %v1630 = vsel %vm1481, %v1626, 0.0
          %v1631 = vstv %s1618
          %v1632 = vmul.f32 %v1631, %v1629
          %v1633 = vmul.f32 %v1631, %v1630
          %v1634 = vadd.f32 %v1616, %v1632
          %v1635 = vadd.f32 %v1617, %v1633
          %vm1636 = vmand %vm1480, %vm532
          %vm1637 = vmand %vm1481, %vm533
          %s1638 = sld [smem:[#allocation6 + $0x20]]
          %1639 = vrot.lane.b32.xlu0 %v395, 60
          %v1640 = vpop.permute.xlu0 %1639
          %1641 = vrot.lane.b32.xlu0 %v399, 60
          %v1642 = vpop.permute.xlu0 %1641
          %1643 = vrot.lane.b32.xlu0 %v403, 60
          %v1644 = vpop.permute.xlu0 %1643
          %vm1645 = vcmask 490496
          %v1646 = vsel %vm1645, %v1640, %v1642
          %v1647 = vsel %vm1645, %v1642, %v1644
          %v1650 = vsel %vm1636, %v1646, 0.0
          %v1651 = vsel %vm1637, %v1647, 0.0
          %v1652 = vstv %s1638
          %v1653 = vmul.f32 %v1652, %v1650
          %v1654 = vmul.f32 %v1652, %v1651
          %v1655 = vadd.f32 %v1634, %v1653
          %v1656 = vadd.f32 %v1635, %v1654
          %s1657 = sld [smem:[#allocation6 + $0x51]]
          %1658 = vrot.lane.b32.xlu0 %v428, 60
          %v1659 = vpop.permute.xlu0 %1658
          %1660 = vrot.lane.b32.xlu0 %v432, 60
          %v1661 = vpop.permute.xlu0 %1660
          %1662 = vrot.lane.b32.xlu0 %v436, 60
          %v1663 = vpop.permute.xlu0 %1662
          %v1664 = vsel %vm1645, %v1659, %v1661
          %v1665 = vsel %vm1645, %v1661, %v1663
          %v1668 = vsel %vm1636, %v1664, 0.0
          %v1669 = vsel %vm1637, %v1665, 0.0
          %v1670 = vstv %s1657
          %v1671 = vmul.f32 %v1670, %v1668
          %v1672 = vmul.f32 %v1670, %v1669
          %v1673 = vadd.f32 %v1655, %v1671
          %v1674 = vadd.f32 %v1656, %v1672
          %vm1675 = vmand %vm1480, %vm573
          %vm1676 = vmand %vm1481, %vm574
          %s1677 = sld [smem:[#allocation6 + $0x27]]
          %1678 = vrot.lane.b32.xlu0 %v395, 44
          %v1679 = vpop.permute.xlu0 %1678
          %1680 = vrot.lane.b32.xlu0 %v399, 44
          %v1681 = vpop.permute.xlu0 %1680
          %1682 = vrot.lane.b32.xlu0 %v403, 44
          %v1683 = vpop.permute.xlu0 %1682
          %vm1684 = vcmask 359424
          %v1685 = vsel %vm1684, %v1679, %v1681
          %v1686 = vsel %vm1684, %v1681, %v1683
          %v1689 = vsel %vm1675, %v1685, 0.0
          %v1690 = vsel %vm1676, %v1686, 0.0
          %v1691 = vstv %s1677
          %v1692 = vmul.f32 %v1691, %v1689
          %v1693 = vmul.f32 %v1691, %v1690
          %v1694 = vadd.f32 %v1673, %v1692
          %v1695 = vadd.f32 %v1674, %v1693
          %s1696 = sld [smem:[#allocation6 + $0x58]]
          %1697 = vrot.lane.b32.xlu0 %v428, 44
          %v1698 = vpop.permute.xlu0 %1697
          %1699 = vrot.lane.b32.xlu0 %v432, 44
          %v1700 = vpop.permute.xlu0 %1699
          %1701 = vrot.lane.b32.xlu0 %v436, 44
          %v1702 = vpop.permute.xlu0 %1701
          %v1703 = vsel %vm1684, %v1698, %v1700
          %v1704 = vsel %vm1684, %v1700, %v1702
          %v1707 = vsel %vm1675, %v1703, 0.0
          %v1708 = vsel %vm1676, %v1704, 0.0
          %v1709 = vstv %s1696
          %v1710 = vmul.f32 %v1709, %v1707
          %v1711 = vmul.f32 %v1709, %v1708
          %v1712 = vadd.f32 %v1694, %v1710
          %v1713 = vadd.f32 %v1695, %v1711
          %vm1714 = vmand %vm1480, %vm614
          %vm1715 = vmand %vm1481, %vm615
          %s1716 = sld [smem:[#allocation6 + $0x2e]]
          %1717 = vrot.lane.b32.xlu0 %v395, 28
          %v1718 = vpop.permute.xlu0 %1717
          %1719 = vrot.lane.b32.xlu0 %v399, 28
          %v1720 = vpop.permute.xlu0 %1719
          %1721 = vrot.lane.b32.xlu0 %v403, 28
          %v1722 = vpop.permute.xlu0 %1721
          %vm1723 = vcmask 228352
          %v1724 = vsel %vm1723, %v1718, %v1720
          %v1725 = vsel %vm1723, %v1720, %v1722
          %v1728 = vsel %vm1714, %v1724, 0.0
          %v1729 = vsel %vm1715, %v1725, 0.0
          %v1730 = vstv %s1716
          %v1731 = vmul.f32 %v1730, %v1728
          %v1732 = vmul.f32 %v1730, %v1729
          %v1733 = vadd.f32 %v1712, %v1731
          %v1734 = vadd.f32 %v1713, %v1732
          %s1735 = sld [smem:[#allocation6 + $0x5f]]
          %1736 = vrot.lane.b32.xlu0 %v428, 28
          %v1737 = vpop.permute.xlu0 %1736
          %1738 = vrot.lane.b32.xlu0 %v432, 28
          %v1739 = vpop.permute.xlu0 %1738
          %1740 = vrot.lane.b32.xlu0 %v436, 28
          %v1741 = vpop.permute.xlu0 %1740
          %v1742 = vsel %vm1723, %v1737, %v1739
          %v1743 = vsel %vm1723, %v1739, %v1741
          %v1746 = vsel %vm1714, %v1742, 0.0
          %v1747 = vsel %vm1715, %v1743, 0.0
          %v1748 = vstv %s1735
          %v1749 = vmul.f32 %v1748, %v1746
          %v1750 = vmul.f32 %v1748, %v1747
          %v1751 = vadd.f32 %v1733, %v1749
          %v1752 = vadd.f32 %v1734, %v1750
          %vm1753 = vcmp.lt.s32.totalorder %v335, 14
          %vm1754 = vcmp.lt.s32.totalorder %v336, 14
          %vm1755 = vmand %vm1753, %vm341
          %vm1756 = vmand %vm1754, %vm342
          %s1757 = sld [smem:[#allocation6 + $0x5]]
          %1758 = vrot.lane.b32.xlu0 %v395, 123
          %v1759 = vpop.permute.xlu0 %1758
          %1760 = vrot.lane.b32.xlu0 %v399, 123
          %v1761 = vpop.permute.xlu0 %1760
          %1762 = vrot.lane.b32.xlu0 %v403, 123
          %v1763 = vpop.permute.xlu0 %1762
          %vm1764 = vcmask 1006592
          %v1765 = vsel %vm1764, %v1759, %v1761
          %v1766 = vsel %vm1764, %v1761, %v1763
          %v1769 = vsel %vm1755, %v1765, 0.0
          %v1770 = vsel %vm1756, %v1766, 0.0
          %v1771 = vstv %s1757
          %v1772 = vmul.f32 %v1771, %v1769
          %v1773 = vmul.f32 %v1771, %v1770
          %v1774 = vadd.f32 %v1751, %v1772
          %v1775 = vadd.f32 %v1752, %v1773
          %s1776 = sld [smem:[#allocation6 + $0x36]]
          %1777 = vrot.lane.b32.xlu0 %v428, 123
          %v1778 = vpop.permute.xlu0 %1777
          %1779 = vrot.lane.b32.xlu0 %v432, 123
          %v1780 = vpop.permute.xlu0 %1779
          %1781 = vrot.lane.b32.xlu0 %v436, 123
          %v1782 = vpop.permute.xlu0 %1781
          %v1783 = vsel %vm1764, %v1778, %v1780
          %v1784 = vsel %vm1764, %v1780, %v1782
          %v1787 = vsel %vm1755, %v1783, 0.0
          %v1788 = vsel %vm1756, %v1784, 0.0
          %v1789 = vstv %s1776
          %v1790 = vmul.f32 %v1789, %v1787
          %v1791 = vmul.f32 %v1789, %v1788
          %v1792 = vadd.f32 %v1774, %v1790
          %v1793 = vadd.f32 %v1775, %v1791
          %vm1794 = vmand %vm1753, %vm385
          %vm1795 = vmand %vm1754, %vm386
          %s1796 = sld [smem:[#allocation6 + $0xc]]
          %1797 = vrot.lane.b32.xlu0 %v395, 107
          %v1798 = vpop.permute.xlu0 %1797
          %1799 = vrot.lane.b32.xlu0 %v399, 107
          %v1800 = vpop.permute.xlu0 %1799
          %1801 = vrot.lane.b32.xlu0 %v403, 107
          %v1802 = vpop.permute.xlu0 %1801
          %vm1803 = vcmask 875520
          %v1804 = vsel %vm1803, %v1798, %v1800
          %v1805 = vsel %vm1803, %v1800, %v1802
          %v1808 = vsel %vm1794, %v1804, 0.0
          %v1809 = vsel %vm1795, %v1805, 0.0
          %v1810 = vstv %s1796
          %v1811 = vmul.f32 %v1810, %v1808
          %v1812 = vmul.f32 %v1810, %v1809
          %v1813 = vadd.f32 %v1792, %v1811
          %v1814 = vadd.f32 %v1793, %v1812
          %s1815 = sld [smem:[#allocation6 + $0x3d]]
          %1816 = vrot.lane.b32.xlu0 %v428, 107
          %v1817 = vpop.permute.xlu0 %1816
          %1818 = vrot.lane.b32.xlu0 %v432, 107
          %v1819 = vpop.permute.xlu0 %1818
          %1820 = vrot.lane.b32.xlu0 %v436, 107
          %v1821 = vpop.permute.xlu0 %1820
          %v1822 = vsel %vm1803, %v1817, %v1819
          %v1823 = vsel %vm1803, %v1819, %v1821
          %v1826 = vsel %vm1794, %v1822, 0.0
          %v1827 = vsel %vm1795, %v1823, 0.0
          %v1828 = vstv %s1815
          %v1829 = vmul.f32 %v1828, %v1826
          %v1830 = vmul.f32 %v1828, %v1827
          %v1831 = vadd.f32 %v1813, %v1829
          %v1832 = vadd.f32 %v1814, %v1830
          %vm1833 = vmand %vm1753, %vm454
          %vm1834 = vmand %vm1754, %vm455
          %s1835 = sld [smem:[#allocation6 + $0x13]]
          %1836 = vrot.lane.b32.xlu0 %v395, 91
          %v1837 = vpop.permute.xlu0 %1836
          %1838 = vrot.lane.b32.xlu0 %v399, 91
          %v1839 = vpop.permute.xlu0 %1838
          %1840 = vrot.lane.b32.xlu0 %v403, 91
          %v1841 = vpop.permute.xlu0 %1840
          %vm1842 = vcmask 744448
          %v1843 = vsel %vm1842, %v1837, %v1839
          %v1844 = vsel %vm1842, %v1839, %v1841
          %v1847 = vsel %vm1833, %v1843, 0.0
          %v1848 = vsel %vm1834, %v1844, 0.0
          %v1849 = vstv %s1835
          %v1850 = vmul.f32 %v1849, %v1847
          %v1851 = vmul.f32 %v1849, %v1848
          %v1852 = vadd.f32 %v1831, %v1850
          %v1853 = vadd.f32 %v1832, %v1851
          %s1854 = sld [smem:[#allocation6 + $0x44]]
          %1855 = vrot.lane.b32.xlu0 %v428, 91
          %v1856 = vpop.permute.xlu0 %1855
          %1857 = vrot.lane.b32.xlu0 %v432, 91
          %v1858 = vpop.permute.xlu0 %1857
          %1859 = vrot.lane.b32.xlu0 %v436, 91
          %v1860 = vpop.permute.xlu0 %1859
          %v1861 = vsel %vm1842, %v1856, %v1858
          %v1862 = vsel %vm1842, %v1858, %v1860
          %v1865 = vsel %vm1833, %v1861, 0.0
          %v1866 = vsel %vm1834, %v1862, 0.0
          %v1867 = vstv %s1854
          %v1868 = vmul.f32 %v1867, %v1865
          %v1869 = vmul.f32 %v1867, %v1866
          %v1870 = vadd.f32 %v1852, %v1868
          %v1871 = vadd.f32 %v1853, %v1869
          %s1872 = sld [smem:[#allocation6 + $0x1a]]
          %1873 = vrot.lane.b32.xlu0 %v395, 75
          %v1874 = vpop.permute.xlu0 %1873
          %1875 = vrot.lane.b32.xlu0 %v399, 75
          %v1876 = vpop.permute.xlu0 %1875
          %1877 = vrot.lane.b32.xlu0 %v403, 75
          %v1878 = vpop.permute.xlu0 %1877
          %vm1879 = vcmask 613376
          %v1880 = vsel %vm1879, %v1874, %v1876
          %v1881 = vsel %vm1879, %v1876, %v1878
          %v1884 = vsel %vm1753, %v1880, 0.0
          %v1885 = vsel %vm1754, %v1881, 0.0
          %v1886 = vstv %s1872
          %v1887 = vmul.f32 %v1886, %v1884
          %v1888 = vmul.f32 %v1886, %v1885
          %v1889 = vadd.f32 %v1870, %v1887
          %v1890 = vadd.f32 %v1871, %v1888
          %s1891 = sld [smem:[#allocation6 + $0x4b]]
          %1892 = vrot.lane.b32.xlu0 %v428, 75
          %v1893 = vpop.permute.xlu0 %1892
          %1894 = vrot.lane.b32.xlu0 %v432, 75
          %v1895 = vpop.permute.xlu0 %1894
          %1896 = vrot.lane.b32.xlu0 %v436, 75
          %v1897 = vpop.permute.xlu0 %1896
          %v1898 = vsel %vm1879, %v1893, %v1895
          %v1899 = vsel %vm1879, %v1895, %v1897
          %v1902 = vsel %vm1753, %v1898, 0.0
          %v1903 = vsel %vm1754, %v1899, 0.0
          %v1904 = vstv %s1891
          %v1905 = vmul.f32 %v1904, %v1902
          %v1906 = vmul.f32 %v1904, %v1903
          %v1907 = vadd.f32 %v1889, %v1905
          %v1908 = vadd.f32 %v1890, %v1906
          %vm1909 = vmand %vm1753, %vm532
          %vm1910 = vmand %vm1754, %vm533
          %s1911 = sld [smem:[#allocation6 + $0x21]]
          %1912 = vrot.lane.b32.xlu0 %v395, 59
          %v1913 = vpop.permute.xlu0 %1912
          %1914 = vrot.lane.b32.xlu0 %v399, 59
          %v1915 = vpop.permute.xlu0 %1914
          %1916 = vrot.lane.b32.xlu0 %v403, 59
          %v1917 = vpop.permute.xlu0 %1916
          %vm1918 = vcmask 482304
          %v1919 = vsel %vm1918, %v1913, %v1915
          %v1920 = vsel %vm1918, %v1915, %v1917
          %v1923 = vsel %vm1909, %v1919, 0.0
          %v1924 = vsel %vm1910, %v1920, 0.0
          %v1925 = vstv %s1911
          %v1926 = vmul.f32 %v1925, %v1923
          %v1927 = vmul.f32 %v1925, %v1924
          %v1928 = vadd.f32 %v1907, %v1926
          %v1929 = vadd.f32 %v1908, %v1927
          %s1930 = sld [smem:[#allocation6 + $0x52]]
          %1931 = vrot.lane.b32.xlu0 %v428, 59
          %v1932 = vpop.permute.xlu0 %1931
          %1933 = vrot.lane.b32.xlu0 %v432, 59
          %v1934 = vpop.permute.xlu0 %1933
          %1935 = vrot.lane.b32.xlu0 %v436, 59
          %v1936 = vpop.permute.xlu0 %1935
          %v1937 = vsel %vm1918, %v1932, %v1934
          %v1938 = vsel %vm1918, %v1934, %v1936
          %v1941 = vsel %vm1909, %v1937, 0.0
          %v1942 = vsel %vm1910, %v1938, 0.0
          %v1943 = vstv %s1930
          %v1944 = vmul.f32 %v1943, %v1941
          %v1945 = vmul.f32 %v1943, %v1942
          %v1946 = vadd.f32 %v1928, %v1944
          %v1947 = vadd.f32 %v1929, %v1945
          %vm1948 = vmand %vm1753, %vm573
          %vm1949 = vmand %vm1754, %vm574
          %s1950 = sld [smem:[#allocation6 + $0x28]]
          %1951 = vrot.lane.b32.xlu0 %v395, 43
          %v1952 = vpop.permute.xlu0 %1951
          %1953 = vrot.lane.b32.xlu0 %v399, 43
          %v1954 = vpop.permute.xlu0 %1953
          %1955 = vrot.lane.b32.xlu0 %v403, 43
          %v1956 = vpop.permute.xlu0 %1955
          %vm1957 = vcmask 351232
          %v1958 = vsel %vm1957, %v1952, %v1954
          %v1959 = vsel %vm1957, %v1954, %v1956
          %v1962 = vsel %vm1948, %v1958, 0.0
          %v1963 = vsel %vm1949, %v1959, 0.0
          %v1964 = vstv %s1950
          %v1965 = vmul.f32 %v1964, %v1962
          %v1966 = vmul.f32 %v1964, %v1963
          %v1967 = vadd.f32 %v1946, %v1965
          %v1968 = vadd.f32 %v1947, %v1966
          %s1969 = sld [smem:[#allocation6 + $0x59]]
          %1970 = vrot.lane.b32.xlu0 %v428, 43
          %v1971 = vpop.permute.xlu0 %1970
          %1972 = vrot.lane.b32.xlu0 %v432, 43
          %v1973 = vpop.permute.xlu0 %1972
          %1974 = vrot.lane.b32.xlu0 %v436, 43
          %v1975 = vpop.permute.xlu0 %1974
          %v1976 = vsel %vm1957, %v1971, %v1973
          %v1977 = vsel %vm1957, %v1973, %v1975
          %v1980 = vsel %vm1948, %v1976, 0.0
          %v1981 = vsel %vm1949, %v1977, 0.0
          %v1982 = vstv %s1969
          %v1983 = vmul.f32 %v1982, %v1980
          %v1984 = vmul.f32 %v1982, %v1981
          %v1985 = vadd.f32 %v1967, %v1983
          %v1986 = vadd.f32 %v1968, %v1984
          %vm1987 = vmand %vm1753, %vm614
          %vm1988 = vmand %vm1754, %vm615
          %s1989 = sld [smem:[#allocation6 + $0x2f]]
          %1990 = vrot.lane.b32.xlu0 %v395, 27
          %v1991 = vpop.permute.xlu0 %1990
          %1992 = vrot.lane.b32.xlu0 %v399, 27
          %v1993 = vpop.permute.xlu0 %1992
          %1994 = vrot.lane.b32.xlu0 %v403, 27
          %v1995 = vpop.permute.xlu0 %1994
          %vm1996 = vcmask 220160
          %v1997 = vsel %vm1996, %v1991, %v1993
          %v1998 = vsel %vm1996, %v1993, %v1995
          %v2001 = vsel %vm1987, %v1997, 0.0
          %v2002 = vsel %vm1988, %v1998, 0.0
          %v2003 = vstv %s1989
          %v2004 = vmul.f32 %v2003, %v2001
          %v2005 = vmul.f32 %v2003, %v2002
          %v2006 = vadd.f32 %v1985, %v2004
          %v2007 = vadd.f32 %v1986, %v2005
          %s2008 = sld [smem:[#allocation6 + $0x60]]
          %2009 = vrot.lane.b32.xlu0 %v428, 27
          %v2010 = vpop.permute.xlu0 %2009
          %2011 = vrot.lane.b32.xlu0 %v432, 27
          %v2012 = vpop.permute.xlu0 %2011
          %2013 = vrot.lane.b32.xlu0 %v436, 27
          %v2014 = vpop.permute.xlu0 %2013
          %v2015 = vsel %vm1996, %v2010, %v2012
          %v2016 = vsel %vm1996, %v2012, %v2014
          %v2019 = vsel %vm1987, %v2015, 0.0
          %v2020 = vsel %vm1988, %v2016, 0.0
          %v2021 = vstv %s2008
          %v2022 = vmul.f32 %v2021, %v2019
          %v2023 = vmul.f32 %v2021, %v2020
          %v2024 = vadd.f32 %v2006, %v2022
          %v2025 = vadd.f32 %v2007, %v2023
          %vm2026 = vcmp.lt.s32.totalorder %v335, 13
          %vm2027 = vcmp.lt.s32.totalorder %v336, 13
          %vm2028 = vmand %vm2026, %vm341
          %vm2029 = vmand %vm2027, %vm342
          %s2030 = sld [smem:[#allocation6 + $0x6]]
          %2031 = vrot.lane.b32.xlu0 %v395, 122
          %v2032 = vpop.permute.xlu0 %2031
          %2033 = vrot.lane.b32.xlu0 %v399, 122
          %v2034 = vpop.permute.xlu0 %2033
          %2035 = vrot.lane.b32.xlu0 %v403, 122
          %v2036 = vpop.permute.xlu0 %2035
          %vm2037 = vcmask 998400
          %v2038 = vsel %vm2037, %v2032, %v2034
          %v2039 = vsel %vm2037, %v2034, %v2036
          %v2042 = vsel %vm2028, %v2038, 0.0
          %v2043 = vsel %vm2029, %v2039, 0.0
          %v2044 = vstv %s2030
          %v2045 = vmul.f32 %v2044, %v2042
          %v2046 = vmul.f32 %v2044, %v2043
          %v2047 = vadd.f32 %v2024, %v2045
          %v2048 = vadd.f32 %v2025, %v2046
          %s2049 = sld [smem:[#allocation6 + $0x37]]
          %2050 = vrot.lane.b32.xlu0 %v428, 122
          %v2051 = vpop.permute.xlu0 %2050
          %2052 = vrot.lane.b32.xlu0 %v432, 122
          %v2053 = vpop.permute.xlu0 %2052
          %2054 = vrot.lane.b32.xlu0 %v436, 122
          %v2055 = vpop.permute.xlu0 %2054
          %v2056 = vsel %vm2037, %v2051, %v2053
          %v2057 = vsel %vm2037, %v2053, %v2055
          %v2060 = vsel %vm2028, %v2056, 0.0
          %v2061 = vsel %vm2029, %v2057, 0.0
          %v2062 = vstv %s2049
          %v2063 = vmul.f32 %v2062, %v2060
          %v2064 = vmul.f32 %v2062, %v2061
          %v2065 = vadd.f32 %v2047, %v2063
          %v2066 = vadd.f32 %v2048, %v2064
          %vm2067 = vmand %vm2026, %vm385
          %vm2068 = vmand %vm2027, %vm386
          %s2069 = sld [smem:[#allocation6 + $0xd]]
          %2070 = vrot.lane.b32.xlu0 %v395, 106
          %v2071 = vpop.permute.xlu0 %2070
          %2072 = vrot.lane.b32.xlu0 %v399, 106
          %v2073 = vpop.permute.xlu0 %2072
          %2074 = vrot.lane.b32.xlu0 %v403, 106
          %v2075 = vpop.permute.xlu0 %2074
          %vm2076 = vcmask 867328
          %v2077 = vsel %vm2076, %v2071, %v2073
          %v2078 = vsel %vm2076, %v2073, %v2075
          %v2081 = vsel %vm2067, %v2077, 0.0
          %v2082 = vsel %vm2068, %v2078, 0.0
          %v2083 = vstv %s2069
          %v2084 = vmul.f32 %v2083, %v2081
          %v2085 = vmul.f32 %v2083, %v2082
          %v2086 = vadd.f32 %v2065, %v2084
          %v2087 = vadd.f32 %v2066, %v2085
          %s2088 = sld [smem:[#allocation6 + $0x3e]]
          %2089 = vrot.lane.b32.xlu0 %v428, 106
          %v2090 = vpop.permute.xlu0 %2089
          %2091 = vrot.lane.b32.xlu0 %v432, 106
          %v2092 = vpop.permute.xlu0 %2091
          %2093 = vrot.lane.b32.xlu0 %v436, 106
          %v2094 = vpop.permute.xlu0 %2093
          %v2095 = vsel %vm2076, %v2090, %v2092
          %v2096 = vsel %vm2076, %v2092, %v2094
          %v2099 = vsel %vm2067, %v2095, 0.0
          %v2100 = vsel %vm2068, %v2096, 0.0
          %v2101 = vstv %s2088
          %v2102 = vmul.f32 %v2101, %v2099
          %v2103 = vmul.f32 %v2101, %v2100
          %v2104 = vadd.f32 %v2086, %v2102
          %v2105 = vadd.f32 %v2087, %v2103
          %vm2106 = vmand %vm2026, %vm454
          %vm2107 = vmand %vm2027, %vm455
          %s2108 = sld [smem:[#allocation6 + $0x14]]
          %2109 = vrot.lane.b32.xlu0 %v395, 90
          %v2110 = vpop.permute.xlu0 %2109
          %2111 = vrot.lane.b32.xlu0 %v399, 90
          %v2112 = vpop.permute.xlu0 %2111
          %2113 = vrot.lane.b32.xlu0 %v403, 90
          %v2114 = vpop.permute.xlu0 %2113
          %vm2115 = vcmask 736256
          %v2116 = vsel %vm2115, %v2110, %v2112
          %v2117 = vsel %vm2115, %v2112, %v2114
          %v2120 = vsel %vm2106, %v2116, 0.0
          %v2121 = vsel %vm2107, %v2117, 0.0
          %v2122 = vstv %s2108
          %v2123 = vmul.f32 %v2122, %v2120
          %v2124 = vmul.f32 %v2122, %v2121
          %v2125 = vadd.f32 %v2104, %v2123
          %v2126 = vadd.f32 %v2105, %v2124
          %s2127 = sld [smem:[#allocation6 + $0x45]]
          %2128 = vrot.lane.b32.xlu0 %v428, 90
          %v2129 = vpop.permute.xlu0 %2128
          %2130 = vrot.lane.b32.xlu0 %v432, 90
          %v2131 = vpop.permute.xlu0 %2130
          %2132 = vrot.lane.b32.xlu0 %v436, 90
          %v2133 = vpop.permute.xlu0 %2132
          %v2134 = vsel %vm2115, %v2129, %v2131
          %v2135 = vsel %vm2115, %v2131, %v2133
          %v2138 = vsel %vm2106, %v2134, 0.0
          %v2139 = vsel %vm2107, %v2135, 0.0
          %v2140 = vstv %s2127
          %v2141 = vmul.f32 %v2140, %v2138
          %v2142 = vmul.f32 %v2140, %v2139
          %v2143 = vadd.f32 %v2125, %v2141
          %v2144 = vadd.f32 %v2126, %v2142
          %s2145 = sld [smem:[#allocation6 + $0x1b]]
          %2146 = vrot.lane.b32.xlu0 %v395, 74
          %v2147 = vpop.permute.xlu0 %2146
          %2148 = vrot.lane.b32.xlu0 %v399, 74
          %v2149 = vpop.permute.xlu0 %2148
          %2150 = vrot.lane.b32.xlu0 %v403, 74
          %v2151 = vpop.permute.xlu0 %2150
          %vm2152 = vcmask 605184
          %v2153 = vsel %vm2152, %v2147, %v2149
          %v2154 = vsel %vm2152, %v2149, %v2151
          %v2157 = vsel %vm2026, %v2153, 0.0
          %v2158 = vsel %vm2027, %v2154, 0.0
          %v2159 = vstv %s2145
          %v2160 = vmul.f32 %v2159, %v2157
          %v2161 = vmul.f32 %v2159, %v2158
          %v2162 = vadd.f32 %v2143, %v2160
          %v2163 = vadd.f32 %v2144, %v2161
          %s2164 = sld [smem:[#allocation6 + $0x4c]]
          %2165 = vrot.lane.b32.xlu0 %v428, 74
          %v2166 = vpop.permute.xlu0 %2165
          %2167 = vrot.lane.b32.xlu0 %v432, 74
          %v2168 = vpop.permute.xlu0 %2167
          %2169 = vrot.lane.b32.xlu0 %v436, 74
          %v2170 = vpop.permute.xlu0 %2169
          %v2171 = vsel %vm2152, %v2166, %v2168
          %v2172 = vsel %vm2152, %v2168, %v2170
          %v2175 = vsel %vm2026, %v2171, 0.0
          %v2176 = vsel %vm2027, %v2172, 0.0
          %v2177 = vstv %s2164
          %v2178 = vmul.f32 %v2177, %v2175
          %v2179 = vmul.f32 %v2177, %v2176
          %v2180 = vadd.f32 %v2162, %v2178
          %v2181 = vadd.f32 %v2163, %v2179
          %vm2182 = vmand %vm2026, %vm532
          %vm2183 = vmand %vm2027, %vm533
          %s2184 = sld [smem:[#allocation6 + $0x22]]
          %2185 = vrot.lane.b32.xlu0 %v395, 58
          %v2186 = vpop.permute.xlu0 %2185
          %2187 = vrot.lane.b32.xlu0 %v399, 58
          %v2188 = vpop.permute.xlu0 %2187
          %2189 = vrot.lane.b32.xlu0 %v403, 58
          %v2190 = vpop.permute.xlu0 %2189
          %vm2191 = vcmask 474112
          %v2192 = vsel %vm2191, %v2186, %v2188
          %v2193 = vsel %vm2191, %v2188, %v2190
          %v2196 = vsel %vm2182, %v2192, 0.0
          %v2197 = vsel %vm2183, %v2193, 0.0
          %v2198 = vstv %s2184
          %v2199 = vmul.f32 %v2198, %v2196
          %v2200 = vmul.f32 %v2198, %v2197
          %v2201 = vadd.f32 %v2180, %v2199
          %v2202 = vadd.f32 %v2181, %v2200
          %s2203 = sld [smem:[#allocation6 + $0x53]]
          %2204 = vrot.lane.b32.xlu0 %v428, 58
          %v2205 = vpop.permute.xlu0 %2204
          %2206 = vrot.lane.b32.xlu0 %v432, 58
          %v2207 = vpop.permute.xlu0 %2206
          %2208 = vrot.lane.b32.xlu0 %v436, 58
          %v2209 = vpop.permute.xlu0 %2208
          %v2210 = vsel %vm2191, %v2205, %v2207
          %v2211 = vsel %vm2191, %v2207, %v2209
          %v2214 = vsel %vm2182, %v2210, 0.0
          %v2215 = vsel %vm2183, %v2211, 0.0
          %v2216 = vstv %s2203
          %v2217 = vmul.f32 %v2216, %v2214
          %v2218 = vmul.f32 %v2216, %v2215
          %v2219 = vadd.f32 %v2201, %v2217
          %v2220 = vadd.f32 %v2202, %v2218
          %vm2221 = vmand %vm2026, %vm573
          %vm2222 = vmand %vm2027, %vm574
          %s2223 = sld [smem:[#allocation6 + $0x29]]
          %2224 = vrot.lane.b32.xlu0 %v395, 42
          %v2225 = vpop.permute.xlu0 %2224
          %2226 = vrot.lane.b32.xlu0 %v399, 42
          %v2227 = vpop.permute.xlu0 %2226
          %2228 = vrot.lane.b32.xlu0 %v403, 42
          %v2229 = vpop.permute.xlu0 %2228
          %vm2230 = vcmask 343040
          %v2231 = vsel %vm2230, %v2225, %v2227
          %v2232 = vsel %vm2230, %v2227, %v2229
          %v2235 = vsel %vm2221, %v2231, 0.0
          %v2236 = vsel %vm2222, %v2232, 0.0
          %v2237 = vstv %s2223
          %v2238 = vmul.f32 %v2237, %v2235
          %v2239 = vmul.f32 %v2237, %v2236
          %v2240 = vadd.f32 %v2219, %v2238
          %v2241 = vadd.f32 %v2220, %v2239
          %s2242 = sld [smem:[#allocation6 + $0x5a]]
          %2243 = vrot.lane.b32.xlu0 %v428, 42
          %v2244 = vpop.permute.xlu0 %2243
          %2245 = vrot.lane.b32.xlu0 %v432, 42
          %v2246 = vpop.permute.xlu0 %2245
          %2247 = vrot.lane.b32.xlu0 %v436, 42
          %v2248 = vpop.permute.xlu0 %2247
          %v2249 = vsel %vm2230, %v2244, %v2246
          %v2250 = vsel %vm2230, %v2246, %v2248
          %v2253 = vsel %vm2221, %v2249, 0.0
          %v2254 = vsel %vm2222, %v2250, 0.0
          %v2255 = vstv %s2242
          %v2256 = vmul.f32 %v2255, %v2253
          %v2257 = vmul.f32 %v2255, %v2254
          %v2258 = vadd.f32 %v2240, %v2256
          %v2259 = vadd.f32 %v2241, %v2257
          %vm2260 = vmand %vm2026, %vm614
          %vm2261 = vmand %vm2027, %vm615
          %s2262 = sld [smem:[#allocation6 + $0x30]]
          %2263 = vrot.lane.b32.xlu0 %v395, 26
          %v2264 = vpop.permute.xlu0 %2263
          %2265 = vrot.lane.b32.xlu0 %v399, 26
          %v2266 = vpop.permute.xlu0 %2265
          %2267 = vrot.lane.b32.xlu0 %v403, 26
          %v2268 = vpop.permute.xlu0 %2267
          %vm2269 = vcmask 211968
          %v2270 = vsel %vm2269, %v2264, %v2266
          %v2271 = vsel %vm2269, %v2266, %v2268
          %v2274 = vsel %vm2260, %v2270, 0.0
          %v2275 = vsel %vm2261, %v2271, 0.0
          %v2276 = vstv %s2262
          %v2277 = vmul.f32 %v2276, %v2274
          %v2278 = vmul.f32 %v2276, %v2275
          %v2279 = vadd.f32 %v2258, %v2277
          %v2280 = vadd.f32 %v2259, %v2278
          %s2281 = sld [smem:[#allocation6 + $0x61]]
          %2282 = vrot.lane.b32.xlu0 %v428, 26
          %v2283 = vpop.permute.xlu0 %2282
          %2284 = vrot.lane.b32.xlu0 %v432, 26
          %v2285 = vpop.permute.xlu0 %2284
          %2286 = vrot.lane.b32.xlu0 %v436, 26
          %v2287 = vpop.permute.xlu0 %2286
          %v2288 = vsel %vm2269, %v2283, %v2285
          %v2289 = vsel %vm2269, %v2285, %v2287
          %v2292 = vsel %vm2260, %v2288, 0.0
          %v2293 = vsel %vm2261, %v2289, 0.0
          %v2294 = vstv %s2281
          %v2295 = vmul.f32 %v2294, %v2292
          %v2296 = vmul.f32 %v2294, %v2293
          %v2297 = vadd.f32 %v2279, %v2295
          %v2298 = vadd.f32 %v2280, %v2296
          %v2299 = vmax.f32 %v2297, 0.0
          %v2300 = vmax.f32 %v2298, 0.0
          %v2303 = vcombine.low %v2299, %v2300
          %v2305 = vunpack.c.l.s4 1966171168
          %v2306 = vunpack.c.0.s8 %v2305
          %v2307 = vlaneseq
          %v2308 = vshrl.u32 %v2307, 7
          %v2309 = vsub.s32 %v2306, %v2308
          %v2310 = vrot.slane %v2303, %v2309
          %v2312 = vunpack.c.l.s4 1966171168
          %v2313 = vunpack.c.0.s8 %v2312
          %v2314 = vlaneseq
          %v2315 = vshrl.u32 %v2314, 7
          %v2316 = vsub.s32 %v2313, %v2315
          %v2317 = vrot.slane %v2310, %v2316
          %2319 = vst.msk [vmem:[%s217] sm:$0x3] %vm270, %v2317
        $region48: #{tpu_custom_call.1} parent=31 // pred_fallthru
          _
        %s2320 = sand.u32 %s112, 1
        %s2321 = scalar_lea.sflag [#allocation8], %s2320
        %s2322 = sand.u32 %s112, 1
        %s2323 = smul.addr %s2322, 2
        %s2324 = scalar_lea.vmem [#allocation11], %s2323
        // Predicated region
        $region49: #{tpu_custom_call.1} parent=31 // pred_check
          %p2325 = pneg %p122
        $region50: #{tpu_custom_call.1} parent=31 // pred_check_branch
          %2327 = sbr.rel (%p2325) target = $region52
        $region51: #{tpu_custom_call.1} parent=31 // pred_region
          %s2329 = ssub.s32 32, 32
          %2330 = vsyncadd %s2321, %s2329
          %s2331 = smul.addr %s26, 2
          %s2332 = smul.addr %s2331, 16
          %s2333 = scalar_lea.hbm %s3, %s2332
          %s2335 = sshll.u32 %s2324, 4
          %s2336 = int_to_ptr.vmem [resolvable:$true] %s2335
          %2338 = dma.vmem_to_hbm [thread:$0]  %s2336, 32, %s2333, %s2321
        $region52: #{tpu_custom_call.1} parent=31 // pred_fallthru
          _
      $region32: #{tpu_custom_call.1} parent=5 // pred_fallthru
        _
      %p2339 = scmp.le.s32.totalorder 2, %s17
      // Predicated region
      $region53: #{tpu_custom_call.1} parent=5 // pred_check
        %p2340 = pneg %p2339
      $region54: #{tpu_custom_call.1} parent=5 // pred_check_branch
        %2342 = sbr.rel (%p2340) target = $region56
      $region55: #{tpu_custom_call.1} parent=5 // pred_region
        %s2343 = ssub.s32 %s17, 2
        // Predicated region
        $region57: #{tpu_custom_call.1} parent=55 // pred_check
          %p2344 = pneg %p128
        $region58: #{tpu_custom_call.1} parent=55 // pred_check_branch
          %2346 = sbr.rel (%p2344) target = $region60
        $region59: #{tpu_custom_call.1} parent=55 // pred_region
          %s2347 = sand.u32 %s113, 1
          %s2348 = scalar_lea.sflag [#allocation8], %s2347
          %s2349 = sand.u32 %s113, 1
          %s2350 = smul.addr %s2349, 2
          %s2351 = scalar_lea.vmem [#allocation11], %s2350
          %2352 = dma.done %s2348, 32
        $region60: #{tpu_custom_call.1} parent=55 // pred_fallthru
          _
      $region56: #{tpu_custom_call.1} parent=5 // pred_fallthru
        _
    $region6: #{tpu_custom_call.1} parent=1 // loop_footer
      %s21 = sadd.s32 1, %s17
    $region7: #{tpu_custom_call.1} parent=1 // loop_footer_branch
      %16 = sbr.rel target = $region3
    $region8: #{tpu_custom_call.1} parent=1 // loop_exit
      _
    %2353 = vsyncpa [#allocation7], 1
    %s2354 = scalar_lea.sflag [#allocation7], 1
    %2355 = vsyncpa %s2354, 1
    %2356 = vsyncpa [#allocation8], 1
    %s2357 = scalar_lea.sflag [#allocation8], 1
    %2358 = vsyncpa %s2357, 1
    %2359 = vsyncpa [#allocation9], 1
    %s2360 = scalar_lea.sflag [#allocation9], 1
    %2361 = vsyncpa %s2360, 1

</llo_original>
